<compile_context>
chip_gen: v7x
topology: tpu7x:2x2x1
jax: 0.10.0
libtpu: 0.0.40
codegen_flags: <defaults>
</compile_context>

<pallas_src>
import functools

import jax
import jax.numpy as jnp
import numpy as np
from jax import lax
from jax.experimental import pallas as pl
from jax.experimental.pallas import tpu as pltpu


def bigru_kernel(len_ref, emb_ref, wi_ref, wh_ref, bi_ref, bh_ref,
                 outb_ref, hid_ref,
                 gif_r, gif_z, gif_n, gib_r, gib_z, gib_n):
    """Masked bidirectional GRU. emb_ref is (T*B, H); per-timestep rows are t*B..t*B+B."""
    TB, H = emb_ref.shape
    B = len_ref.shape[0]
    T = TB // B

    # ---- Phase 1: input projections hoisted out of the recurrence ----------------
    # One (T*B, H) x (H, H) matmul per gate/direction instead of 2*T tiny ones.
    emb2d = emb_ref[...]
    gi_scratch = ((gif_r, gif_z, gif_n), (gib_r, gib_z, gib_n))
    for d in range(2):
        for g in range(3):
            gi_scratch[d][g][...] = (
                jnp.dot(emb2d, wi_ref[d, g], preferred_element_type=jnp.float32)
                + bi_ref[d, g])

    # ---- Phase 2: hoist recurrence weights, pre-broadcast biases ------------------
    whf = (wh_ref[0, 0], wh_ref[0, 1], wh_ref[0, 2])
    whb = (wh_ref[1, 0], wh_ref[1, 1], wh_ref[1, 2])
    bhf = tuple(jnp.broadcast_to(bh_ref[0, g], (B, H)) for g in range(3))
    bhb = tuple(jnp.broadcast_to(bh_ref[1, g], (B, H)) for g in range(3))
    lengths = len_ref[...]                      # (B, 1) int32

    h0 = jnp.zeros((B, H), jnp.float32)

    def gru_half(h, gi_r, gi_z, gi_n, wh, bh):
        # PyTorch GRU cell, gate order [r, z, n]; only the h-side matmuls remain here.
        gh_r = jnp.dot(h, wh[0], preferred_element_type=jnp.float32) + bh[0]
        gh_z = jnp.dot(h, wh[1], preferred_element_type=jnp.float32) + bh[1]
        gh_n = jnp.dot(h, wh[2], preferred_element_type=jnp.float32) + bh[2]
        r = jax.nn.sigmoid(gi_r + gh_r)
        z = jax.nn.sigmoid(gi_z + gh_z)
        n = jnp.tanh(gi_n + r * gh_n)
        return (1.0 - z) * n + z * h

    # ---- Phase 3: merged forward/backward time loop --------------------------------
    def step(i, carry):
        h_f, h_b = carry
        tb = T - 1 - i
        fo = i * B                               # row offset of forward timestep i
        bo = tb * B                              # row offset of backward timestep T-1-i

        # forward direction at t = i (only feeds hidden[0]; per-step output is dead)
        hn_f = gru_half(h_f,
                        gif_r[pl.ds(fo, B), :],
                        gif_z[pl.ds(fo, B), :],
                        gif_n[pl.ds(fo, B), :],
                        whf, bhf)
        valid_f = lengths > i                    # (B, 1) bool
        h_f = jnp.where(valid_f, hn_f, h_f)      # padded steps keep previous hidden

        # backward direction at t = T-1-i
        hn_b = gru_half(h_b,
                        gib_r[pl.ds(bo, B), :],
                        gib_z[pl.ds(bo, B), :],
                        gib_n[pl.ds(bo, B), :],
                        whb, bhb)
        valid_b = lengths > tb
        outb_ref[pl.ds(bo, B), :] = jnp.where(valid_b, hn_b, 0.0)   # pad_packed -> 0
        h_b = jnp.where(valid_b, hn_b, h_b)

        return h_f, h_b

    unroll = True if T <= 16 else 4
    h_f, h_b = lax.fori_loop(0, T, step, (h0, h0), unroll=unroll)
    hid_ref[0] = h_f
    hid_ref[1] = h_b


def bigru_pallas(emb_flat, lengths, params):
    TB, H = emb_flat.shape
    B = lengths.shape[0]
    vmem = pl.BlockSpec(memory_space=pltpu.MemorySpace.VMEM)
    out_flat, hidden = pl.pallas_call(
        bigru_kernel,
        out_shape=(
            jax.ShapeDtypeStruct((TB, H), jnp.float32),   # out_bwd, flattened (T*B, H)
            jax.ShapeDtypeStruct((2, B, H), jnp.float32),  # final hidden states
        ),
        in_specs=[vmem] * 6,
        out_specs=(vmem, vmem),
        scratch_shapes=[pltpu.VMEM((TB, H), jnp.float32)] * 6,
    )(lengths, emb_flat, params["wi"], params["wh"], params["bi"], params["bh"])
    return out_flat, hidden


@functools.partial(jax.jit, static_argnames=("hidden_size",))
def encoder_rnn_forward(input_seq, input_lengths, params, hidden_size):
    """Faithful forward pass of EncoderRNN (n_layers=1, dropout=0, hidden=None)."""
    T, B = input_seq.shape
    H = hidden_size

    emb = params["embedding"][input_seq]                    # (T, B, H)
    emb_flat = emb.reshape(T * B, H)                        # free reshape (row-major)
    lengths = input_lengths.astype(jnp.int32).reshape(B, 1)

    out_flat, hidden = bigru_pallas(emb_flat, lengths, params)
    out_bwd = out_flat.reshape(T, B, H)

    # NOTE: faithful reproduction of the original (buggy) line
    #   outputs = outputs[:, :, self.hidden_size] + outputs[:, :, self.hidden_size]
    # column H of concat([out_fwd, out_bwd], -1) is out_bwd[:, :, 0]; out_fwd never
    # contributes to `outputs` (it only feeds hidden[0] inside the kernel).
    outputs = out_bwd[:, :, 0] + out_bwd[:, :, 0]           # (T, B)
    return outputs, hidden


def make_params(key, vocab, hidden_size):
    H = hidden_size
    ks = jax.random.split(key, 5)
    scale = 1.0 / np.sqrt(H)

    def u(k, shape):
        return jax.random.uniform(k, shape, jnp.float32, -scale, scale)

    return {
        "embedding": jax.random.normal(ks[0], (vocab, H), jnp.float32) * 0.1,
        # [direction, gate (r, z, n), in, out]; applied as  x @ wi[d, g]
        "wi": u(ks[1], (2, 3, H, H)),
        "wh": u(ks[2], (2, 3, H, H)),
        "bi": u(ks[3], (2, 3, 1, H)),
        "bh": u(ks[4], (2, 3, 1, H)),
    }


def reference_forward(input_seq, input_lengths, params, H):
    """Pure-JAX (python-loop) reference with identical packed-GRU semantics."""
    emb = params["embedding"][input_seq]
    T, B, _ = emb.shape
    mask = (np.arange(T)[:, None] < np.asarray(input_lengths)[None, :]).astype(np.float32)

    def cell(x, h, d):
        wi, wh = params["wi"][d], params["wh"][d]
        bi, bh = params["bi"][d], params["bh"][d]
        r = jax.nn.sigmoid(x @ wi[0] + bi[0] + h @ wh[0] + bh[0])
        z = jax.nn.sigmoid(x @ wi[1] + bi[1] + h @ wh[1] + bh[1])
        n = jnp.tanh(x @ wi[2] + bi[2] + r * (h @ wh[2] + bh[2]))
        return (1.0 - z) * n + z * h

    h = jnp.zeros((B, H)); outs_f = []
    for t in range(T):
        hn = cell(emb[t], h, 0)
        m = jnp.asarray(mask[t])[:, None]
        outs_f.append(m * hn)
        h = m * hn + (1 - m) * h
    h_f = h

    h = jnp.zeros((B, H)); outs_b = [None] * T
    for t in range(T - 1, -1, -1):
        hn = cell(emb[t], h, 1)
        m = jnp.asarray(mask[t])[:, None]
        outs_b[t] = m * hn
        h = m * hn + (1 - m) * h
    h_b = h

    full = jnp.concatenate([jnp.stack(outs_f), jnp.stack(outs_b)], axis=-1)
    outputs = full[:, :, H] + full[:, :, H]
    hidden = jnp.stack([h_f, h_b])
    return outputs, hidden


if __name__ == "__main__":
    T, B, H, VOCAB = 8, 4, 32, 20

    key = jax.random.PRNGKey(0)
    k_tok, k_par = jax.random.split(key)

    params = make_params(k_par, VOCAB, H)
    input_seq = jax.random.randint(k_tok, (T, B), 0, VOCAB, dtype=jnp.int32)
    # lengths sorted descending, as pack_padded_sequence expects
    input_lengths = jnp.array([8, 6, 5, 3], dtype=jnp.int32)

    outputs, hidden = encoder_rnn_forward(input_seq, input_lengths, params, H)
    jax.block_until_ready((outputs, hidden))

    ref_out, ref_hid = reference_forward(input_seq, input_lengths, params, H)
    np.testing.assert_allclose(np.asarray(outputs), np.asarray(ref_out), rtol=1e-5, atol=1e-5)
    np.testing.assert_allclose(np.asarray(hidden), np.asarray(ref_hid), rtol=1e-5, atol=1e-5)

    assert outputs.shape == (T, B)
    assert hidden.shape == (2, B, H)
    print("KERNEL_OK")
</pallas_src>

<mosaic_0001>
module attributes {stable_mosaic.version = 11 : i64} {
  func.func @bigru_kernel(%arg0: memref<4x1xi32, #tpu.memory_space<vmem>>, %arg1: memref<32x32xf32, #tpu.memory_space<vmem>>, %arg2: memref<2x3x32x32xf32, #tpu.memory_space<vmem>>, %arg3: memref<2x3x32x32xf32, #tpu.memory_space<vmem>>, %arg4: memref<2x3x1x32xf32, #tpu.memory_space<vmem>>, %arg5: memref<2x3x1x32xf32, #tpu.memory_space<vmem>>, %arg6: memref<32x32xf32, #tpu.memory_space<vmem>>, %arg7: memref<2x4x32xf32, #tpu.memory_space<vmem>>, %arg8: memref<32x32xf32, #tpu.memory_space<vmem>>, %arg9: memref<32x32xf32, #tpu.memory_space<vmem>>, %arg10: memref<32x32xf32, #tpu.memory_space<vmem>>, %arg11: memref<32x32xf32, #tpu.memory_space<vmem>>, %arg12: memref<32x32xf32, #tpu.memory_space<vmem>>, %arg13: memref<32x32xf32, #tpu.memory_space<vmem>>) attributes {dimension_semantics = [], scalar_prefetch = 0 : i64, scratch_operands = 6 : i64, tpu.core_type = #tpu.core_type<tc>} {
    %c0 = arith.constant 0 : index
    %c0_0 = arith.constant 0 : index
    %0 = vector.load %arg1[%c0, %c0_0] : memref<32x32xf32, #tpu.memory_space<vmem>>, vector<32x32xf32>
    %c0_1 = arith.constant 0 : index
    %c0_2 = arith.constant 0 : index
    %c0_3 = arith.constant 0 : index
    %c0_4 = arith.constant 0 : index
    %1 = vector.load %arg2[%c0_1, %c0_2, %c0_3, %c0_4] : memref<2x3x32x32xf32, #tpu.memory_space<vmem>>, vector<1x1x32x32xf32>
    %2 = vector.shape_cast %1 : vector<1x1x32x32xf32> to vector<32x32xf32>
    %cst = arith.constant dense<0.000000e+00> : vector<32x32xf32>
    %3 = tpu.matmul %0, %2, %cst {dimension_numbers = #tpu.dot_dimension_numbers<[1], [0], [0], [1], [0, 0, 1, 1], [], []>} : vector<32x32xf32>, vector<32x32xf32>, vector<32x32xf32> -> vector<32x32xf32>
    %c0_5 = arith.constant 0 : index
    %c0_6 = arith.constant 0 : index
    %c0_7 = arith.constant 0 : index
    %c0_8 = arith.constant 0 : index
    %4 = vector.load %arg4[%c0_5, %c0_6, %c0_7, %c0_8] : memref<2x3x1x32xf32, #tpu.memory_space<vmem>>, vector<1x1x1x32xf32>
    %5 = vector.shape_cast %4 : vector<1x1x1x32xf32> to vector<1x32xf32>
    %6 = vector.broadcast %5 : vector<1x32xf32> to vector<32x32xf32>
    %7 = arith.addf %3, %6 : vector<32x32xf32>
    %c0_9 = arith.constant 0 : index
    %c0_10 = arith.constant 0 : index
    %8 = vector.load %arg8[%c0_9, %c0_10] : memref<32x32xf32, #tpu.memory_space<vmem>>, vector<32x32xf32>
    tpu.vector_store %arg8[%c0_9, %c0_10], %7 {strides = array<i32>} : memref<32x32xf32, #tpu.memory_space<vmem>>, vector<32x32xf32>,
    %c0_11 = arith.constant 0 : index
    %c1 = arith.constant 1 : index
    %c0_12 = arith.constant 0 : index
    %c0_13 = arith.constant 0 : index
    %9 = vector.load %arg2[%c0_11, %c1, %c0_12, %c0_13] : memref<2x3x32x32xf32, #tpu.memory_space<vmem>>, vector<1x1x32x32xf32>
    %10 = vector.shape_cast %9 : vector<1x1x32x32xf32> to vector<32x32xf32>
    %cst_14 = arith.constant dense<0.000000e+00> : vector<32x32xf32>
    %11 = tpu.matmul %0, %10, %cst_14 {dimension_numbers = #tpu.dot_dimension_numbers<[1], [0], [0], [1], [0, 0, 1, 1], [], []>} : vector<32x32xf32>, vector<32x32xf32>, vector<32x32xf32> -> vector<32x32xf32>
    %c0_15 = arith.constant 0 : index
    %c1_16 = arith.constant 1 : index
    %c0_17 = arith.constant 0 : index
    %c0_18 = arith.constant 0 : index
    %12 = vector.load %arg4[%c0_15, %c1_16, %c0_17, %c0_18] : memref<2x3x1x32xf32, #tpu.memory_space<vmem>>, vector<1x1x1x32xf32>
    %13 = vector.shape_cast %12 : vector<1x1x1x32xf32> to vector<1x32xf32>
    %14 = vector.broadcast %13 : vector<1x32xf32> to vector<32x32xf32>
    %15 = arith.addf %11, %14 : vector<32x32xf32>
    %c0_19 = arith.constant 0 : index
    %c0_20 = arith.constant 0 : index
    %16 = vector.load %arg9[%c0_19, %c0_20] : memref<32x32xf32, #tpu.memory_space<vmem>>, vector<32x32xf32>
    tpu.vector_store %arg9[%c0_19, %c0_20], %15 {strides = array<i32>} : memref<32x32xf32, #tpu.memory_space<vmem>>, vector<32x32xf32>,
    %c0_21 = arith.constant 0 : index
    %c2 = arith.constant 2 : index
    %c0_22 = arith.constant 0 : index
    %c0_23 = arith.constant 0 : index
    %17 = vector.load %arg2[%c0_21, %c2, %c0_22, %c0_23] : memref<2x3x32x32xf32, #tpu.memory_space<vmem>>, vector<1x1x32x32xf32>
    %18 = vector.shape_cast %17 : vector<1x1x32x32xf32> to vector<32x32xf32>
    %cst_24 = arith.constant dense<0.000000e+00> : vector<32x32xf32>
    %19 = tpu.matmul %0, %18, %cst_24 {dimension_numbers = #tpu.dot_dimension_numbers<[1], [0], [0], [1], [0, 0, 1, 1], [], []>} : vector<32x32xf32>, vector<32x32xf32>, vector<32x32xf32> -> vector<32x32xf32>
    %c0_25 = arith.constant 0 : index
    %c2_26 = arith.constant 2 : index
    %c0_27 = arith.constant 0 : index
    %c0_28 = arith.constant 0 : index
    %20 = vector.load %arg4[%c0_25, %c2_26, %c0_27, %c0_28] : memref<2x3x1x32xf32, #tpu.memory_space<vmem>>, vector<1x1x1x32xf32>
    %21 = vector.shape_cast %20 : vector<1x1x1x32xf32> to vector<1x32xf32>
    %22 = vector.broadcast %21 : vector<1x32xf32> to vector<32x32xf32>
    %23 = arith.addf %19, %22 : vector<32x32xf32>
    %c0_29 = arith.constant 0 : index
    %c0_30 = arith.constant 0 : index
    %24 = vector.load %arg10[%c0_29, %c0_30] : memref<32x32xf32, #tpu.memory_space<vmem>>, vector<32x32xf32>
    tpu.vector_store %arg10[%c0_29, %c0_30], %23 {strides = array<i32>} : memref<32x32xf32, #tpu.memory_space<vmem>>, vector<32x32xf32>,
    %c1_31 = arith.constant 1 : index
    %c0_32 = arith.constant 0 : index
    %c0_33 = arith.constant 0 : index
    %c0_34 = arith.constant 0 : index
    %25 = vector.load %arg2[%c1_31, %c0_32, %c0_33, %c0_34] : memref<2x3x32x32xf32, #tpu.memory_space<vmem>>, vector<1x1x32x32xf32>
    %26 = vector.shape_cast %25 : vector<1x1x32x32xf32> to vector<32x32xf32>
    %cst_35 = arith.constant dense<0.000000e+00> : vector<32x32xf32>
    %27 = tpu.matmul %0, %26, %cst_35 {dimension_numbers = #tpu.dot_dimension_numbers<[1], [0], [0], [1], [0, 0, 1, 1], [], []>} : vector<32x32xf32>, vector<32x32xf32>, vector<32x32xf32> -> vector<32x32xf32>
    %c1_36 = arith.constant 1 : index
    %c0_37 = arith.constant 0 : index
    %c0_38 = arith.constant 0 : index
    %c0_39 = arith.constant 0 : index
    %28 = vector.load %arg4[%c1_36, %c0_37, %c0_38, %c0_39] : memref<2x3x1x32xf32, #tpu.memory_space<vmem>>, vector<1x1x1x32xf32>
    %29 = vector.shape_cast %28 : vector<1x1x1x32xf32> to vector<1x32xf32>
    %30 = vector.broadcast %29 : vector<1x32xf32> to vector<32x32xf32>
    %31 = arith.addf %27, %30 : vector<32x32xf32>
    %c0_40 = arith.constant 0 : index
    %c0_41 = arith.constant 0 : index
    %32 = vector.load %arg11[%c0_40, %c0_41] : memref<32x32xf32, #tpu.memory_space<vmem>>, vector<32x32xf32>
    tpu.vector_store %arg11[%c0_40, %c0_41], %31 {strides = array<i32>} : memref<32x32xf32, #tpu.memory_space<vmem>>, vector<32x32xf32>,
    %c1_42 = arith.constant 1 : index
    %c1_43 = arith.constant 1 : index
    %c0_44 = arith.constant 0 : index
    %c0_45 = arith.constant 0 : index
    %33 = vector.load %arg2[%c1_42, %c1_43, %c0_44, %c0_45] : memref<2x3x32x32xf32, #tpu.memory_space<vmem>>, vector<1x1x32x32xf32>
    %34 = vector.shape_cast %33 : vector<1x1x32x32xf32> to vector<32x32xf32>
    %cst_46 = arith.constant dense<0.000000e+00> : vector<32x32xf32>
    %35 = tpu.matmul %0, %34, %cst_46 {dimension_numbers = #tpu.dot_dimension_numbers<[1], [0], [0], [1], [0, 0, 1, 1], [], []>} : vector<32x32xf32>, vector<32x32xf32>, vector<32x32xf32> -> vector<32x32xf32>
    %c1_47 = arith.constant 1 : index
    %c1_48 = arith.constant 1 : index
    %c0_49 = arith.constant 0 : index
    %c0_50 = arith.constant 0 : index
    %36 = vector.load %arg4[%c1_47, %c1_48, %c0_49, %c0_50] : memref<2x3x1x32xf32, #tpu.memory_space<vmem>>, vector<1x1x1x32xf32>
    %37 = vector.shape_cast %36 : vector<1x1x1x32xf32> to vector<1x32xf32>
    %38 = vector.broadcast %37 : vector<1x32xf32> to vector<32x32xf32>
    %39 = arith.addf %35, %38 : vector<32x32xf32>
    %c0_51 = arith.constant 0 : index
    %c0_52 = arith.constant 0 : index
    %40 = vector.load %arg12[%c0_51, %c0_52] : memref<32x32xf32, #tpu.memory_space<vmem>>, vector<32x32xf32>
    tpu.vector_store %arg12[%c0_51, %c0_52], %39 {strides = array<i32>} : memref<32x32xf32, #tpu.memory_space<vmem>>, vector<32x32xf32>,
    %c1_53 = arith.constant 1 : index
    %c2_54 = arith.constant 2 : index
    %c0_55 = arith.constant 0 : index
    %c0_56 = arith.constant 0 : index
    %41 = vector.load %arg2[%c1_53, %c2_54, %c0_55, %c0_56] : memref<2x3x32x32xf32, #tpu.memory_space<vmem>>, vector<1x1x32x32xf32>
    %42 = vector.shape_cast %41 : vector<1x1x32x32xf32> to vector<32x32xf32>
    %cst_57 = arith.constant dense<0.000000e+00> : vector<32x32xf32>
    %43 = tpu.matmul %0, %42, %cst_57 {dimension_numbers = #tpu.dot_dimension_numbers<[1], [0], [0], [1], [0, 0, 1, 1], [], []>} : vector<32x32xf32>, vector<32x32xf32>, vector<32x32xf32> -> vector<32x32xf32>
    %c1_58 = arith.constant 1 : index
    %c2_59 = arith.constant 2 : index
    %c0_60 = arith.constant 0 : index
    %c0_61 = arith.constant 0 : index
    %44 = vector.load %arg4[%c1_58, %c2_59, %c0_60, %c0_61] : memref<2x3x1x32xf32, #tpu.memory_space<vmem>>, vector<1x1x1x32xf32>
    %45 = vector.shape_cast %44 : vector<1x1x1x32xf32> to vector<1x32xf32>
    %46 = vector.broadcast %45 : vector<1x32xf32> to vector<32x32xf32>
    %47 = arith.addf %43, %46 : vector<32x32xf32>
    %c0_62 = arith.constant 0 : index
    %c0_63 = arith.constant 0 : index
    %48 = vector.load %arg13[%c0_62, %c0_63] : memref<32x32xf32, #tpu.memory_space<vmem>>, vector<32x32xf32>
    tpu.vector_store %arg13[%c0_62, %c0_63], %47 {strides = array<i32>} : memref<32x32xf32, #tpu.memory_space<vmem>>, vector<32x32xf32>,
    %c0_64 = arith.constant 0 : index
    %c0_65 = arith.constant 0 : index
    %c0_66 = arith.constant 0 : index
    %c0_67 = arith.constant 0 : index
    %49 = vector.load %arg3[%c0_64, %c0_65, %c0_66, %c0_67] : memref<2x3x32x32xf32, #tpu.memory_space<vmem>>, vector<1x1x32x32xf32>
    %50 = vector.shape_cast %49 : vector<1x1x32x32xf32> to vector<32x32xf32>
    %c0_68 = arith.constant 0 : index
    %c1_69 = arith.constant 1 : index
    %c0_70 = arith.constant 0 : index
    %c0_71 = arith.constant 0 : index
    %51 = vector.load %arg3[%c0_68, %c1_69, %c0_70, %c0_71] : memref<2x3x32x32xf32, #tpu.memory_space<vmem>>, vector<1x1x32x32xf32>
    %52 = vector.shape_cast %51 : vector<1x1x32x32xf32> to vector<32x32xf32>
    %c0_72 = arith.constant 0 : index
    %c2_73 = arith.constant 2 : index
    %c0_74 = arith.constant 0 : index
    %c0_75 = arith.constant 0 : index
    %53 = vector.load %arg3[%c0_72, %c2_73, %c0_74, %c0_75] : memref<2x3x32x32xf32, #tpu.memory_space<vmem>>, vector<1x1x32x32xf32>
    %54 = vector.shape_cast %53 : vector<1x1x32x32xf32> to vector<32x32xf32>
    %c1_76 = arith.constant 1 : index
    %c0_77 = arith.constant 0 : index
    %c0_78 = arith.constant 0 : index
    %c0_79 = arith.constant 0 : index
    %55 = vector.load %arg3[%c1_76, %c0_77, %c0_78, %c0_79] : memref<2x3x32x32xf32, #tpu.memory_space<vmem>>, vector<1x1x32x32xf32>
    %56 = vector.shape_cast %55 : vector<1x1x32x32xf32> to vector<32x32xf32>
    %c1_80 = arith.constant 1 : index
    %c1_81 = arith.constant 1 : index
    %c0_82 = arith.constant 0 : index
    %c0_83 = arith.constant 0 : index
    %57 = vector.load %arg3[%c1_80, %c1_81, %c0_82, %c0_83] : memref<2x3x32x32xf32, #tpu.memory_space<vmem>>, vector<1x1x32x32xf32>
    %58 = vector.shape_cast %57 : vector<1x1x32x32xf32> to vector<32x32xf32>
    %c1_84 = arith.constant 1 : index
    %c2_85 = arith.constant 2 : index
    %c0_86 = arith.constant 0 : index
    %c0_87 = arith.constant 0 : index
    %59 = vector.load %arg3[%c1_84, %c2_85, %c0_86, %c0_87] : memref<2x3x32x32xf32, #tpu.memory_space<vmem>>, vector<1x1x32x32xf32>
    %60 = vector.shape_cast %59 : vector<1x1x32x32xf32> to vector<32x32xf32>
    %c0_88 = arith.constant 0 : index
    %c0_89 = arith.constant 0 : index
    %c0_90 = arith.constant 0 : index
    %c0_91 = arith.constant 0 : index
    %61 = vector.load %arg5[%c0_88, %c0_89, %c0_90, %c0_91] : memref<2x3x1x32xf32, #tpu.memory_space<vmem>>, vector<1x1x1x32xf32>
    %62 = vector.shape_cast %61 : vector<1x1x1x32xf32> to vector<1x32xf32>
    %63 = vector.shape_cast %62 : vector<1x32xf32> to vector<1x32xf32>
    %64 = vector.broadcast %63 : vector<1x32xf32> to vector<4x32xf32>
    %c0_92 = arith.constant 0 : index
    %c1_93 = arith.constant 1 : index
    %c0_94 = arith.constant 0 : index
    %c0_95 = arith.constant 0 : index
    %65 = vector.load %arg5[%c0_92, %c1_93, %c0_94, %c0_95] : memref<2x3x1x32xf32, #tpu.memory_space<vmem>>, vector<1x1x1x32xf32>
    %66 = vector.shape_cast %65 : vector<1x1x1x32xf32> to vector<1x32xf32>
    %67 = vector.shape_cast %66 : vector<1x32xf32> to vector<1x32xf32>
    %68 = vector.broadcast %67 : vector<1x32xf32> to vector<4x32xf32>
    %c0_96 = arith.constant 0 : index
    %c2_97 = arith.constant 2 : index
    %c0_98 = arith.constant 0 : index
    %c0_99 = arith.constant 0 : index
    %69 = vector.load %arg5[%c0_96, %c2_97, %c0_98, %c0_99] : memref<2x3x1x32xf32, #tpu.memory_space<vmem>>, vector<1x1x1x32xf32>
    %70 = vector.shape_cast %69 : vector<1x1x1x32xf32> to vector<1x32xf32>
    %71 = vector.shape_cast %70 : vector<1x32xf32> to vector<1x32xf32>
    %72 = vector.broadcast %71 : vector<1x32xf32> to vector<4x32xf32>
    %c1_100 = arith.constant 1 : index
    %c0_101 = arith.constant 0 : index
    %c0_102 = arith.constant 0 : index
    %c0_103 = arith.constant 0 : index
    %73 = vector.load %arg5[%c1_100, %c0_101, %c0_102, %c0_103] : memref<2x3x1x32xf32, #tpu.memory_space<vmem>>, vector<1x1x1x32xf32>
    %74 = vector.shape_cast %73 : vector<1x1x1x32xf32> to vector<1x32xf32>
    %75 = vector.shape_cast %74 : vector<1x32xf32> to vector<1x32xf32>
    %76 = vector.broadcast %75 : vector<1x32xf32> to vector<4x32xf32>
    %c1_104 = arith.constant 1 : index
    %c1_105 = arith.constant 1 : index
    %c0_106 = arith.constant 0 : index
    %c0_107 = arith.constant 0 : index
    %77 = vector.load %arg5[%c1_104, %c1_105, %c0_106, %c0_107] : memref<2x3x1x32xf32, #tpu.memory_space<vmem>>, vector<1x1x1x32xf32>
    %78 = vector.shape_cast %77 : vector<1x1x1x32xf32> to vector<1x32xf32>
    %79 = vector.shape_cast %78 : vector<1x32xf32> to vector<1x32xf32>
    %80 = vector.broadcast %79 : vector<1x32xf32> to vector<4x32xf32>
    %c1_108 = arith.constant 1 : index
    %c2_109 = arith.constant 2 : index
    %c0_110 = arith.constant 0 : index
    %c0_111 = arith.constant 0 : index
    %81 = vector.load %arg5[%c1_108, %c2_109, %c0_110, %c0_111] : memref<2x3x1x32xf32, #tpu.memory_space<vmem>>, vector<1x1x1x32xf32>
    %82 = vector.shape_cast %81 : vector<1x1x1x32xf32> to vector<1x32xf32>
    %83 = vector.shape_cast %82 : vector<1x32xf32> to vector<1x32xf32>
    %84 = vector.broadcast %83 : vector<1x32xf32> to vector<4x32xf32>
    %c0_112 = arith.constant 0 : index
    %c0_113 = arith.constant 0 : index
    %85 = vector.load %arg0[%c0_112, %c0_113] : memref<4x1xi32, #tpu.memory_space<vmem>>, vector<4x1xi32>
    %cst_114 = arith.constant 0.000000e+00 : f32
    %86 = vector.broadcast %cst_114 : f32 to vector<4x32xf32>
    %c0_i32 = arith.constant 0 : i32
    %c7_i32 = arith.constant 7 : i32
    %87 = arith.subi %c7_i32, %c0_i32 : i32
    %c4_i32 = arith.constant 4 : i32
    %88 = arith.muli %c0_i32, %c4_i32 : i32
    %c4_i32_115 = arith.constant 4 : i32
    %89 = arith.muli %87, %c4_i32_115 : i32
    %90 = arith.index_cast %88 : i32 to index
    %c0_116 = arith.constant 0 : index
    %91 = vector.load %arg8[%90, %c0_116] : memref<32x32xf32, #tpu.memory_space<vmem>>, vector<4x32xf32>
    %92 = arith.index_cast %88 : i32 to index
    %c0_117 = arith.constant 0 : index
    %93 = vector.load %arg9[%92, %c0_117] : memref<32x32xf32, #tpu.memory_space<vmem>>, vector<4x32xf32>
    %94 = arith.index_cast %88 : i32 to index
    %c0_118 = arith.constant 0 : index
    %95 = vector.load %arg10[%94, %c0_118] : memref<32x32xf32, #tpu.memory_space<vmem>>, vector<4x32xf32>
    %cst_119 = arith.constant dense<0.000000e+00> : vector<4x32xf32>
    %96 = tpu.matmul %86, %50, %cst_119 {dimension_numbers = #tpu.dot_dimension_numbers<[1], [0], [0], [1], [0, 0, 1, 1], [], []>} : vector<4x32xf32>, vector<32x32xf32>, vector<4x32xf32> -> vector<4x32xf32>
    %97 = arith.addf %96, %64 : vector<4x32xf32>
    %cst_120 = arith.constant dense<0.000000e+00> : vector<4x32xf32>
    %98 = tpu.matmul %86, %52, %cst_120 {dimension_numbers = #tpu.dot_dimension_numbers<[1], [0], [0], [1], [0, 0, 1, 1], [], []>} : vector<4x32xf32>, vector<32x32xf32>, vector<4x32xf32> -> vector<4x32xf32>
    %99 = arith.addf %98, %68 : vector<4x32xf32>
    %cst_121 = arith.constant dense<0.000000e+00> : vector<4x32xf32>
    %100 = tpu.matmul %86, %54, %cst_121 {dimension_numbers = #tpu.dot_dimension_numbers<[1], [0], [0], [1], [0, 0, 1, 1], [], []>} : vector<4x32xf32>, vector<32x32xf32>, vector<4x32xf32> -> vector<4x32xf32>
    %101 = arith.addf %100, %72 : vector<4x32xf32>
    %102 = arith.addf %91, %97 : vector<4x32xf32>
    %103 = arith.negf %102 : vector<4x32xf32>
    %104 = math.exp %103 : vector<4x32xf32>
    %cst_122 = arith.constant 1.000000e+00 : f32
    %105 = vector.broadcast %cst_122 : f32 to vector<4x32xf32>
    %106 = arith.addf %105, %104 : vector<4x32xf32>
    %107 = arith.divf %105, %106 : vector<4x32xf32>
    %108 = arith.addf %93, %99 : vector<4x32xf32>
    %109 = arith.negf %108 : vector<4x32xf32>
    %110 = math.exp %109 : vector<4x32xf32>
    %cst_123 = arith.constant 1.000000e+00 : f32
    %111 = vector.broadcast %cst_123 : f32 to vector<4x32xf32>
    %112 = arith.addf %111, %110 : vector<4x32xf32>
    %113 = arith.divf %111, %112 : vector<4x32xf32>
    %114 = arith.mulf %107, %101 : vector<4x32xf32>
    %115 = arith.addf %95, %114 : vector<4x32xf32>
    %116 = math.tanh %115 : vector<4x32xf32>
    %cst_124 = arith.constant 1.000000e+00 : f32
    %117 = vector.broadcast %cst_124 : f32 to vector<4x32xf32>
    %118 = arith.subf %117, %113 : vector<4x32xf32>
    %119 = arith.mulf %118, %116 : vector<4x32xf32>
    %120 = arith.mulf %113, %86 : vector<4x32xf32>
    %121 = arith.addf %119, %120 : vector<4x32xf32>
    %122 = vector.broadcast %c0_i32 : i32 to vector<4x1xi32>
    %123 = arith.cmpi sgt, %85, %122 : vector<4x1xi32>
    %124 = vector.shape_cast %123 : vector<4x1xi1> to vector<4x1xi1>
    %125 = vector.broadcast %124 : vector<4x1xi1> to vector<4x32xi1>
    %126 = arith.select %125, %121, %86 : vector<4x32xi1>, vector<4x32xf32>
    %127 = arith.index_cast %89 : i32 to index
    %c0_125 = arith.constant 0 : index
    %128 = vector.load %arg11[%127, %c0_125] : memref<32x32xf32, #tpu.memory_space<vmem>>, vector<4x32xf32>
    %129 = arith.index_cast %89 : i32 to index
    %c0_126 = arith.constant 0 : index
    %130 = vector.load %arg12[%129, %c0_126] : memref<32x32xf32, #tpu.memory_space<vmem>>, vector<4x32xf32>
    %131 = arith.index_cast %89 : i32 to index
    %c0_127 = arith.constant 0 : index
    %132 = vector.load %arg13[%131, %c0_127] : memref<32x32xf32, #tpu.memory_space<vmem>>, vector<4x32xf32>
    %cst_128 = arith.constant dense<0.000000e+00> : vector<4x32xf32>
    %133 = tpu.matmul %86, %56, %cst_128 {dimension_numbers = #tpu.dot_dimension_numbers<[1], [0], [0], [1], [0, 0, 1, 1], [], []>} : vector<4x32xf32>, vector<32x32xf32>, vector<4x32xf32> -> vector<4x32xf32>
    %134 = arith.addf %133, %76 : vector<4x32xf32>
    %cst_129 = arith.constant dense<0.000000e+00> : vector<4x32xf32>
    %135 = tpu.matmul %86, %58, %cst_129 {dimension_numbers = #tpu.dot_dimension_numbers<[1], [0], [0], [1], [0, 0, 1, 1], [], []>} : vector<4x32xf32>, vector<32x32xf32>, vector<4x32xf32> -> vector<4x32xf32>
    %136 = arith.addf %135, %80 : vector<4x32xf32>
    %cst_130 = arith.constant dense<0.000000e+00> : vector<4x32xf32>
    %137 = tpu.matmul %86, %60, %cst_130 {dimension_numbers = #tpu.dot_dimension_numbers<[1], [0], [0], [1], [0, 0, 1, 1], [], []>} : vector<4x32xf32>, vector<32x32xf32>, vector<4x32xf32> -> vector<4x32xf32>
    %138 = arith.addf %137, %84 : vector<4x32xf32>
    %139 = arith.addf %128, %134 : vector<4x32xf32>
    %140 = arith.negf %139 : vector<4x32xf32>
    %141 = math.exp %140 : vector<4x32xf32>
    %cst_131 = arith.constant 1.000000e+00 : f32
    %142 = vector.broadcast %cst_131 : f32 to vector<4x32xf32>
    %143 = arith.addf %142, %141 : vector<4x32xf32>
    %144 = arith.divf %142, %143 : vector<4x32xf32>
    %145 = arith.addf %130, %136 : vector<4x32xf32>
    %146 = arith.negf %145 : vector<4x32xf32>
    %147 = math.exp %146 : vector<4x32xf32>
    %cst_132 = arith.constant 1.000000e+00 : f32
    %148 = vector.broadcast %cst_132 : f32 to vector<4x32xf32>
    %149 = arith.addf %148, %147 : vector<4x32xf32>
    %150 = arith.divf %148, %149 : vector<4x32xf32>
    %151 = arith.mulf %144, %138 : vector<4x32xf32>
    %152 = arith.addf %132, %151 : vector<4x32xf32>
    %153 = math.tanh %152 : vector<4x32xf32>
    %cst_133 = arith.constant 1.000000e+00 : f32
    %154 = vector.broadcast %cst_133 : f32 to vector<4x32xf32>
    %155 = arith.subf %154, %150 : vector<4x32xf32>
    %156 = arith.mulf %155, %153 : vector<4x32xf32>
    %157 = arith.mulf %150, %86 : vector<4x32xf32>
    %158 = arith.addf %156, %157 : vector<4x32xf32>
    %159 = vector.broadcast %87 : i32 to vector<4x1xi32>
    %160 = arith.cmpi sgt, %85, %159 : vector<4x1xi32>
    %cst_134 = arith.constant 0.000000e+00 : f32
    %161 = vector.shape_cast %160 : vector<4x1xi1> to vector<4x1xi1>
    %162 = vector.broadcast %161 : vector<4x1xi1> to vector<4x32xi1>
    %163 = vector.broadcast %cst_134 : f32 to vector<4x32xf32>
    %164 = arith.select %162, %158, %163 : vector<4x32xi1>, vector<4x32xf32>
    %165 = arith.index_cast %89 : i32 to index
    %c0_135 = arith.constant 0 : index
    %166 = vector.load %arg6[%165, %c0_135] : memref<32x32xf32, #tpu.memory_space<vmem>>, vector<4x32xf32>
    tpu.vector_store %arg6[%165, %c0_135], %164 {strides = array<i32>} : memref<32x32xf32, #tpu.memory_space<vmem>>, vector<4x32xf32>,
    %167 = vector.shape_cast %160 : vector<4x1xi1> to vector<4x1xi1>
    %168 = vector.broadcast %167 : vector<4x1xi1> to vector<4x32xi1>
    %169 = arith.select %168, %158, %86 : vector<4x32xi1>, vector<4x32xf32>
    %c1_i32 = arith.constant 1 : i32
    %c7_i32_136 = arith.constant 7 : i32
    %170 = arith.subi %c7_i32_136, %c1_i32 : i32
    %c4_i32_137 = arith.constant 4 : i32
    %171 = arith.muli %c1_i32, %c4_i32_137 : i32
    %c4_i32_138 = arith.constant 4 : i32
    %172 = arith.muli %170, %c4_i32_138 : i32
    %173 = arith.index_cast %171 : i32 to index
    %c0_139 = arith.constant 0 : index
    %174 = vector.load %arg8[%173, %c0_139] : memref<32x32xf32, #tpu.memory_space<vmem>>, vector<4x32xf32>
    %175 = arith.index_cast %171 : i32 to index
    %c0_140 = arith.constant 0 : index
    %176 = vector.load %arg9[%175, %c0_140] : memref<32x32xf32, #tpu.memory_space<vmem>>, vector<4x32xf32>
    %177 = arith.index_cast %171 : i32 to index
    %c0_141 = arith.constant 0 : index
    %178 = vector.load %arg10[%177, %c0_141] : memref<32x32xf32, #tpu.memory_space<vmem>>, vector<4x32xf32>
    %cst_142 = arith.constant dense<0.000000e+00> : vector<4x32xf32>
    %179 = tpu.matmul %126, %50, %cst_142 {dimension_numbers = #tpu.dot_dimension_numbers<[1], [0], [0], [1], [0, 0, 1, 1], [], []>} : vector<4x32xf32>, vector<32x32xf32>, vector<4x32xf32> -> vector<4x32xf32>
    %180 = arith.addf %179, %64 : vector<4x32xf32>
    %cst_143 = arith.constant dense<0.000000e+00> : vector<4x32xf32>
    %181 = tpu.matmul %126, %52, %cst_143 {dimension_numbers = #tpu.dot_dimension_numbers<[1], [0], [0], [1], [0, 0, 1, 1], [], []>} : vector<4x32xf32>, vector<32x32xf32>, vector<4x32xf32> -> vector<4x32xf32>
    %182 = arith.addf %181, %68 : vector<4x32xf32>
    %cst_144 = arith.constant dense<0.000000e+00> : vector<4x32xf32>
    %183 = tpu.matmul %126, %54, %cst_144 {dimension_numbers = #tpu.dot_dimension_numbers<[1], [0], [0], [1], [0, 0, 1, 1], [], []>} : vector<4x32xf32>, vector<32x32xf32>, vector<4x32xf32> -> vector<4x32xf32>
    %184 = arith.addf %183, %72 : vector<4x32xf32>
    %185 = arith.addf %174, %180 : vector<4x32xf32>
    %186 = arith.negf %185 : vector<4x32xf32>
    %187 = math.exp %186 : vector<4x32xf32>
    %cst_145 = arith.constant 1.000000e+00 : f32
    %188 = vector.broadcast %cst_145 : f32 to vector<4x32xf32>
    %189 = arith.addf %188, %187 : vector<4x32xf32>
    %190 = arith.divf %188, %189 : vector<4x32xf32>
    %191 = arith.addf %176, %182 : vector<4x32xf32>
    %192 = arith.negf %191 : vector<4x32xf32>
    %193 = math.exp %192 : vector<4x32xf32>
    %cst_146 = arith.constant 1.000000e+00 : f32
    %194 = vector.broadcast %cst_146 : f32 to vector<4x32xf32>
    %195 = arith.addf %194, %193 : vector<4x32xf32>
    %196 = arith.divf %194, %195 : vector<4x32xf32>
    %197 = arith.mulf %190, %184 : vector<4x32xf32>
    %198 = arith.addf %178, %197 : vector<4x32xf32>
    %199 = math.tanh %198 : vector<4x32xf32>
    %cst_147 = arith.constant 1.000000e+00 : f32
    %200 = vector.broadcast %cst_147 : f32 to vector<4x32xf32>
    %201 = arith.subf %200, %196 : vector<4x32xf32>
    %202 = arith.mulf %201, %199 : vector<4x32xf32>
    %203 = arith.mulf %196, %126 : vector<4x32xf32>
    %204 = arith.addf %202, %203 : vector<4x32xf32>
    %205 = vector.broadcast %c1_i32 : i32 to vector<4x1xi32>
    %206 = arith.cmpi sgt, %85, %205 : vector<4x1xi32>
    %207 = vector.shape_cast %206 : vector<4x1xi1> to vector<4x1xi1>
    %208 = vector.broadcast %207 : vector<4x1xi1> to vector<4x32xi1>
    %209 = arith.select %208, %204, %126 : vector<4x32xi1>, vector<4x32xf32>
    %210 = arith.index_cast %172 : i32 to index
    %c0_148 = arith.constant 0 : index
    %211 = vector.load %arg11[%210, %c0_148] : memref<32x32xf32, #tpu.memory_space<vmem>>, vector<4x32xf32>
    %212 = arith.index_cast %172 : i32 to index
    %c0_149 = arith.constant 0 : index
    %213 = vector.load %arg12[%212, %c0_149] : memref<32x32xf32, #tpu.memory_space<vmem>>, vector<4x32xf32>
    %214 = arith.index_cast %172 : i32 to index
    %c0_150 = arith.constant 0 : index
    %215 = vector.load %arg13[%214, %c0_150] : memref<32x32xf32, #tpu.memory_space<vmem>>, vector<4x32xf32>
    %cst_151 = arith.constant dense<0.000000e+00> : vector<4x32xf32>
    %216 = tpu.matmul %169, %56, %cst_151 {dimension_numbers = #tpu.dot_dimension_numbers<[1], [0], [0], [1], [0, 0, 1, 1], [], []>} : vector<4x32xf32>, vector<32x32xf32>, vector<4x32xf32> -> vector<4x32xf32>
    %217 = arith.addf %216, %76 : vector<4x32xf32>
    %cst_152 = arith.constant dense<0.000000e+00> : vector<4x32xf32>
    %218 = tpu.matmul %169, %58, %cst_152 {dimension_numbers = #tpu.dot_dimension_numbers<[1], [0], [0], [1], [0, 0, 1, 1], [], []>} : vector<4x32xf32>, vector<32x32xf32>, vector<4x32xf32> -> vector<4x32xf32>
    %219 = arith.addf %218, %80 : vector<4x32xf32>
    %cst_153 = arith.constant dense<0.000000e+00> : vector<4x32xf32>
    %220 = tpu.matmul %169, %60, %cst_153 {dimension_numbers = #tpu.dot_dimension_numbers<[1], [0], [0], [1], [0, 0, 1, 1], [], []>} : vector<4x32xf32>, vector<32x32xf32>, vector<4x32xf32> -> vector<4x32xf32>
    %221 = arith.addf %220, %84 : vector<4x32xf32>
    %222 = arith.addf %211, %217 : vector<4x32xf32>
    %223 = arith.negf %222 : vector<4x32xf32>
    %224 = math.exp %223 : vector<4x32xf32>
    %cst_154 = arith.constant 1.000000e+00 : f32
    %225 = vector.broadcast %cst_154 : f32 to vector<4x32xf32>
    %226 = arith.addf %225, %224 : vector<4x32xf32>
    %227 = arith.divf %225, %226 : vector<4x32xf32>
    %228 = arith.addf %213, %219 : vector<4x32xf32>
    %229 = arith.negf %228 : vector<4x32xf32>
    %230 = math.exp %229 : vector<4x32xf32>
    %cst_155 = arith.constant 1.000000e+00 : f32
    %231 = vector.broadcast %cst_155 : f32 to vector<4x32xf32>
    %232 = arith.addf %231, %230 : vector<4x32xf32>
    %233 = arith.divf %231, %232 : vector<4x32xf32>
    %234 = arith.mulf %227, %221 : vector<4x32xf32>
    %235 = arith.addf %215, %234 : vector<4x32xf32>
    %236 = math.tanh %235 : vector<4x32xf32>
    %cst_156 = arith.constant 1.000000e+00 : f32
    %237 = vector.broadcast %cst_156 : f32 to vector<4x32xf32>
    %238 = arith.subf %237, %233 : vector<4x32xf32>
    %239 = arith.mulf %238, %236 : vector<4x32xf32>
    %240 = arith.mulf %233, %169 : vector<4x32xf32>
    %241 = arith.addf %239, %240 : vector<4x32xf32>
    %242 = vector.broadcast %170 : i32 to vector<4x1xi32>
    %243 = arith.cmpi sgt, %85, %242 : vector<4x1xi32>
    %cst_157 = arith.constant 0.000000e+00 : f32
    %244 = vector.shape_cast %243 : vector<4x1xi1> to vector<4x1xi1>
    %245 = vector.broadcast %244 : vector<4x1xi1> to vector<4x32xi1>
    %246 = vector.broadcast %cst_157 : f32 to vector<4x32xf32>
    %247 = arith.select %245, %241, %246 : vector<4x32xi1>, vector<4x32xf32>
    %248 = arith.index_cast %172 : i32 to index
    %c0_158 = arith.constant 0 : index
    %249 = vector.load %arg6[%248, %c0_158] : memref<32x32xf32, #tpu.memory_space<vmem>>, vector<4x32xf32>
    tpu.vector_store %arg6[%248, %c0_158], %247 {strides = array<i32>} : memref<32x32xf32, #tpu.memory_space<vmem>>, vector<4x32xf32>,
    %250 = vector.shape_cast %243 : vector<4x1xi1> to vector<4x1xi1>
    %251 = vector.broadcast %250 : vector<4x1xi1> to vector<4x32xi1>
    %252 = arith.select %251, %241, %169 : vector<4x32xi1>, vector<4x32xf32>
    %c2_i32 = arith.constant 2 : i32
    %c7_i32_159 = arith.constant 7 : i32
    %253 = arith.subi %c7_i32_159, %c2_i32 : i32
    %c4_i32_160 = arith.constant 4 : i32
    %254 = arith.muli %c2_i32, %c4_i32_160 : i32
    %c4_i32_161 = arith.constant 4 : i32
    %255 = arith.muli %253, %c4_i32_161 : i32
    %256 = arith.index_cast %254 : i32 to index
    %c0_162 = arith.constant 0 : index
    %257 = vector.load %arg8[%256, %c0_162] : memref<32x32xf32, #tpu.memory_space<vmem>>, vector<4x32xf32>
    %258 = arith.index_cast %254 : i32 to index
    %c0_163 = arith.constant 0 : index
    %259 = vector.load %arg9[%258, %c0_163] : memref<32x32xf32, #tpu.memory_space<vmem>>, vector<4x32xf32>
    %260 = arith.index_cast %254 : i32 to index
    %c0_164 = arith.constant 0 : index
    %261 = vector.load %arg10[%260, %c0_164] : memref<32x32xf32, #tpu.memory_space<vmem>>, vector<4x32xf32>
    %cst_165 = arith.constant dense<0.000000e+00> : vector<4x32xf32>
    %262 = tpu.matmul %209, %50, %cst_165 {dimension_numbers = #tpu.dot_dimension_numbers<[1], [0], [0], [1], [0, 0, 1, 1], [], []>} : vector<4x32xf32>, vector<32x32xf32>, vector<4x32xf32> -> vector<4x32xf32>
    %263 = arith.addf %262, %64 : vector<4x32xf32>
    %cst_166 = arith.constant dense<0.000000e+00> : vector<4x32xf32>
    %264 = tpu.matmul %209, %52, %cst_166 {dimension_numbers = #tpu.dot_dimension_numbers<[1], [0], [0], [1], [0, 0, 1, 1], [], []>} : vector<4x32xf32>, vector<32x32xf32>, vector<4x32xf32> -> vector<4x32xf32>
    %265 = arith.addf %264, %68 : vector<4x32xf32>
    %cst_167 = arith.constant dense<0.000000e+00> : vector<4x32xf32>
    %266 = tpu.matmul %209, %54, %cst_167 {dimension_numbers = #tpu.dot_dimension_numbers<[1], [0], [0], [1], [0, 0, 1, 1], [], []>} : vector<4x32xf32>, vector<32x32xf32>, vector<4x32xf32> -> vector<4x32xf32>
    %267 = arith.addf %266, %72 : vector<4x32xf32>
    %268 = arith.addf %257, %263 : vector<4x32xf32>
    %269 = arith.negf %268 : vector<4x32xf32>
    %270 = math.exp %269 : vector<4x32xf32>
    %cst_168 = arith.constant 1.000000e+00 : f32
    %271 = vector.broadcast %cst_168 : f32 to vector<4x32xf32>
    %272 = arith.addf %271, %270 : vector<4x32xf32>
    %273 = arith.divf %271, %272 : vector<4x32xf32>
    %274 = arith.addf %259, %265 : vector<4x32xf32>
    %275 = arith.negf %274 : vector<4x32xf32>
    %276 = math.exp %275 : vector<4x32xf32>
    %cst_169 = arith.constant 1.000000e+00 : f32
    %277 = vector.broadcast %cst_169 : f32 to vector<4x32xf32>
    %278 = arith.addf %277, %276 : vector<4x32xf32>
    %279 = arith.divf %277, %278 : vector<4x32xf32>
    %280 = arith.mulf %273, %267 : vector<4x32xf32>
    %281 = arith.addf %261, %280 : vector<4x32xf32>
    %282 = math.tanh %281 : vector<4x32xf32>
    %cst_170 = arith.constant 1.000000e+00 : f32
    %283 = vector.broadcast %cst_170 : f32 to vector<4x32xf32>
    %284 = arith.subf %283, %279 : vector<4x32xf32>
    %285 = arith.mulf %284, %282 : vector<4x32xf32>
    %286 = arith.mulf %279, %209 : vector<4x32xf32>
    %287 = arith.addf %285, %286 : vector<4x32xf32>
    %288 = vector.broadcast %c2_i32 : i32 to vector<4x1xi32>
    %289 = arith.cmpi sgt, %85, %288 : vector<4x1xi32>
    %290 = vector.shape_cast %289 : vector<4x1xi1> to vector<4x1xi1>
    %291 = vector.broadcast %290 : vector<4x1xi1> to vector<4x32xi1>
    %292 = arith.select %291, %287, %209 : vector<4x32xi1>, vector<4x32xf32>
    %293 = arith.index_cast %255 : i32 to index
    %c0_171 = arith.constant 0 : index
    %294 = vector.load %arg11[%293, %c0_171] : memref<32x32xf32, #tpu.memory_space<vmem>>, vector<4x32xf32>
    %295 = arith.index_cast %255 : i32 to index
    %c0_172 = arith.constant 0 : index
    %296 = vector.load %arg12[%295, %c0_172] : memref<32x32xf32, #tpu.memory_space<vmem>>, vector<4x32xf32>
    %297 = arith.index_cast %255 : i32 to index
    %c0_173 = arith.constant 0 : index
    %298 = vector.load %arg13[%297, %c0_173] : memref<32x32xf32, #tpu.memory_space<vmem>>, vector<4x32xf32>
    %cst_174 = arith.constant dense<0.000000e+00> : vector<4x32xf32>
    %299 = tpu.matmul %252, %56, %cst_174 {dimension_numbers = #tpu.dot_dimension_numbers<[1], [0], [0], [1], [0, 0, 1, 1], [], []>} : vector<4x32xf32>, vector<32x32xf32>, vector<4x32xf32> -> vector<4x32xf32>
    %300 = arith.addf %299, %76 : vector<4x32xf32>
    %cst_175 = arith.constant dense<0.000000e+00> : vector<4x32xf32>
    %301 = tpu.matmul %252, %58, %cst_175 {dimension_numbers = #tpu.dot_dimension_numbers<[1], [0], [0], [1], [0, 0, 1, 1], [], []>} : vector<4x32xf32>, vector<32x32xf32>, vector<4x32xf32> -> vector<4x32xf32>
    %302 = arith.addf %301, %80 : vector<4x32xf32>
    %cst_176 = arith.constant dense<0.000000e+00> : vector<4x32xf32>
    %303 = tpu.matmul %252, %60, %cst_176 {dimension_numbers = #tpu.dot_dimension_numbers<[1], [0], [0], [1], [0, 0, 1, 1], [], []>} : vector<4x32xf32>, vector<32x32xf32>, vector<4x32xf32> -> vector<4x32xf32>
    %304 = arith.addf %303, %84 : vector<4x32xf32>
    %305 = arith.addf %294, %300 : vector<4x32xf32>
    %306 = arith.negf %305 : vector<4x32xf32>
    %307 = math.exp %306 : vector<4x32xf32>
    %cst_177 = arith.constant 1.000000e+00 : f32
    %308 = vector.broadcast %cst_177 : f32 to vector<4x32xf32>
    %309 = arith.addf %308, %307 : vector<4x32xf32>
    %310 = arith.divf %308, %309 : vector<4x32xf32>
    %311 = arith.addf %296, %302 : vector<4x32xf32>
    %312 = arith.negf %311 : vector<4x32xf32>
    %313 = math.exp %312 : vector<4x32xf32>
    %cst_178 = arith.constant 1.000000e+00 : f32
    %314 = vector.broadcast %cst_178 : f32 to vector<4x32xf32>
    %315 = arith.addf %314, %313 : vector<4x32xf32>
    %316 = arith.divf %314, %315 : vector<4x32xf32>
    %317 = arith.mulf %310, %304 : vector<4x32xf32>
    %318 = arith.addf %298, %317 : vector<4x32xf32>
    %319 = math.tanh %318 : vector<4x32xf32>
    %cst_179 = arith.constant 1.000000e+00 : f32
    %320 = vector.broadcast %cst_179 : f32 to vector<4x32xf32>
    %321 = arith.subf %320, %316 : vector<4x32xf32>
    %322 = arith.mulf %321, %319 : vector<4x32xf32>
    %323 = arith.mulf %316, %252 : vector<4x32xf32>
    %324 = arith.addf %322, %323 : vector<4x32xf32>
    %325 = vector.broadcast %253 : i32 to vector<4x1xi32>
    %326 = arith.cmpi sgt, %85, %325 : vector<4x1xi32>
    %cst_180 = arith.constant 0.000000e+00 : f32
    %327 = vector.shape_cast %326 : vector<4x1xi1> to vector<4x1xi1>
    %328 = vector.broadcast %327 : vector<4x1xi1> to vector<4x32xi1>
    %329 = vector.broadcast %cst_180 : f32 to vector<4x32xf32>
    %330 = arith.select %328, %324, %329 : vector<4x32xi1>, vector<4x32xf32>
    %331 = arith.index_cast %255 : i32 to index
    %c0_181 = arith.constant 0 : index
    %332 = vector.load %arg6[%331, %c0_181] : memref<32x32xf32, #tpu.memory_space<vmem>>, vector<4x32xf32>
    tpu.vector_store %arg6[%331, %c0_181], %330 {strides = array<i32>} : memref<32x32xf32, #tpu.memory_space<vmem>>, vector<4x32xf32>,
    %333 = vector.shape_cast %326 : vector<4x1xi1> to vector<4x1xi1>
    %334 = vector.broadcast %333 : vector<4x1xi1> to vector<4x32xi1>
    %335 = arith.select %334, %324, %252 : vector<4x32xi1>, vector<4x32xf32>
    %c3_i32 = arith.constant 3 : i32
    %c7_i32_182 = arith.constant 7 : i32
    %336 = arith.subi %c7_i32_182, %c3_i32 : i32
    %c4_i32_183 = arith.constant 4 : i32
    %337 = arith.muli %c3_i32, %c4_i32_183 : i32
    %c4_i32_184 = arith.constant 4 : i32
    %338 = arith.muli %336, %c4_i32_184 : i32
    %339 = arith.index_cast %337 : i32 to index
    %c0_185 = arith.constant 0 : index
    %340 = vector.load %arg8[%339, %c0_185] : memref<32x32xf32, #tpu.memory_space<vmem>>, vector<4x32xf32>
    %341 = arith.index_cast %337 : i32 to index
    %c0_186 = arith.constant 0 : index
    %342 = vector.load %arg9[%341, %c0_186] : memref<32x32xf32, #tpu.memory_space<vmem>>, vector<4x32xf32>
    %343 = arith.index_cast %337 : i32 to index
    %c0_187 = arith.constant 0 : index
    %344 = vector.load %arg10[%343, %c0_187] : memref<32x32xf32, #tpu.memory_space<vmem>>, vector<4x32xf32>
    %cst_188 = arith.constant dense<0.000000e+00> : vector<4x32xf32>
    %345 = tpu.matmul %292, %50, %cst_188 {dimension_numbers = #tpu.dot_dimension_numbers<[1], [0], [0], [1], [0, 0, 1, 1], [], []>} : vector<4x32xf32>, vector<32x32xf32>, vector<4x32xf32> -> vector<4x32xf32>
    %346 = arith.addf %345, %64 : vector<4x32xf32>
    %cst_189 = arith.constant dense<0.000000e+00> : vector<4x32xf32>
    %347 = tpu.matmul %292, %52, %cst_189 {dimension_numbers = #tpu.dot_dimension_numbers<[1], [0], [0], [1], [0, 0, 1, 1], [], []>} : vector<4x32xf32>, vector<32x32xf32>, vector<4x32xf32> -> vector<4x32xf32>
    %348 = arith.addf %347, %68 : vector<4x32xf32>
    %cst_190 = arith.constant dense<0.000000e+00> : vector<4x32xf32>
    %349 = tpu.matmul %292, %54, %cst_190 {dimension_numbers = #tpu.dot_dimension_numbers<[1], [0], [0], [1], [0, 0, 1, 1], [], []>} : vector<4x32xf32>, vector<32x32xf32>, vector<4x32xf32> -> vector<4x32xf32>
    %350 = arith.addf %349, %72 : vector<4x32xf32>
    %351 = arith.addf %340, %346 : vector<4x32xf32>
    %352 = arith.negf %351 : vector<4x32xf32>
    %353 = math.exp %352 : vector<4x32xf32>
    %cst_191 = arith.constant 1.000000e+00 : f32
    %354 = vector.broadcast %cst_191 : f32 to vector<4x32xf32>
    %355 = arith.addf %354, %353 : vector<4x32xf32>
    %356 = arith.divf %354, %355 : vector<4x32xf32>
    %357 = arith.addf %342, %348 : vector<4x32xf32>
    %358 = arith.negf %357 : vector<4x32xf32>
    %359 = math.exp %358 : vector<4x32xf32>
    %cst_192 = arith.constant 1.000000e+00 : f32
    %360 = vector.broadcast %cst_192 : f32 to vector<4x32xf32>
    %361 = arith.addf %360, %359 : vector<4x32xf32>
    %362 = arith.divf %360, %361 : vector<4x32xf32>
    %363 = arith.mulf %356, %350 : vector<4x32xf32>
    %364 = arith.addf %344, %363 : vector<4x32xf32>
    %365 = math.tanh %364 : vector<4x32xf32>
    %cst_193 = arith.constant 1.000000e+00 : f32
    %366 = vector.broadcast %cst_193 : f32 to vector<4x32xf32>
    %367 = arith.subf %366, %362 : vector<4x32xf32>
    %368 = arith.mulf %367, %365 : vector<4x32xf32>
    %369 = arith.mulf %362, %292 : vector<4x32xf32>
    %370 = arith.addf %368, %369 : vector<4x32xf32>
    %371 = vector.broadcast %c3_i32 : i32 to vector<4x1xi32>
    %372 = arith.cmpi sgt, %85, %371 : vector<4x1xi32>
    %373 = vector.shape_cast %372 : vector<4x1xi1> to vector<4x1xi1>
    %374 = vector.broadcast %373 : vector<4x1xi1> to vector<4x32xi1>
    %375 = arith.select %374, %370, %292 : vector<4x32xi1>, vector<4x32xf32>
    %376 = arith.index_cast %338 : i32 to index
    %c0_194 = arith.constant 0 : index
    %377 = vector.load %arg11[%376, %c0_194] : memref<32x32xf32, #tpu.memory_space<vmem>>, vector<4x32xf32>
    %378 = arith.index_cast %338 : i32 to index
    %c0_195 = arith.constant 0 : index
    %379 = vector.load %arg12[%378, %c0_195] : memref<32x32xf32, #tpu.memory_space<vmem>>, vector<4x32xf32>
    %380 = arith.index_cast %338 : i32 to index
    %c0_196 = arith.constant 0 : index
    %381 = vector.load %arg13[%380, %c0_196] : memref<32x32xf32, #tpu.memory_space<vmem>>, vector<4x32xf32>
    %cst_197 = arith.constant dense<0.000000e+00> : vector<4x32xf32>
    %382 = tpu.matmul %335, %56, %cst_197 {dimension_numbers = #tpu.dot_dimension_numbers<[1], [0], [0], [1], [0, 0, 1, 1], [], []>} : vector<4x32xf32>, vector<32x32xf32>, vector<4x32xf32> -> vector<4x32xf32>
    %383 = arith.addf %382, %76 : vector<4x32xf32>
    %cst_198 = arith.constant dense<0.000000e+00> : vector<4x32xf32>
    %384 = tpu.matmul %335, %58, %cst_198 {dimension_numbers = #tpu.dot_dimension_numbers<[1], [0], [0], [1], [0, 0, 1, 1], [], []>} : vector<4x32xf32>, vector<32x32xf32>, vector<4x32xf32> -> vector<4x32xf32>
    %385 = arith.addf %384, %80 : vector<4x32xf32>
    %cst_199 = arith.constant dense<0.000000e+00> : vector<4x32xf32>
    %386 = tpu.matmul %335, %60, %cst_199 {dimension_numbers = #tpu.dot_dimension_numbers<[1], [0], [0], [1], [0, 0, 1, 1], [], []>} : vector<4x32xf32>, vector<32x32xf32>, vector<4x32xf32> -> vector<4x32xf32>
    %387 = arith.addf %386, %84 : vector<4x32xf32>
    %388 = arith.addf %377, %383 : vector<4x32xf32>
    %389 = arith.negf %388 : vector<4x32xf32>
    %390 = math.exp %389 : vector<4x32xf32>
    %cst_200 = arith.constant 1.000000e+00 : f32
    %391 = vector.broadcast %cst_200 : f32 to vector<4x32xf32>
    %392 = arith.addf %391, %390 : vector<4x32xf32>
    %393 = arith.divf %391, %392 : vector<4x32xf32>
    %394 = arith.addf %379, %385 : vector<4x32xf32>
    %395 = arith.negf %394 : vector<4x32xf32>
    %396 = math.exp %395 : vector<4x32xf32>
    %cst_201 = arith.constant 1.000000e+00 : f32
    %397 = vector.broadcast %cst_201 : f32 to vector<4x32xf32>
    %398 = arith.addf %397, %396 : vector<4x32xf32>
    %399 = arith.divf %397, %398 : vector<4x32xf32>
    %400 = arith.mulf %393, %387 : vector<4x32xf32>
    %401 = arith.addf %381, %400 : vector<4x32xf32>
    %402 = math.tanh %401 : vector<4x32xf32>
    %cst_202 = arith.constant 1.000000e+00 : f32
    %403 = vector.broadcast %cst_202 : f32 to vector<4x32xf32>
    %404 = arith.subf %403, %399 : vector<4x32xf32>
    %405 = arith.mulf %404, %402 : vector<4x32xf32>
    %406 = arith.mulf %399, %335 : vector<4x32xf32>
    %407 = arith.addf %405, %406 : vector<4x32xf32>
    %408 = vector.broadcast %336 : i32 to vector<4x1xi32>
    %409 = arith.cmpi sgt, %85, %408 : vector<4x1xi32>
    %cst_203 = arith.constant 0.000000e+00 : f32
    %410 = vector.shape_cast %409 : vector<4x1xi1> to vector<4x1xi1>
    %411 = vector.broadcast %410 : vector<4x1xi1> to vector<4x32xi1>
    %412 = vector.broadcast %cst_203 : f32 to vector<4x32xf32>
    %413 = arith.select %411, %407, %412 : vector<4x32xi1>, vector<4x32xf32>
    %414 = arith.index_cast %338 : i32 to index
    %c0_204 = arith.constant 0 : index
    %415 = vector.load %arg6[%414, %c0_204] : memref<32x32xf32, #tpu.memory_space<vmem>>, vector<4x32xf32>
    tpu.vector_store %arg6[%414, %c0_204], %413 {strides = array<i32>} : memref<32x32xf32, #tpu.memory_space<vmem>>, vector<4x32xf32>,
    %416 = vector.shape_cast %409 : vector<4x1xi1> to vector<4x1xi1>
    %417 = vector.broadcast %416 : vector<4x1xi1> to vector<4x32xi1>
    %418 = arith.select %417, %407, %335 : vector<4x32xi1>, vector<4x32xf32>
    %c4_i32_205 = arith.constant 4 : i32
    %c7_i32_206 = arith.constant 7 : i32
    %419 = arith.subi %c7_i32_206, %c4_i32_205 : i32
    %c4_i32_207 = arith.constant 4 : i32
    %420 = arith.muli %c4_i32_205, %c4_i32_207 : i32
    %c4_i32_208 = arith.constant 4 : i32
    %421 = arith.muli %419, %c4_i32_208 : i32
    %422 = arith.index_cast %420 : i32 to index
    %c0_209 = arith.constant 0 : index
    %423 = vector.load %arg8[%422, %c0_209] : memref<32x32xf32, #tpu.memory_space<vmem>>, vector<4x32xf32>
    %424 = arith.index_cast %420 : i32 to index
    %c0_210 = arith.constant 0 : index
    %425 = vector.load %arg9[%424, %c0_210] : memref<32x32xf32, #tpu.memory_space<vmem>>, vector<4x32xf32>
    %426 = arith.index_cast %420 : i32 to index
    %c0_211 = arith.constant 0 : index
    %427 = vector.load %arg10[%426, %c0_211] : memref<32x32xf32, #tpu.memory_space<vmem>>, vector<4x32xf32>
    %cst_212 = arith.constant dense<0.000000e+00> : vector<4x32xf32>
    %428 = tpu.matmul %375, %50, %cst_212 {dimension_numbers = #tpu.dot_dimension_numbers<[1], [0], [0], [1], [0, 0, 1, 1], [], []>} : vector<4x32xf32>, vector<32x32xf32>, vector<4x32xf32> -> vector<4x32xf32>
    %429 = arith.addf %428, %64 : vector<4x32xf32>
    %cst_213 = arith.constant dense<0.000000e+00> : vector<4x32xf32>
    %430 = tpu.matmul %375, %52, %cst_213 {dimension_numbers = #tpu.dot_dimension_numbers<[1], [0], [0], [1], [0, 0, 1, 1], [], []>} : vector<4x32xf32>, vector<32x32xf32>, vector<4x32xf32> -> vector<4x32xf32>
    %431 = arith.addf %430, %68 : vector<4x32xf32>
    %cst_214 = arith.constant dense<0.000000e+00> : vector<4x32xf32>
    %432 = tpu.matmul %375, %54, %cst_214 {dimension_numbers = #tpu.dot_dimension_numbers<[1], [0], [0], [1], [0, 0, 1, 1], [], []>} : vector<4x32xf32>, vector<32x32xf32>, vector<4x32xf32> -> vector<4x32xf32>
    %433 = arith.addf %432, %72 : vector<4x32xf32>
    %434 = arith.addf %423, %429 : vector<4x32xf32>
    %435 = arith.negf %434 : vector<4x32xf32>
    %436 = math.exp %435 : vector<4x32xf32>
    %cst_215 = arith.constant 1.000000e+00 : f32
    %437 = vector.broadcast %cst_215 : f32 to vector<4x32xf32>
    %438 = arith.addf %437, %436 : vector<4x32xf32>
    %439 = arith.divf %437, %438 : vector<4x32xf32>
    %440 = arith.addf %425, %431 : vector<4x32xf32>
    %441 = arith.negf %440 : vector<4x32xf32>
    %442 = math.exp %441 : vector<4x32xf32>
    %cst_216 = arith.constant 1.000000e+00 : f32
    %443 = vector.broadcast %cst_216 : f32 to vector<4x32xf32>
    %444 = arith.addf %443, %442 : vector<4x32xf32>
    %445 = arith.divf %443, %444 : vector<4x32xf32>
    %446 = arith.mulf %439, %433 : vector<4x32xf32>
    %447 = arith.addf %427, %446 : vector<4x32xf32>
    %448 = math.tanh %447 : vector<4x32xf32>
    %cst_217 = arith.constant 1.000000e+00 : f32
    %449 = vector.broadcast %cst_217 : f32 to vector<4x32xf32>
    %450 = arith.subf %449, %445 : vector<4x32xf32>
    %451 = arith.mulf %450, %448 : vector<4x32xf32>
    %452 = arith.mulf %445, %375 : vector<4x32xf32>
    %453 = arith.addf %451, %452 : vector<4x32xf32>
    %454 = vector.broadcast %c4_i32_205 : i32 to vector<4x1xi32>
    %455 = arith.cmpi sgt, %85, %454 : vector<4x1xi32>
    %456 = vector.shape_cast %455 : vector<4x1xi1> to vector<4x1xi1>
    %457 = vector.broadcast %456 : vector<4x1xi1> to vector<4x32xi1>
    %458 = arith.select %457, %453, %375 : vector<4x32xi1>, vector<4x32xf32>
    %459 = arith.index_cast %421 : i32 to index
    %c0_218 = arith.constant 0 : index
    %460 = vector.load %arg11[%459, %c0_218] : memref<32x32xf32, #tpu.memory_space<vmem>>, vector<4x32xf32>
    %461 = arith.index_cast %421 : i32 to index
    %c0_219 = arith.constant 0 : index
    %462 = vector.load %arg12[%461, %c0_219] : memref<32x32xf32, #tpu.memory_space<vmem>>, vector<4x32xf32>
    %463 = arith.index_cast %421 : i32 to index
    %c0_220 = arith.constant 0 : index
    %464 = vector.load %arg13[%463, %c0_220] : memref<32x32xf32, #tpu.memory_space<vmem>>, vector<4x32xf32>
    %cst_221 = arith.constant dense<0.000000e+00> : vector<4x32xf32>
    %465 = tpu.matmul %418, %56, %cst_221 {dimension_numbers = #tpu.dot_dimension_numbers<[1], [0], [0], [1], [0, 0, 1, 1], [], []>} : vector<4x32xf32>, vector<32x32xf32>, vector<4x32xf32> -> vector<4x32xf32>
    %466 = arith.addf %465, %76 : vector<4x32xf32>
    %cst_222 = arith.constant dense<0.000000e+00> : vector<4x32xf32>
    %467 = tpu.matmul %418, %58, %cst_222 {dimension_numbers = #tpu.dot_dimension_numbers<[1], [0], [0], [1], [0, 0, 1, 1], [], []>} : vector<4x32xf32>, vector<32x32xf32>, vector<4x32xf32> -> vector<4x32xf32>
    %468 = arith.addf %467, %80 : vector<4x32xf32>
    %cst_223 = arith.constant dense<0.000000e+00> : vector<4x32xf32>
    %469 = tpu.matmul %418, %60, %cst_223 {dimension_numbers = #tpu.dot_dimension_numbers<[1], [0], [0], [1], [0, 0, 1, 1], [], []>} : vector<4x32xf32>, vector<32x32xf32>, vector<4x32xf32> -> vector<4x32xf32>
    %470 = arith.addf %469, %84 : vector<4x32xf32>
    %471 = arith.addf %460, %466 : vector<4x32xf32>
    %472 = arith.negf %471 : vector<4x32xf32>
    %473 = math.exp %472 : vector<4x32xf32>
    %cst_224 = arith.constant 1.000000e+00 : f32
    %474 = vector.broadcast %cst_224 : f32 to vector<4x32xf32>
    %475 = arith.addf %474, %473 : vector<4x32xf32>
    %476 = arith.divf %474, %475 : vector<4x32xf32>
    %477 = arith.addf %462, %468 : vector<4x32xf32>
    %478 = arith.negf %477 : vector<4x32xf32>
    %479 = math.exp %478 : vector<4x32xf32>
    %cst_225 = arith.constant 1.000000e+00 : f32
    %480 = vector.broadcast %cst_225 : f32 to vector<4x32xf32>
    %481 = arith.addf %480, %479 : vector<4x32xf32>
    %482 = arith.divf %480, %481 : vector<4x32xf32>
    %483 = arith.mulf %476, %470 : vector<4x32xf32>
    %484 = arith.addf %464, %483 : vector<4x32xf32>
    %485 = math.tanh %484 : vector<4x32xf32>
    %cst_226 = arith.constant 1.000000e+00 : f32
    %486 = vector.broadcast %cst_226 : f32 to vector<4x32xf32>
    %487 = arith.subf %486, %482 : vector<4x32xf32>
    %488 = arith.mulf %487, %485 : vector<4x32xf32>
    %489 = arith.mulf %482, %418 : vector<4x32xf32>
    %490 = arith.addf %488, %489 : vector<4x32xf32>
    %491 = vector.broadcast %419 : i32 to vector<4x1xi32>
    %492 = arith.cmpi sgt, %85, %491 : vector<4x1xi32>
    %cst_227 = arith.constant 0.000000e+00 : f32
    %493 = vector.shape_cast %492 : vector<4x1xi1> to vector<4x1xi1>
    %494 = vector.broadcast %493 : vector<4x1xi1> to vector<4x32xi1>
    %495 = vector.broadcast %cst_227 : f32 to vector<4x32xf32>
    %496 = arith.select %494, %490, %495 : vector<4x32xi1>, vector<4x32xf32>
    %497 = arith.index_cast %421 : i32 to index
    %c0_228 = arith.constant 0 : index
    %498 = vector.load %arg6[%497, %c0_228] : memref<32x32xf32, #tpu.memory_space<vmem>>, vector<4x32xf32>
    tpu.vector_store %arg6[%497, %c0_228], %496 {strides = array<i32>} : memref<32x32xf32, #tpu.memory_space<vmem>>, vector<4x32xf32>,
    %499 = vector.shape_cast %492 : vector<4x1xi1> to vector<4x1xi1>
    %500 = vector.broadcast %499 : vector<4x1xi1> to vector<4x32xi1>
    %501 = arith.select %500, %490, %418 : vector<4x32xi1>, vector<4x32xf32>
    %c5_i32 = arith.constant 5 : i32
    %c7_i32_229 = arith.constant 7 : i32
    %502 = arith.subi %c7_i32_229, %c5_i32 : i32
    %c4_i32_230 = arith.constant 4 : i32
    %503 = arith.muli %c5_i32, %c4_i32_230 : i32
    %c4_i32_231 = arith.constant 4 : i32
    %504 = arith.muli %502, %c4_i32_231 : i32
    %505 = arith.index_cast %503 : i32 to index
    %c0_232 = arith.constant 0 : index
    %506 = vector.load %arg8[%505, %c0_232] : memref<32x32xf32, #tpu.memory_space<vmem>>, vector<4x32xf32>
    %507 = arith.index_cast %503 : i32 to index
    %c0_233 = arith.constant 0 : index
    %508 = vector.load %arg9[%507, %c0_233] : memref<32x32xf32, #tpu.memory_space<vmem>>, vector<4x32xf32>
    %509 = arith.index_cast %503 : i32 to index
    %c0_234 = arith.constant 0 : index
    %510 = vector.load %arg10[%509, %c0_234] : memref<32x32xf32, #tpu.memory_space<vmem>>, vector<4x32xf32>
    %cst_235 = arith.constant dense<0.000000e+00> : vector<4x32xf32>
    %511 = tpu.matmul %458, %50, %cst_235 {dimension_numbers = #tpu.dot_dimension_numbers<[1], [0], [0], [1], [0, 0, 1, 1], [], []>} : vector<4x32xf32>, vector<32x32xf32>, vector<4x32xf32> -> vector<4x32xf32>
    %512 = arith.addf %511, %64 : vector<4x32xf32>
    %cst_236 = arith.constant dense<0.000000e+00> : vector<4x32xf32>
    %513 = tpu.matmul %458, %52, %cst_236 {dimension_numbers = #tpu.dot_dimension_numbers<[1], [0], [0], [1], [0, 0, 1, 1], [], []>} : vector<4x32xf32>, vector<32x32xf32>, vector<4x32xf32> -> vector<4x32xf32>
    %514 = arith.addf %513, %68 : vector<4x32xf32>
    %cst_237 = arith.constant dense<0.000000e+00> : vector<4x32xf32>
    %515 = tpu.matmul %458, %54, %cst_237 {dimension_numbers = #tpu.dot_dimension_numbers<[1], [0], [0], [1], [0, 0, 1, 1], [], []>} : vector<4x32xf32>, vector<32x32xf32>, vector<4x32xf32> -> vector<4x32xf32>
    %516 = arith.addf %515, %72 : vector<4x32xf32>
    %517 = arith.addf %506, %512 : vector<4x32xf32>
    %518 = arith.negf %517 : vector<4x32xf32>
    %519 = math.exp %518 : vector<4x32xf32>
    %cst_238 = arith.constant 1.000000e+00 : f32
    %520 = vector.broadcast %cst_238 : f32 to vector<4x32xf32>
    %521 = arith.addf %520, %519 : vector<4x32xf32>
    %522 = arith.divf %520, %521 : vector<4x32xf32>
    %523 = arith.addf %508, %514 : vector<4x32xf32>
    %524 = arith.negf %523 : vector<4x32xf32>
    %525 = math.exp %524 : vector<4x32xf32>
    %cst_239 = arith.constant 1.000000e+00 : f32
    %526 = vector.broadcast %cst_239 : f32 to vector<4x32xf32>
    %527 = arith.addf %526, %525 : vector<4x32xf32>
    %528 = arith.divf %526, %527 : vector<4x32xf32>
    %529 = arith.mulf %522, %516 : vector<4x32xf32>
    %530 = arith.addf %510, %529 : vector<4x32xf32>
    %531 = math.tanh %530 : vector<4x32xf32>
    %cst_240 = arith.constant 1.000000e+00 : f32
    %532 = vector.broadcast %cst_240 : f32 to vector<4x32xf32>
    %533 = arith.subf %532, %528 : vector<4x32xf32>
    %534 = arith.mulf %533, %531 : vector<4x32xf32>
    %535 = arith.mulf %528, %458 : vector<4x32xf32>
    %536 = arith.addf %534, %535 : vector<4x32xf32>
    %537 = vector.broadcast %c5_i32 : i32 to vector<4x1xi32>
    %538 = arith.cmpi sgt, %85, %537 : vector<4x1xi32>
    %539 = vector.shape_cast %538 : vector<4x1xi1> to vector<4x1xi1>
    %540 = vector.broadcast %539 : vector<4x1xi1> to vector<4x32xi1>
    %541 = arith.select %540, %536, %458 : vector<4x32xi1>, vector<4x32xf32>
    %542 = arith.index_cast %504 : i32 to index
    %c0_241 = arith.constant 0 : index
    %543 = vector.load %arg11[%542, %c0_241] : memref<32x32xf32, #tpu.memory_space<vmem>>, vector<4x32xf32>
    %544 = arith.index_cast %504 : i32 to index
    %c0_242 = arith.constant 0 : index
    %545 = vector.load %arg12[%544, %c0_242] : memref<32x32xf32, #tpu.memory_space<vmem>>, vector<4x32xf32>
    %546 = arith.index_cast %504 : i32 to index
    %c0_243 = arith.constant 0 : index
    %547 = vector.load %arg13[%546, %c0_243] : memref<32x32xf32, #tpu.memory_space<vmem>>, vector<4x32xf32>
    %cst_244 = arith.constant dense<0.000000e+00> : vector<4x32xf32>
    %548 = tpu.matmul %501, %56, %cst_244 {dimension_numbers = #tpu.dot_dimension_numbers<[1], [0], [0], [1], [0, 0, 1, 1], [], []>} : vector<4x32xf32>, vector<32x32xf32>, vector<4x32xf32> -> vector<4x32xf32>
    %549 = arith.addf %548, %76 : vector<4x32xf32>
    %cst_245 = arith.constant dense<0.000000e+00> : vector<4x32xf32>
    %550 = tpu.matmul %501, %58, %cst_245 {dimension_numbers = #tpu.dot_dimension_numbers<[1], [0], [0], [1], [0, 0, 1, 1], [], []>} : vector<4x32xf32>, vector<32x32xf32>, vector<4x32xf32> -> vector<4x32xf32>
    %551 = arith.addf %550, %80 : vector<4x32xf32>
    %cst_246 = arith.constant dense<0.000000e+00> : vector<4x32xf32>
    %552 = tpu.matmul %501, %60, %cst_246 {dimension_numbers = #tpu.dot_dimension_numbers<[1], [0], [0], [1], [0, 0, 1, 1], [], []>} : vector<4x32xf32>, vector<32x32xf32>, vector<4x32xf32> -> vector<4x32xf32>
    %553 = arith.addf %552, %84 : vector<4x32xf32>
    %554 = arith.addf %543, %549 : vector<4x32xf32>
    %555 = arith.negf %554 : vector<4x32xf32>
    %556 = math.exp %555 : vector<4x32xf32>
    %cst_247 = arith.constant 1.000000e+00 : f32
    %557 = vector.broadcast %cst_247 : f32 to vector<4x32xf32>
    %558 = arith.addf %557, %556 : vector<4x32xf32>
    %559 = arith.divf %557, %558 : vector<4x32xf32>
    %560 = arith.addf %545, %551 : vector<4x32xf32>
    %561 = arith.negf %560 : vector<4x32xf32>
    %562 = math.exp %561 : vector<4x32xf32>
    %cst_248 = arith.constant 1.000000e+00 : f32
    %563 = vector.broadcast %cst_248 : f32 to vector<4x32xf32>
    %564 = arith.addf %563, %562 : vector<4x32xf32>
    %565 = arith.divf %563, %564 : vector<4x32xf32>
    %566 = arith.mulf %559, %553 : vector<4x32xf32>
    %567 = arith.addf %547, %566 : vector<4x32xf32>
    %568 = math.tanh %567 : vector<4x32xf32>
    %cst_249 = arith.constant 1.000000e+00 : f32
    %569 = vector.broadcast %cst_249 : f32 to vector<4x32xf32>
    %570 = arith.subf %569, %565 : vector<4x32xf32>
    %571 = arith.mulf %570, %568 : vector<4x32xf32>
    %572 = arith.mulf %565, %501 : vector<4x32xf32>
    %573 = arith.addf %571, %572 : vector<4x32xf32>
    %574 = vector.broadcast %502 : i32 to vector<4x1xi32>
    %575 = arith.cmpi sgt, %85, %574 : vector<4x1xi32>
    %cst_250 = arith.constant 0.000000e+00 : f32
    %576 = vector.shape_cast %575 : vector<4x1xi1> to vector<4x1xi1>
    %577 = vector.broadcast %576 : vector<4x1xi1> to vector<4x32xi1>
    %578 = vector.broadcast %cst_250 : f32 to vector<4x32xf32>
    %579 = arith.select %577, %573, %578 : vector<4x32xi1>, vector<4x32xf32>
    %580 = arith.index_cast %504 : i32 to index
    %c0_251 = arith.constant 0 : index
    %581 = vector.load %arg6[%580, %c0_251] : memref<32x32xf32, #tpu.memory_space<vmem>>, vector<4x32xf32>
    tpu.vector_store %arg6[%580, %c0_251], %579 {strides = array<i32>} : memref<32x32xf32, #tpu.memory_space<vmem>>, vector<4x32xf32>,
    %582 = vector.shape_cast %575 : vector<4x1xi1> to vector<4x1xi1>
    %583 = vector.broadcast %582 : vector<4x1xi1> to vector<4x32xi1>
    %584 = arith.select %583, %573, %501 : vector<4x32xi1>, vector<4x32xf32>
    %c6_i32 = arith.constant 6 : i32
    %c7_i32_252 = arith.constant 7 : i32
    %585 = arith.subi %c7_i32_252, %c6_i32 : i32
    %c4_i32_253 = arith.constant 4 : i32
    %586 = arith.muli %c6_i32, %c4_i32_253 : i32
    %c4_i32_254 = arith.constant 4 : i32
    %587 = arith.muli %585, %c4_i32_254 : i32
    %588 = arith.index_cast %586 : i32 to index
    %c0_255 = arith.constant 0 : index
    %589 = vector.load %arg8[%588, %c0_255] : memref<32x32xf32, #tpu.memory_space<vmem>>, vector<4x32xf32>
    %590 = arith.index_cast %586 : i32 to index
    %c0_256 = arith.constant 0 : index
    %591 = vector.load %arg9[%590, %c0_256] : memref<32x32xf32, #tpu.memory_space<vmem>>, vector<4x32xf32>
    %592 = arith.index_cast %586 : i32 to index
    %c0_257 = arith.constant 0 : index
    %593 = vector.load %arg10[%592, %c0_257] : memref<32x32xf32, #tpu.memory_space<vmem>>, vector<4x32xf32>
    %cst_258 = arith.constant dense<0.000000e+00> : vector<4x32xf32>
    %594 = tpu.matmul %541, %50, %cst_258 {dimension_numbers = #tpu.dot_dimension_numbers<[1], [0], [0], [1], [0, 0, 1, 1], [], []>} : vector<4x32xf32>, vector<32x32xf32>, vector<4x32xf32> -> vector<4x32xf32>
    %595 = arith.addf %594, %64 : vector<4x32xf32>
    %cst_259 = arith.constant dense<0.000000e+00> : vector<4x32xf32>
    %596 = tpu.matmul %541, %52, %cst_259 {dimension_numbers = #tpu.dot_dimension_numbers<[1], [0], [0], [1], [0, 0, 1, 1], [], []>} : vector<4x32xf32>, vector<32x32xf32>, vector<4x32xf32> -> vector<4x32xf32>
    %597 = arith.addf %596, %68 : vector<4x32xf32>
    %cst_260 = arith.constant dense<0.000000e+00> : vector<4x32xf32>
    %598 = tpu.matmul %541, %54, %cst_260 {dimension_numbers = #tpu.dot_dimension_numbers<[1], [0], [0], [1], [0, 0, 1, 1], [], []>} : vector<4x32xf32>, vector<32x32xf32>, vector<4x32xf32> -> vector<4x32xf32>
    %599 = arith.addf %598, %72 : vector<4x32xf32>
    %600 = arith.addf %589, %595 : vector<4x32xf32>
    %601 = arith.negf %600 : vector<4x32xf32>
    %602 = math.exp %601 : vector<4x32xf32>
    %cst_261 = arith.constant 1.000000e+00 : f32
    %603 = vector.broadcast %cst_261 : f32 to vector<4x32xf32>
    %604 = arith.addf %603, %602 : vector<4x32xf32>
    %605 = arith.divf %603, %604 : vector<4x32xf32>
    %606 = arith.addf %591, %597 : vector<4x32xf32>
    %607 = arith.negf %606 : vector<4x32xf32>
    %608 = math.exp %607 : vector<4x32xf32>
    %cst_262 = arith.constant 1.000000e+00 : f32
    %609 = vector.broadcast %cst_262 : f32 to vector<4x32xf32>
    %610 = arith.addf %609, %608 : vector<4x32xf32>
    %611 = arith.divf %609, %610 : vector<4x32xf32>
    %612 = arith.mulf %605, %599 : vector<4x32xf32>
    %613 = arith.addf %593, %612 : vector<4x32xf32>
    %614 = math.tanh %613 : vector<4x32xf32>
    %cst_263 = arith.constant 1.000000e+00 : f32
    %615 = vector.broadcast %cst_263 : f32 to vector<4x32xf32>
    %616 = arith.subf %615, %611 : vector<4x32xf32>
    %617 = arith.mulf %616, %614 : vector<4x32xf32>
    %618 = arith.mulf %611, %541 : vector<4x32xf32>
    %619 = arith.addf %617, %618 : vector<4x32xf32>
    %620 = vector.broadcast %c6_i32 : i32 to vector<4x1xi32>
    %621 = arith.cmpi sgt, %85, %620 : vector<4x1xi32>
    %622 = vector.shape_cast %621 : vector<4x1xi1> to vector<4x1xi1>
    %623 = vector.broadcast %622 : vector<4x1xi1> to vector<4x32xi1>
    %624 = arith.select %623, %619, %541 : vector<4x32xi1>, vector<4x32xf32>
    %625 = arith.index_cast %587 : i32 to index
    %c0_264 = arith.constant 0 : index
    %626 = vector.load %arg11[%625, %c0_264] : memref<32x32xf32, #tpu.memory_space<vmem>>, vector<4x32xf32>
    %627 = arith.index_cast %587 : i32 to index
    %c0_265 = arith.constant 0 : index
    %628 = vector.load %arg12[%627, %c0_265] : memref<32x32xf32, #tpu.memory_space<vmem>>, vector<4x32xf32>
    %629 = arith.index_cast %587 : i32 to index
    %c0_266 = arith.constant 0 : index
    %630 = vector.load %arg13[%629, %c0_266] : memref<32x32xf32, #tpu.memory_space<vmem>>, vector<4x32xf32>
    %cst_267 = arith.constant dense<0.000000e+00> : vector<4x32xf32>
    %631 = tpu.matmul %584, %56, %cst_267 {dimension_numbers = #tpu.dot_dimension_numbers<[1], [0], [0], [1], [0, 0, 1, 1], [], []>} : vector<4x32xf32>, vector<32x32xf32>, vector<4x32xf32> -> vector<4x32xf32>
    %632 = arith.addf %631, %76 : vector<4x32xf32>
    %cst_268 = arith.constant dense<0.000000e+00> : vector<4x32xf32>
    %633 = tpu.matmul %584, %58, %cst_268 {dimension_numbers = #tpu.dot_dimension_numbers<[1], [0], [0], [1], [0, 0, 1, 1], [], []>} : vector<4x32xf32>, vector<32x32xf32>, vector<4x32xf32> -> vector<4x32xf32>
    %634 = arith.addf %633, %80 : vector<4x32xf32>
    %cst_269 = arith.constant dense<0.000000e+00> : vector<4x32xf32>
    %635 = tpu.matmul %584, %60, %cst_269 {dimension_numbers = #tpu.dot_dimension_numbers<[1], [0], [0], [1], [0, 0, 1, 1], [], []>} : vector<4x32xf32>, vector<32x32xf32>, vector<4x32xf32> -> vector<4x32xf32>
    %636 = arith.addf %635, %84 : vector<4x32xf32>
    %637 = arith.addf %626, %632 : vector<4x32xf32>
    %638 = arith.negf %637 : vector<4x32xf32>
    %639 = math.exp %638 : vector<4x32xf32>
    %cst_270 = arith.constant 1.000000e+00 : f32
    %640 = vector.broadcast %cst_270 : f32 to vector<4x32xf32>
    %641 = arith.addf %640, %639 : vector<4x32xf32>
    %642 = arith.divf %640, %641 : vector<4x32xf32>
    %643 = arith.addf %628, %634 : vector<4x32xf32>
    %644 = arith.negf %643 : vector<4x32xf32>
    %645 = math.exp %644 : vector<4x32xf32>
    %cst_271 = arith.constant 1.000000e+00 : f32
    %646 = vector.broadcast %cst_271 : f32 to vector<4x32xf32>
    %647 = arith.addf %646, %645 : vector<4x32xf32>
    %648 = arith.divf %646, %647 : vector<4x32xf32>
    %649 = arith.mulf %642, %636 : vector<4x32xf32>
    %650 = arith.addf %630, %649 : vector<4x32xf32>
    %651 = math.tanh %650 : vector<4x32xf32>
    %cst_272 = arith.constant 1.000000e+00 : f32
    %652 = vector.broadcast %cst_272 : f32 to vector<4x32xf32>
    %653 = arith.subf %652, %648 : vector<4x32xf32>
    %654 = arith.mulf %653, %651 : vector<4x32xf32>
    %655 = arith.mulf %648, %584 : vector<4x32xf32>
    %656 = arith.addf %654, %655 : vector<4x32xf32>
    %657 = vector.broadcast %585 : i32 to vector<4x1xi32>
    %658 = arith.cmpi sgt, %85, %657 : vector<4x1xi32>
    %cst_273 = arith.constant 0.000000e+00 : f32
    %659 = vector.shape_cast %658 : vector<4x1xi1> to vector<4x1xi1>
    %660 = vector.broadcast %659 : vector<4x1xi1> to vector<4x32xi1>
    %661 = vector.broadcast %cst_273 : f32 to vector<4x32xf32>
    %662 = arith.select %660, %656, %661 : vector<4x32xi1>, vector<4x32xf32>
    %663 = arith.index_cast %587 : i32 to index
    %c0_274 = arith.constant 0 : index
    %664 = vector.load %arg6[%663, %c0_274] : memref<32x32xf32, #tpu.memory_space<vmem>>, vector<4x32xf32>
    tpu.vector_store %arg6[%663, %c0_274], %662 {strides = array<i32>} : memref<32x32xf32, #tpu.memory_space<vmem>>, vector<4x32xf32>,
    %665 = vector.shape_cast %658 : vector<4x1xi1> to vector<4x1xi1>
    %666 = vector.broadcast %665 : vector<4x1xi1> to vector<4x32xi1>
    %667 = arith.select %666, %656, %584 : vector<4x32xi1>, vector<4x32xf32>
    %c7_i32_275 = arith.constant 7 : i32
    %c7_i32_276 = arith.constant 7 : i32
    %668 = arith.subi %c7_i32_276, %c7_i32_275 : i32
    %c4_i32_277 = arith.constant 4 : i32
    %669 = arith.muli %c7_i32_275, %c4_i32_277 : i32
    %c4_i32_278 = arith.constant 4 : i32
    %670 = arith.muli %668, %c4_i32_278 : i32
    %671 = arith.index_cast %669 : i32 to index
    %c0_279 = arith.constant 0 : index
    %672 = vector.load %arg8[%671, %c0_279] : memref<32x32xf32, #tpu.memory_space<vmem>>, vector<4x32xf32>
    %673 = arith.index_cast %669 : i32 to index
    %c0_280 = arith.constant 0 : index
    %674 = vector.load %arg9[%673, %c0_280] : memref<32x32xf32, #tpu.memory_space<vmem>>, vector<4x32xf32>
    %675 = arith.index_cast %669 : i32 to index
    %c0_281 = arith.constant 0 : index
    %676 = vector.load %arg10[%675, %c0_281] : memref<32x32xf32, #tpu.memory_space<vmem>>, vector<4x32xf32>
    %cst_282 = arith.constant dense<0.000000e+00> : vector<4x32xf32>
    %677 = tpu.matmul %624, %50, %cst_282 {dimension_numbers = #tpu.dot_dimension_numbers<[1], [0], [0], [1], [0, 0, 1, 1], [], []>} : vector<4x32xf32>, vector<32x32xf32>, vector<4x32xf32> -> vector<4x32xf32>
    %678 = arith.addf %677, %64 : vector<4x32xf32>
    %cst_283 = arith.constant dense<0.000000e+00> : vector<4x32xf32>
    %679 = tpu.matmul %624, %52, %cst_283 {dimension_numbers = #tpu.dot_dimension_numbers<[1], [0], [0], [1], [0, 0, 1, 1], [], []>} : vector<4x32xf32>, vector<32x32xf32>, vector<4x32xf32> -> vector<4x32xf32>
    %680 = arith.addf %679, %68 : vector<4x32xf32>
    %cst_284 = arith.constant dense<0.000000e+00> : vector<4x32xf32>
    %681 = tpu.matmul %624, %54, %cst_284 {dimension_numbers = #tpu.dot_dimension_numbers<[1], [0], [0], [1], [0, 0, 1, 1], [], []>} : vector<4x32xf32>, vector<32x32xf32>, vector<4x32xf32> -> vector<4x32xf32>
    %682 = arith.addf %681, %72 : vector<4x32xf32>
    %683 = arith.addf %672, %678 : vector<4x32xf32>
    %684 = arith.negf %683 : vector<4x32xf32>
    %685 = math.exp %684 : vector<4x32xf32>
    %cst_285 = arith.constant 1.000000e+00 : f32
    %686 = vector.broadcast %cst_285 : f32 to vector<4x32xf32>
    %687 = arith.addf %686, %685 : vector<4x32xf32>
    %688 = arith.divf %686, %687 : vector<4x32xf32>
    %689 = arith.addf %674, %680 : vector<4x32xf32>
    %690 = arith.negf %689 : vector<4x32xf32>
    %691 = math.exp %690 : vector<4x32xf32>
    %cst_286 = arith.constant 1.000000e+00 : f32
    %692 = vector.broadcast %cst_286 : f32 to vector<4x32xf32>
    %693 = arith.addf %692, %691 : vector<4x32xf32>
    %694 = arith.divf %692, %693 : vector<4x32xf32>
    %695 = arith.mulf %688, %682 : vector<4x32xf32>
    %696 = arith.addf %676, %695 : vector<4x32xf32>
    %697 = math.tanh %696 : vector<4x32xf32>
    %cst_287 = arith.constant 1.000000e+00 : f32
    %698 = vector.broadcast %cst_287 : f32 to vector<4x32xf32>
    %699 = arith.subf %698, %694 : vector<4x32xf32>
    %700 = arith.mulf %699, %697 : vector<4x32xf32>
    %701 = arith.mulf %694, %624 : vector<4x32xf32>
    %702 = arith.addf %700, %701 : vector<4x32xf32>
    %703 = vector.broadcast %c7_i32_275 : i32 to vector<4x1xi32>
    %704 = arith.cmpi sgt, %85, %703 : vector<4x1xi32>
    %705 = vector.shape_cast %704 : vector<4x1xi1> to vector<4x1xi1>
    %706 = vector.broadcast %705 : vector<4x1xi1> to vector<4x32xi1>
    %707 = arith.select %706, %702, %624 : vector<4x32xi1>, vector<4x32xf32>
    %708 = arith.index_cast %670 : i32 to index
    %c0_288 = arith.constant 0 : index
    %709 = vector.load %arg11[%708, %c0_288] : memref<32x32xf32, #tpu.memory_space<vmem>>, vector<4x32xf32>
    %710 = arith.index_cast %670 : i32 to index
    %c0_289 = arith.constant 0 : index
    %711 = vector.load %arg12[%710, %c0_289] : memref<32x32xf32, #tpu.memory_space<vmem>>, vector<4x32xf32>
    %712 = arith.index_cast %670 : i32 to index
    %c0_290 = arith.constant 0 : index
    %713 = vector.load %arg13[%712, %c0_290] : memref<32x32xf32, #tpu.memory_space<vmem>>, vector<4x32xf32>
    %cst_291 = arith.constant dense<0.000000e+00> : vector<4x32xf32>
    %714 = tpu.matmul %667, %56, %cst_291 {dimension_numbers = #tpu.dot_dimension_numbers<[1], [0], [0], [1], [0, 0, 1, 1], [], []>} : vector<4x32xf32>, vector<32x32xf32>, vector<4x32xf32> -> vector<4x32xf32>
    %715 = arith.addf %714, %76 : vector<4x32xf32>
    %cst_292 = arith.constant dense<0.000000e+00> : vector<4x32xf32>
    %716 = tpu.matmul %667, %58, %cst_292 {dimension_numbers = #tpu.dot_dimension_numbers<[1], [0], [0], [1], [0, 0, 1, 1], [], []>} : vector<4x32xf32>, vector<32x32xf32>, vector<4x32xf32> -> vector<4x32xf32>
    %717 = arith.addf %716, %80 : vector<4x32xf32>
    %cst_293 = arith.constant dense<0.000000e+00> : vector<4x32xf32>
    %718 = tpu.matmul %667, %60, %cst_293 {dimension_numbers = #tpu.dot_dimension_numbers<[1], [0], [0], [1], [0, 0, 1, 1], [], []>} : vector<4x32xf32>, vector<32x32xf32>, vector<4x32xf32> -> vector<4x32xf32>
    %719 = arith.addf %718, %84 : vector<4x32xf32>
    %720 = arith.addf %709, %715 : vector<4x32xf32>
    %721 = arith.negf %720 : vector<4x32xf32>
    %722 = math.exp %721 : vector<4x32xf32>
    %cst_294 = arith.constant 1.000000e+00 : f32
    %723 = vector.broadcast %cst_294 : f32 to vector<4x32xf32>
    %724 = arith.addf %723, %722 : vector<4x32xf32>
    %725 = arith.divf %723, %724 : vector<4x32xf32>
    %726 = arith.addf %711, %717 : vector<4x32xf32>
    %727 = arith.negf %726 : vector<4x32xf32>
    %728 = math.exp %727 : vector<4x32xf32>
    %cst_295 = arith.constant 1.000000e+00 : f32
    %729 = vector.broadcast %cst_295 : f32 to vector<4x32xf32>
    %730 = arith.addf %729, %728 : vector<4x32xf32>
    %731 = arith.divf %729, %730 : vector<4x32xf32>
    %732 = arith.mulf %725, %719 : vector<4x32xf32>
    %733 = arith.addf %713, %732 : vector<4x32xf32>
    %734 = math.tanh %733 : vector<4x32xf32>
    %cst_296 = arith.constant 1.000000e+00 : f32
    %735 = vector.broadcast %cst_296 : f32 to vector<4x32xf32>
    %736 = arith.subf %735, %731 : vector<4x32xf32>
    %737 = arith.mulf %736, %734 : vector<4x32xf32>
    %738 = arith.mulf %731, %667 : vector<4x32xf32>
    %739 = arith.addf %737, %738 : vector<4x32xf32>
    %740 = vector.broadcast %668 : i32 to vector<4x1xi32>
    %741 = arith.cmpi sgt, %85, %740 : vector<4x1xi32>
    %cst_297 = arith.constant 0.000000e+00 : f32
    %742 = vector.shape_cast %741 : vector<4x1xi1> to vector<4x1xi1>
    %743 = vector.broadcast %742 : vector<4x1xi1> to vector<4x32xi1>
    %744 = vector.broadcast %cst_297 : f32 to vector<4x32xf32>
    %745 = arith.select %743, %739, %744 : vector<4x32xi1>, vector<4x32xf32>
    %746 = arith.index_cast %670 : i32 to index
    %c0_298 = arith.constant 0 : index
    %747 = vector.load %arg6[%746, %c0_298] : memref<32x32xf32, #tpu.memory_space<vmem>>, vector<4x32xf32>
    tpu.vector_store %arg6[%746, %c0_298], %745 {strides = array<i32>} : memref<32x32xf32, #tpu.memory_space<vmem>>, vector<4x32xf32>,
    %748 = vector.shape_cast %741 : vector<4x1xi1> to vector<4x1xi1>
    %749 = vector.broadcast %748 : vector<4x1xi1> to vector<4x32xi1>
    %750 = arith.select %749, %739, %667 : vector<4x32xi1>, vector<4x32xf32>
    %c8_i32 = arith.constant 8 : i32
    %c0_299 = arith.constant 0 : index
    %c0_300 = arith.constant 0 : index
    %c0_301 = arith.constant 0 : index
    %751 = vector.load %arg7[%c0_299, %c0_300, %c0_301] : memref<2x4x32xf32, #tpu.memory_space<vmem>>, vector<1x4x32xf32>
    %752 = vector.shape_cast %751 : vector<1x4x32xf32> to vector<4x32xf32>
    %753 = vector.shape_cast %707 : vector<4x32xf32> to vector<1x4x32xf32>
    tpu.vector_store %arg7[%c0_299, %c0_300, %c0_301], %753 {strides = array<i32>} : memref<2x4x32xf32, #tpu.memory_space<vmem>>, vector<1x4x32xf32>,
    %c1_302 = arith.constant 1 : index
    %c0_303 = arith.constant 0 : index
    %c0_304 = arith.constant 0 : index
    %754 = vector.load %arg7[%c1_302, %c0_303, %c0_304] : memref<2x4x32xf32, #tpu.memory_space<vmem>>, vector<1x4x32xf32>
    %755 = vector.shape_cast %754 : vector<1x4x32xf32> to vector<4x32xf32>
    %756 = vector.shape_cast %750 : vector<4x32xf32> to vector<1x4x32xf32>
    tpu.vector_store %arg7[%c1_302, %c0_303, %c0_304], %756 {strides = array<i32>} : memref<2x4x32xf32, #tpu.memory_space<vmem>>, vector<1x4x32xf32>,
    return
  }
}

</mosaic_0001>

<llo_original>
// kernel: encoder_rnn_forward.1
$region0: #{encoder_rnn_forward.1}
  #allocation0 [shape = 'u32[]', space=smem, size = 0x4, offset = 0x4, fixed_abs, tag = 'smem constant byte address 0x4 - core index']
  #allocation1 [shape = 'u32[144,128]{1,0:T(1,128)}', space=vmem, size = 0x12000, scoped, tag = 'internal scratch']
  #allocation2 [shape = 'f32[32,32]{1,0:T(8,128)}', space=vmem, size = 0x4000, scoped, tag = 'scratch operand']
  #allocation3 [shape = 'f32[32,32]{1,0:T(8,128)}', space=vmem, size = 0x4000, scoped, tag = 'scratch operand']
  #allocation4 [shape = 'f32[32,32]{1,0:T(8,128)}', space=vmem, size = 0x4000, scoped, tag = 'scratch operand']
  #allocation5 [shape = 'f32[32,32]{1,0:T(8,128)}', space=vmem, size = 0x4000, scoped, tag = 'scratch operand']
  #allocation6 [shape = 'f32[32,32]{1,0:T(8,128)}', space=vmem, size = 0x4000, scoped, tag = 'scratch operand']
  #allocation7 [shape = 'f32[32,32]{1,0:T(8,128)}', space=vmem, size = 0x4000, scoped, tag = 'scratch operand']
  %s0 = inlined_call_operand.vmem [shape: s32[4,1], index: 0, kind: input, shape index: {}]
  %s1 = inlined_call_operand.vmem [shape: f32[32,32], index: 1, kind: input, shape index: {}]
  %s2 = inlined_call_operand.vmem [shape: f32[2,3,32,32], index: 2, kind: input, shape index: {}]
  %s3 = inlined_call_operand.hbm [shape: f32[2,3,32,32], index: 3, kind: input, shape index: {}]
  %s4 = inlined_call_operand.vmem [shape: f32[2,3,1,32], index: 4, kind: input, shape index: {}]
  %s5 = inlined_call_operand.vmem [shape: f32[2,3,1,32], index: 5, kind: input, shape index: {}]
  %s6 = inlined_call_operand.vmem [shape: f32[32,32], index: 6, kind: output, shape index: {0}]
  %s7 = inlined_call_operand.hbm [shape: f32[2,4,32], index: 7, kind: output, shape index: {1}]
  %8 = xla_tuple %s6, %s7
  %s9 = sld [smem:[#allocation0]]
  $region46: #{encoder_rnn_forward.1} parent=0
    _
  %s11 = ssub.s32 1, %s9
  %s12 = scalar_select 0, %s11, %s9
  $region1: #{encoder_rnn_forward.1} parent=0
    #allocation8 [shape = 'u8[98304]{0}', space=vmem, size = 0x18000, scoped, tag = 'input window, operand 3, single buffered']
    #allocation9 [shape = 's32[1]{0}', space=sflag, size = 0x4, scoped, tag = 'scoped memory for encoder_rnn_forward.1']
    #allocation10 [shape = 's32[1]{0}', space=sflag, size = 0x4, scoped, tag = 'scoped memory for encoder_rnn_forward.1']
    #allocation11 [shape = 'u8[4096]{0}', space=vmem, size = 0x1000, scoped, tag = 'output window, operand 1, single buffered']
    %13 = vsyncpa [#allocation9], 0
    %14 = vsyncpa [#allocation10], 0
    // Predicated region
    $region2: #{encoder_rnn_forward.1} parent=1 // pred_check
      _
    $region3: #{encoder_rnn_forward.1} parent=1 // pred_check_branch
      %16 = sbr.rel (0) target = $region5
    $region4: #{encoder_rnn_forward.1} parent=1 // pred_region
      _
    $region5: #{encoder_rnn_forward.1} parent=1 // pred_fallthru
      _
    // Predicated region
    $region6: #{encoder_rnn_forward.1} parent=1 // pred_check
      _
    $region7: #{encoder_rnn_forward.1} parent=1 // pred_check_branch
      %18 = sbr.rel (0) target = $region9
    $region8: #{encoder_rnn_forward.1} parent=1 // pred_region
      _
    $region9: #{encoder_rnn_forward.1} parent=1 // pred_fallthru
      _
    // Predicated region
    $region10: #{encoder_rnn_forward.1} parent=1 // pred_check
      _
    $region11: #{encoder_rnn_forward.1} parent=1 // pred_check_branch
      %20 = sbr.rel (0) target = $region13
    $region12: #{encoder_rnn_forward.1} parent=1 // pred_region
      _
    $region13: #{encoder_rnn_forward.1} parent=1 // pred_fallthru
      _
    // Predicated region
    $region14: #{encoder_rnn_forward.1} parent=1 // pred_check
      _
    $region15: #{encoder_rnn_forward.1} parent=1 // pred_check_branch
      %22 = sbr.rel (0) target = $region17
    $region16: #{encoder_rnn_forward.1} parent=1 // pred_region
      %s24 = ssub.s32 3072, 3072
      %25 = vsyncadd [#allocation9], %s24
      %s26 = sshll.u32 [#allocation8], 4
      %s27 = int_to_ptr.vmem [resolvable:$true] %s26
      %32 = dma.hbm_to_vmem [thread:$0]  %s3, 3072, %s27, [#allocation9], 128, 128, 8
    $region17: #{encoder_rnn_forward.1} parent=1 // pred_fallthru
      _
    // Predicated region
    $region18: #{encoder_rnn_forward.1} parent=1 // pred_check
      _
    $region19: #{encoder_rnn_forward.1} parent=1 // pred_check_branch
      %34 = sbr.rel (0) target = $region21
    $region20: #{encoder_rnn_forward.1} parent=1 // pred_region
      _
    $region21: #{encoder_rnn_forward.1} parent=1 // pred_fallthru
      _
    // Predicated region
    $region22: #{encoder_rnn_forward.1} parent=1 // pred_check
      _
    $region23: #{encoder_rnn_forward.1} parent=1 // pred_check_branch
      %36 = sbr.rel (0) target = $region25
    $region24: #{encoder_rnn_forward.1} parent=1 // pred_region
      _
    $region25: #{encoder_rnn_forward.1} parent=1 // pred_fallthru
      _
    // Predicated region
    $region26: #{encoder_rnn_forward.1} parent=1 // pred_check
      _
    $region27: #{encoder_rnn_forward.1} parent=1 // pred_check_branch
      %38 = sbr.rel (0) target = $region29
    $region28: #{encoder_rnn_forward.1} parent=1 // pred_region
      %39 = dma.done [#allocation9], 3072
    $region29: #{encoder_rnn_forward.1} parent=1 // pred_fallthru
      _
    %v40 = vld [vmem:[%s1] sm:$0xff]
    %v41 = vld [vmem:[%s1 + $0x8] sm:$0xff]
    %v42 = vld [vmem:[%s1 + $0x10] sm:$0xff]
    %v43 = vld [vmem:[%s1 + $0x18] sm:$0xff]
    %v44 = vld [vmem:[%s2] sm:$0xff]
    %v45 = vld [vmem:[%s2 + $0x8] sm:$0xff]
    %v46 = vld [vmem:[%s2 + $0x10] sm:$0xff]
    %v47 = vld [vmem:[%s2 + $0x18] sm:$0xff]
    %v48 = vld [vmem:[%s4] sm:$0x1]
    %v50 = vlaneseq
    %v51 = vshrl.u32 %v50, 7
    %v52 = vsub.s32 0, %v51
    %v53 = vrot.slane %v48, %v52
    %vm55 = vcmask 261120
    %v57 = vsel %vm55, %v40, 0
    %v60 = vsel %vm55, %v41, 0
    %v63 = vsel %vm55, %v42, 0
    %v66 = vsel %vm55, %v43, 0
    %68 = vmatprep.subr.mxu0 0.0
    %69 = vmatpush1.msra.mxu0 %v44
    %70 = vmatprep.subr.mxu0 0.0
    %71 = vmatpush1.msra.mxu0 %v45
    %72 = vmatprep.subr.mxu0 0.0
    %73 = vmatpush1.msra.mxu0 %v46
    %74 = vmatprep.subr.mxu0 0.0
    %75 = vmatpush1.msra.mxu0 %v47
    %76 = vmatprep.subr.mxu0 0.0
    %77 = vmatpush1.msra.mxu0 0.0
    %78 = vmatprep.subr.mxu0 0.0
    %79 = vmatpush1.msra.mxu0 0.0
    %80 = vmatprep.subr.mxu0 0.0
    %81 = vmatpush1.msra.mxu0 0.0
    %82 = vmatprep.subr.mxu0 0.0
    %83 = vmatpush1.msra.mxu0 0.0
    %84 = vmatprep.subr.mxu0 0.0
    %85 = vmatpush1.msra.mxu0 0.0
    %86 = vmatprep.subr.mxu0 0.0
    %87 = vmatpush1.msra.mxu0 0.0
    %88 = vmatprep.subr.mxu0 0.0
    %89 = vmatpush1.msra.mxu0 0.0
    %90 = vmatprep.subr.mxu0 0.0
    %91 = vmatpush1.msra.mxu0 0.0
    %92 = vmatprep.subr.mxu0 0.0
    %93 = vmatpush1.msra.mxu0 0.0
    %94 = vmatprep.subr.mxu0 0.0
    %95 = vmatpush1.msra.mxu0 0.0
    %96 = vmatprep.subr.mxu0 0.0
    %97 = vmatpush1.msra.mxu0 0.0
    %98 = vmatprep.subr.mxu0 0.0
    %99 = vmatpush1.msra.mxu0 0.0
    %100 = vmatprep.subr.mxu0 0.0
    %101 = vmatpush1.msra.mxu0 0.0
    %102 = vmatprep.subr.mxu0 0.0
    %103 = vmatpush1.msra.mxu0 0.0
    %104 = vmatprep.subr.mxu0 0.0
    %105 = vmatpush1.msra.mxu0 0.0
    %106 = vmatprep.subr.mxu0 0.0
    %107 = vmatpush1.msra.mxu0 0.0
    %108 = vmatprep.subr.mxu0 0.0
    %109 = vmatpush1.msra.mxu0 0.0
    %110 = vmatprep.subr.mxu0 0.0
    %111 = vmatpush1.msra.mxu0 0.0
    %112 = vmatprep.subr.mxu0 0.0
    %113 = vmatpush1.msra.mxu0 0.0
    %114 = vmatprep.subr.mxu0 0.0
    %115 = vmatpush1.msra.mxu0 0.0
    %116 = vmatprep.subr.mxu0 0.0
    %117 = vmatpush1.msra.mxu0 0.0
    %118 = vmatprep.subr.mxu0 0.0
    %119 = vmatpush1.msra.mxu0 0.0
    %120 = vmatprep.subr.mxu0 0.0
    %121 = vmatpush1.msra.mxu0 0.0
    %122 = vmatprep.subr.mxu0 0.0
    %123 = vmatpush1.msra.mxu0 0.0
    %124 = vmatprep.subr.mxu0 0.0
    %125 = vmatpush1.msra.mxu0 0.0
    %126 = vmatprep.subr.mxu0 0.0
    %127 = vmatpush1.msra.mxu0 0.0
    %128 = vmatprep.subr.mxu0 0.0
    %129 = vmatpush1.msra.mxu0 0.0
    %130 = vmatprep.subr.mxu0 0.0
    %131 = vmatpush1.msra.mxu0 0.0
    %132 = vmatprep.mubr.f32.mxu0 0.0
    %133 = vmatmul.mubr.f32.gmra.mrb[0].mxu0 %v57
    %v134 = vpop.f32.mrb[0].mxu0
    %v135 = vadd.f32 %v53, %v134
    %v136 = vpop.f32.mrb[0].mxu0
    %137 = vmatprep.mubr.f32.mxu0 0.0
    %138 = vmatmul.mubr.f32.gmra.mrb[0].mxu0 %v60
    %v139 = vpop.f32.mrb[0].mxu0
    %v140 = vadd.f32 %v53, %v139
    %v141 = vpop.f32.mrb[0].mxu0
    %142 = vmatprep.mubr.f32.mxu0 0.0
    %143 = vmatmul.mubr.f32.gmra.mrb[0].mxu0 %v63
    %v144 = vpop.f32.mrb[0].mxu0
    %v145 = vadd.f32 %v53, %v144
    %v146 = vpop.f32.mrb[0].mxu0
    %147 = vmatprep.mubr.f32.mxu0 0.0
    %148 = vmatmul.mubr.f32.gmra.mrb[0].mxu0 %v66
    %v149 = vpop.f32.mrb[0].mxu0
    %v150 = vadd.f32 %v53, %v149
    %v151 = vpop.f32.mrb[0].mxu0
    %152 = vdwg.mxu0
    %153 = vst.msk [vmem:[#allocation2] sm:$0xff] %vm55, %v135
    %154 = vst.msk [vmem:[#allocation2 + $0x8] sm:$0xff] %vm55, %v140
    %155 = vst.msk [vmem:[#allocation2 + $0x10] sm:$0xff] %vm55, %v145
    %156 = vst.msk [vmem:[#allocation2 + $0x18] sm:$0xff] %vm55, %v150
    %s157 = scalar_lea.vmem %s2, 32
    %v158 = vld [vmem:[%s157] sm:$0xff]
    %v159 = vld [vmem:[%s157 + $0x8] sm:$0xff]
    %v160 = vld [vmem:[%s157 + $0x10] sm:$0xff]
    %v161 = vld [vmem:[%s157 + $0x18] sm:$0xff]
    %s162 = scalar_lea.vmem %s4, 1
    %v163 = vld [vmem:[%s162] sm:$0x1]
    %v165 = vlaneseq
    %v166 = vshrl.u32 %v165, 7
    %v167 = vsub.s32 0, %v166
    %v168 = vrot.slane %v163, %v167
    %170 = vmatprep.subr.mxu0 0.0
    %171 = vmatpush1.msra.mxu0 %v158
    %172 = vmatprep.subr.mxu0 0.0
    %173 = vmatpush1.msra.mxu0 %v159
    %174 = vmatprep.subr.mxu0 0.0
    %175 = vmatpush1.msra.mxu0 %v160
    %176 = vmatprep.subr.mxu0 0.0
    %177 = vmatpush1.msra.mxu0 %v161
    %178 = vmatprep.subr.mxu0 0.0
    %179 = vmatpush1.msra.mxu0 0.0
    %180 = vmatprep.subr.mxu0 0.0
    %181 = vmatpush1.msra.mxu0 0.0
    %182 = vmatprep.subr.mxu0 0.0
    %183 = vmatpush1.msra.mxu0 0.0
    %184 = vmatprep.subr.mxu0 0.0
    %185 = vmatpush1.msra.mxu0 0.0
    %186 = vmatprep.subr.mxu0 0.0
    %187 = vmatpush1.msra.mxu0 0.0
    %188 = vmatprep.subr.mxu0 0.0
    %189 = vmatpush1.msra.mxu0 0.0
    %190 = vmatprep.subr.mxu0 0.0
    %191 = vmatpush1.msra.mxu0 0.0
    %192 = vmatprep.subr.mxu0 0.0
    %193 = vmatpush1.msra.mxu0 0.0
    %194 = vmatprep.subr.mxu0 0.0
    %195 = vmatpush1.msra.mxu0 0.0
    %196 = vmatprep.subr.mxu0 0.0
    %197 = vmatpush1.msra.mxu0 0.0
    %198 = vmatprep.subr.mxu0 0.0
    %199 = vmatpush1.msra.mxu0 0.0
    %200 = vmatprep.subr.mxu0 0.0
    %201 = vmatpush1.msra.mxu0 0.0
    %202 = vmatprep.subr.mxu0 0.0
    %203 = vmatpush1.msra.mxu0 0.0
    %204 = vmatprep.subr.mxu0 0.0
    %205 = vmatpush1.msra.mxu0 0.0
    %206 = vmatprep.subr.mxu0 0.0
    %207 = vmatpush1.msra.mxu0 0.0
    %208 = vmatprep.subr.mxu0 0.0
    %209 = vmatpush1.msra.mxu0 0.0
    %210 = vmatprep.subr.mxu0 0.0
    %211 = vmatpush1.msra.mxu0 0.0
    %212 = vmatprep.subr.mxu0 0.0
    %213 = vmatpush1.msra.mxu0 0.0
    %214 = vmatprep.subr.mxu0 0.0
    %215 = vmatpush1.msra.mxu0 0.0
    %216 = vmatprep.subr.mxu0 0.0
    %217 = vmatpush1.msra.mxu0 0.0
    %218 = vmatprep.subr.mxu0 0.0
    %219 = vmatpush1.msra.mxu0 0.0
    %220 = vmatprep.subr.mxu0 0.0
    %221 = vmatpush1.msra.mxu0 0.0
    %222 = vmatprep.subr.mxu0 0.0
    %223 = vmatpush1.msra.mxu0 0.0
    %224 = vmatprep.subr.mxu0 0.0
    %225 = vmatpush1.msra.mxu0 0.0
    %226 = vmatprep.subr.mxu0 0.0
    %227 = vmatpush1.msra.mxu0 0.0
    %228 = vmatprep.subr.mxu0 0.0
    %229 = vmatpush1.msra.mxu0 0.0
    %230 = vmatprep.subr.mxu0 0.0
    %231 = vmatpush1.msra.mxu0 0.0
    %232 = vmatprep.subr.mxu0 0.0
    %233 = vmatpush1.msra.mxu0 0.0
    %234 = vmatprep.mubr.f32.mxu0 0.0
    %235 = vmatmul.mubr.f32.gmra.mrb[0].mxu0 %v57
    %v236 = vpop.f32.mrb[0].mxu0
    %v237 = vadd.f32 %v168, %v236
    %v238 = vpop.f32.mrb[0].mxu0
    %239 = vmatprep.mubr.f32.mxu0 0.0
    %240 = vmatmul.mubr.f32.gmra.mrb[0].mxu0 %v60
    %v241 = vpop.f32.mrb[0].mxu0
    %v242 = vadd.f32 %v168, %v241
    %v243 = vpop.f32.mrb[0].mxu0
    %244 = vmatprep.mubr.f32.mxu0 0.0
    %245 = vmatmul.mubr.f32.gmra.mrb[0].mxu0 %v63
    %v246 = vpop.f32.mrb[0].mxu0
    %v247 = vadd.f32 %v168, %v246
    %v248 = vpop.f32.mrb[0].mxu0
    %249 = vmatprep.mubr.f32.mxu0 0.0
    %250 = vmatmul.mubr.f32.gmra.mrb[0].mxu0 %v66
    %v251 = vpop.f32.mrb[0].mxu0
    %v252 = vadd.f32 %v168, %v251
    %v253 = vpop.f32.mrb[0].mxu0
    %254 = vdwg.mxu0
    %255 = vst.msk [vmem:[#allocation3] sm:$0xff] %vm55, %v237
    %256 = vst.msk [vmem:[#allocation3 + $0x8] sm:$0xff] %vm55, %v242
    %257 = vst.msk [vmem:[#allocation3 + $0x10] sm:$0xff] %vm55, %v247
    %258 = vst.msk [vmem:[#allocation3 + $0x18] sm:$0xff] %vm55, %v252
    %s259 = scalar_lea.vmem %s2, 64
    %v260 = vld [vmem:[%s259] sm:$0xff]
    %v261 = vld [vmem:[%s259 + $0x8] sm:$0xff]
    %v262 = vld [vmem:[%s259 + $0x10] sm:$0xff]
    %v263 = vld [vmem:[%s259 + $0x18] sm:$0xff]
    %s264 = scalar_lea.vmem %s4, 2
    %v265 = vld [vmem:[%s264] sm:$0x1]
    %v267 = vlaneseq
    %v268 = vshrl.u32 %v267, 7
    %v269 = vsub.s32 0, %v268
    %v270 = vrot.slane %v265, %v269
    %272 = vmatprep.subr.mxu0 0.0
    %273 = vmatpush1.msra.mxu0 %v260
    %274 = vmatprep.subr.mxu0 0.0
    %275 = vmatpush1.msra.mxu0 %v261
    %276 = vmatprep.subr.mxu0 0.0
    %277 = vmatpush1.msra.mxu0 %v262
    %278 = vmatprep.subr.mxu0 0.0
    %279 = vmatpush1.msra.mxu0 %v263
    %280 = vmatprep.subr.mxu0 0.0
    %281 = vmatpush1.msra.mxu0 0.0
    %282 = vmatprep.subr.mxu0 0.0
    %283 = vmatpush1.msra.mxu0 0.0
    %284 = vmatprep.subr.mxu0 0.0
    %285 = vmatpush1.msra.mxu0 0.0
    %286 = vmatprep.subr.mxu0 0.0
    %287 = vmatpush1.msra.mxu0 0.0
    %288 = vmatprep.subr.mxu0 0.0
    %289 = vmatpush1.msra.mxu0 0.0
    %290 = vmatprep.subr.mxu0 0.0
    %291 = vmatpush1.msra.mxu0 0.0
    %292 = vmatprep.subr.mxu0 0.0
    %293 = vmatpush1.msra.mxu0 0.0
    %294 = vmatprep.subr.mxu0 0.0
    %295 = vmatpush1.msra.mxu0 0.0
    %296 = vmatprep.subr.mxu0 0.0
    %297 = vmatpush1.msra.mxu0 0.0
    %298 = vmatprep.subr.mxu0 0.0
    %299 = vmatpush1.msra.mxu0 0.0
    %300 = vmatprep.subr.mxu0 0.0
    %301 = vmatpush1.msra.mxu0 0.0
    %302 = vmatprep.subr.mxu0 0.0
    %303 = vmatpush1.msra.mxu0 0.0
    %304 = vmatprep.subr.mxu0 0.0
    %305 = vmatpush1.msra.mxu0 0.0
    %306 = vmatprep.subr.mxu0 0.0
    %307 = vmatpush1.msra.mxu0 0.0
    %308 = vmatprep.subr.mxu0 0.0
    %309 = vmatpush1.msra.mxu0 0.0
    %310 = vmatprep.subr.mxu0 0.0
    %311 = vmatpush1.msra.mxu0 0.0
    %312 = vmatprep.subr.mxu0 0.0
    %313 = vmatpush1.msra.mxu0 0.0
    %314 = vmatprep.subr.mxu0 0.0
    %315 = vmatpush1.msra.mxu0 0.0
    %316 = vmatprep.subr.mxu0 0.0
    %317 = vmatpush1.msra.mxu0 0.0
    %318 = vmatprep.subr.mxu0 0.0
    %319 = vmatpush1.msra.mxu0 0.0
    %320 = vmatprep.subr.mxu0 0.0
    %321 = vmatpush1.msra.mxu0 0.0
    %322 = vmatprep.subr.mxu0 0.0
    %323 = vmatpush1.msra.mxu0 0.0
    %324 = vmatprep.subr.mxu0 0.0
    %325 = vmatpush1.msra.mxu0 0.0
    %326 = vmatprep.subr.mxu0 0.0
    %327 = vmatpush1.msra.mxu0 0.0
    %328 = vmatprep.subr.mxu0 0.0
    %329 = vmatpush1.msra.mxu0 0.0
    %330 = vmatprep.subr.mxu0 0.0
    %331 = vmatpush1.msra.mxu0 0.0
    %332 = vmatprep.subr.mxu0 0.0
    %333 = vmatpush1.msra.mxu0 0.0
    %334 = vmatprep.subr.mxu0 0.0
    %335 = vmatpush1.msra.mxu0 0.0
    %336 = vmatprep.mubr.f32.mxu0 0.0
    %337 = vmatmul.mubr.f32.gmra.mrb[0].mxu0 %v57
    %v338 = vpop.f32.mrb[0].mxu0
    %v339 = vadd.f32 %v270, %v338
    %v340 = vpop.f32.mrb[0].mxu0
    %341 = vmatprep.mubr.f32.mxu0 0.0
    %342 = vmatmul.mubr.f32.gmra.mrb[0].mxu0 %v60
    %v343 = vpop.f32.mrb[0].mxu0
    %v344 = vadd.f32 %v270, %v343
    %v345 = vpop.f32.mrb[0].mxu0
    %346 = vmatprep.mubr.f32.mxu0 0.0
    %347 = vmatmul.mubr.f32.gmra.mrb[0].mxu0 %v63
    %v348 = vpop.f32.mrb[0].mxu0
    %v349 = vadd.f32 %v270, %v348
    %v350 = vpop.f32.mrb[0].mxu0
    %351 = vmatprep.mubr.f32.mxu0 0.0
    %352 = vmatmul.mubr.f32.gmra.mrb[0].mxu0 %v66
    %v353 = vpop.f32.mrb[0].mxu0
    %v354 = vadd.f32 %v270, %v353
    %v355 = vpop.f32.mrb[0].mxu0
    %356 = vdwg.mxu0
    %357 = vst.msk [vmem:[#allocation4] sm:$0xff] %vm55, %v339
    %358 = vst.msk [vmem:[#allocation4 + $0x8] sm:$0xff] %vm55, %v344
    %359 = vst.msk [vmem:[#allocation4 + $0x10] sm:$0xff] %vm55, %v349
    %360 = vst.msk [vmem:[#allocation4 + $0x18] sm:$0xff] %vm55, %v354
    %s361 = scalar_lea.vmem %s2, 96
    %v362 = vld [vmem:[%s361] sm:$0xff]
    %v363 = vld [vmem:[%s361 + $0x8] sm:$0xff]
    %v364 = vld [vmem:[%s361 + $0x10] sm:$0xff]
    %v365 = vld [vmem:[%s361 + $0x18] sm:$0xff]
    %s366 = scalar_lea.vmem %s4, 3
    %v367 = vld [vmem:[%s366] sm:$0x1]
    %v369 = vlaneseq
    %v370 = vshrl.u32 %v369, 7
    %v371 = vsub.s32 0, %v370
    %v372 = vrot.slane %v367, %v371
    %374 = vmatprep.subr.mxu0 0.0
    %375 = vmatpush1.msra.mxu0 %v362
    %376 = vmatprep.subr.mxu0 0.0
    %377 = vmatpush1.msra.mxu0 %v363
    %378 = vmatprep.subr.mxu0 0.0
    %379 = vmatpush1.msra.mxu0 %v364
    %380 = vmatprep.subr.mxu0 0.0
    %381 = vmatpush1.msra.mxu0 %v365
    %382 = vmatprep.subr.mxu0 0.0
    %383 = vmatpush1.msra.mxu0 0.0
    %384 = vmatprep.subr.mxu0 0.0
    %385 = vmatpush1.msra.mxu0 0.0
    %386 = vmatprep.subr.mxu0 0.0
    %387 = vmatpush1.msra.mxu0 0.0
    %388 = vmatprep.subr.mxu0 0.0
    %389 = vmatpush1.msra.mxu0 0.0
    %390 = vmatprep.subr.mxu0 0.0
    %391 = vmatpush1.msra.mxu0 0.0
    %392 = vmatprep.subr.mxu0 0.0
    %393 = vmatpush1.msra.mxu0 0.0
    %394 = vmatprep.subr.mxu0 0.0
    %395 = vmatpush1.msra.mxu0 0.0
    %396 = vmatprep.subr.mxu0 0.0
    %397 = vmatpush1.msra.mxu0 0.0
    %398 = vmatprep.subr.mxu0 0.0
    %399 = vmatpush1.msra.mxu0 0.0
    %400 = vmatprep.subr.mxu0 0.0
    %401 = vmatpush1.msra.mxu0 0.0
    %402 = vmatprep.subr.mxu0 0.0
    %403 = vmatpush1.msra.mxu0 0.0
    %404 = vmatprep.subr.mxu0 0.0
    %405 = vmatpush1.msra.mxu0 0.0
    %406 = vmatprep.subr.mxu0 0.0
    %407 = vmatpush1.msra.mxu0 0.0
    %408 = vmatprep.subr.mxu0 0.0
    %409 = vmatpush1.msra.mxu0 0.0
    %410 = vmatprep.subr.mxu0 0.0
    %411 = vmatpush1.msra.mxu0 0.0
    %412 = vmatprep.subr.mxu0 0.0
    %413 = vmatpush1.msra.mxu0 0.0
    %414 = vmatprep.subr.mxu0 0.0
    %415 = vmatpush1.msra.mxu0 0.0
    %416 = vmatprep.subr.mxu0 0.0
    %417 = vmatpush1.msra.mxu0 0.0
    %418 = vmatprep.subr.mxu0 0.0
    %419 = vmatpush1.msra.mxu0 0.0
    %420 = vmatprep.subr.mxu0 0.0
    %421 = vmatpush1.msra.mxu0 0.0
    %422 = vmatprep.subr.mxu0 0.0
    %423 = vmatpush1.msra.mxu0 0.0
    %424 = vmatprep.subr.mxu0 0.0
    %425 = vmatpush1.msra.mxu0 0.0
    %426 = vmatprep.subr.mxu0 0.0
    %427 = vmatpush1.msra.mxu0 0.0
    %428 = vmatprep.subr.mxu0 0.0
    %429 = vmatpush1.msra.mxu0 0.0
    %430 = vmatprep.subr.mxu0 0.0
    %431 = vmatpush1.msra.mxu0 0.0
    %432 = vmatprep.subr.mxu0 0.0
    %433 = vmatpush1.msra.mxu0 0.0
    %434 = vmatprep.subr.mxu0 0.0
    %435 = vmatpush1.msra.mxu0 0.0
    %436 = vmatprep.subr.mxu0 0.0
    %437 = vmatpush1.msra.mxu0 0.0
    %438 = vmatprep.mubr.f32.mxu0 0.0
    %439 = vmatmul.mubr.f32.gmra.mrb[0].mxu0 %v57
    %v440 = vpop.f32.mrb[0].mxu0
    %v441 = vadd.f32 %v372, %v440
    %v442 = vpop.f32.mrb[0].mxu0
    %443 = vmatprep.mubr.f32.mxu0 0.0
    %444 = vmatmul.mubr.f32.gmra.mrb[0].mxu0 %v60
    %v445 = vpop.f32.mrb[0].mxu0
    %v446 = vadd.f32 %v372, %v445
    %v447 = vpop.f32.mrb[0].mxu0
    %448 = vmatprep.mubr.f32.mxu0 0.0
    %449 = vmatmul.mubr.f32.gmra.mrb[0].mxu0 %v63
    %v450 = vpop.f32.mrb[0].mxu0
    %v451 = vadd.f32 %v372, %v450
    %v452 = vpop.f32.mrb[0].mxu0
    %453 = vmatprep.mubr.f32.mxu0 0.0
    %454 = vmatmul.mubr.f32.gmra.mrb[0].mxu0 %v66
    %v455 = vpop.f32.mrb[0].mxu0
    %v456 = vadd.f32 %v372, %v455
    %v457 = vpop.f32.mrb[0].mxu0
    %458 = vdwg.mxu0
    %459 = vst.msk [vmem:[#allocation5] sm:$0xff] %vm55, %v441
    %460 = vst.msk [vmem:[#allocation5 + $0x8] sm:$0xff] %vm55, %v446
    %461 = vst.msk [vmem:[#allocation5 + $0x10] sm:$0xff] %vm55, %v451
    %462 = vst.msk [vmem:[#allocation5 + $0x18] sm:$0xff] %vm55, %v456
    %s463 = scalar_lea.vmem %s2, 128
    %v464 = vld [vmem:[%s463] sm:$0xff]
    %v465 = vld [vmem:[%s463 + $0x8] sm:$0xff]
    %v466 = vld [vmem:[%s463 + $0x10] sm:$0xff]
    %v467 = vld [vmem:[%s463 + $0x18] sm:$0xff]
    %s468 = scalar_lea.vmem %s4, 4
    %v469 = vld [vmem:[%s468] sm:$0x1]
    %v471 = vlaneseq
    %v472 = vshrl.u32 %v471, 7
    %v473 = vsub.s32 0, %v472
    %v474 = vrot.slane %v469, %v473
    %476 = vmatprep.subr.mxu0 0.0
    %477 = vmatpush1.msra.mxu0 %v464
    %478 = vmatprep.subr.mxu0 0.0
    %479 = vmatpush1.msra.mxu0 %v465
    %480 = vmatprep.subr.mxu0 0.0
    %481 = vmatpush1.msra.mxu0 %v466
    %482 = vmatprep.subr.mxu0 0.0
    %483 = vmatpush1.msra.mxu0 %v467
    %484 = vmatprep.subr.mxu0 0.0
    %485 = vmatpush1.msra.mxu0 0.0
    %486 = vmatprep.subr.mxu0 0.0
    %487 = vmatpush1.msra.mxu0 0.0
    %488 = vmatprep.subr.mxu0 0.0
    %489 = vmatpush1.msra.mxu0 0.0
    %490 = vmatprep.subr.mxu0 0.0
    %491 = vmatpush1.msra.mxu0 0.0
    %492 = vmatprep.subr.mxu0 0.0
    %493 = vmatpush1.msra.mxu0 0.0
    %494 = vmatprep.subr.mxu0 0.0
    %495 = vmatpush1.msra.mxu0 0.0
    %496 = vmatprep.subr.mxu0 0.0
    %497 = vmatpush1.msra.mxu0 0.0
    %498 = vmatprep.subr.mxu0 0.0
    %499 = vmatpush1.msra.mxu0 0.0
    %500 = vmatprep.subr.mxu0 0.0
    %501 = vmatpush1.msra.mxu0 0.0
    %502 = vmatprep.subr.mxu0 0.0
    %503 = vmatpush1.msra.mxu0 0.0
    %504 = vmatprep.subr.mxu0 0.0
    %505 = vmatpush1.msra.mxu0 0.0
    %506 = vmatprep.subr.mxu0 0.0
    %507 = vmatpush1.msra.mxu0 0.0
    %508 = vmatprep.subr.mxu0 0.0
    %509 = vmatpush1.msra.mxu0 0.0
    %510 = vmatprep.subr.mxu0 0.0
    %511 = vmatpush1.msra.mxu0 0.0
    %512 = vmatprep.subr.mxu0 0.0
    %513 = vmatpush1.msra.mxu0 0.0
    %514 = vmatprep.subr.mxu0 0.0
    %515 = vmatpush1.msra.mxu0 0.0
    %516 = vmatprep.subr.mxu0 0.0
    %517 = vmatpush1.msra.mxu0 0.0
    %518 = vmatprep.subr.mxu0 0.0
    %519 = vmatpush1.msra.mxu0 0.0
    %520 = vmatprep.subr.mxu0 0.0
    %521 = vmatpush1.msra.mxu0 0.0
    %522 = vmatprep.subr.mxu0 0.0
    %523 = vmatpush1.msra.mxu0 0.0
    %524 = vmatprep.subr.mxu0 0.0
    %525 = vmatpush1.msra.mxu0 0.0
    %526 = vmatprep.subr.mxu0 0.0
    %527 = vmatpush1.msra.mxu0 0.0
    %528 = vmatprep.subr.mxu0 0.0
    %529 = vmatpush1.msra.mxu0 0.0
    %530 = vmatprep.subr.mxu0 0.0
    %531 = vmatpush1.msra.mxu0 0.0
    %532 = vmatprep.subr.mxu0 0.0
    %533 = vmatpush1.msra.mxu0 0.0
    %534 = vmatprep.subr.mxu0 0.0
    %535 = vmatpush1.msra.mxu0 0.0
    %536 = vmatprep.subr.mxu0 0.0
    %537 = vmatpush1.msra.mxu0 0.0
    %538 = vmatprep.subr.mxu0 0.0
    %539 = vmatpush1.msra.mxu0 0.0
    %540 = vmatprep.mubr.f32.mxu0 0.0
    %541 = vmatmul.mubr.f32.gmra.mrb[0].mxu0 %v57
    %v542 = vpop.f32.mrb[0].mxu0
    %v543 = vadd.f32 %v474, %v542
    %v544 = vpop.f32.mrb[0].mxu0
    %545 = vmatprep.mubr.f32.mxu0 0.0
    %546 = vmatmul.mubr.f32.gmra.mrb[0].mxu0 %v60
    %v547 = vpop.f32.mrb[0].mxu0
    %v548 = vadd.f32 %v474, %v547
    %v549 = vpop.f32.mrb[0].mxu0
    %550 = vmatprep.mubr.f32.mxu0 0.0
    %551 = vmatmul.mubr.f32.gmra.mrb[0].mxu0 %v63
    %v552 = vpop.f32.mrb[0].mxu0
    %v553 = vadd.f32 %v474, %v552
    %v554 = vpop.f32.mrb[0].mxu0
    %555 = vmatprep.mubr.f32.mxu0 0.0
    %556 = vmatmul.mubr.f32.gmra.mrb[0].mxu0 %v66
    %v557 = vpop.f32.mrb[0].mxu0
    %v558 = vadd.f32 %v474, %v557
    %v559 = vpop.f32.mrb[0].mxu0
    %560 = vdwg.mxu0
    %561 = vst.msk [vmem:[#allocation6] sm:$0xff] %vm55, %v543
    %562 = vst.msk [vmem:[#allocation6 + $0x8] sm:$0xff] %vm55, %v548
    %563 = vst.msk [vmem:[#allocation6 + $0x10] sm:$0xff] %vm55, %v553
    %564 = vst.msk [vmem:[#allocation6 + $0x18] sm:$0xff] %vm55, %v558
    %s565 = scalar_lea.vmem %s2, 160
    %v566 = vld [vmem:[%s565] sm:$0xff]
    %v567 = vld [vmem:[%s565 + $0x8] sm:$0xff]
    %v568 = vld [vmem:[%s565 + $0x10] sm:$0xff]
    %v569 = vld [vmem:[%s565 + $0x18] sm:$0xff]
    %s570 = scalar_lea.vmem %s4, 5
    %v571 = vld [vmem:[%s570] sm:$0x1]
    %v573 = vlaneseq
    %v574 = vshrl.u32 %v573, 7
    %v575 = vsub.s32 0, %v574
    %v576 = vrot.slane %v571, %v575
    %578 = vmatprep.subr.mxu0 0.0
    %579 = vmatpush1.msra.mxu0 %v566
    %580 = vmatprep.subr.mxu0 0.0
    %581 = vmatpush1.msra.mxu0 %v567
    %582 = vmatprep.subr.mxu0 0.0
    %583 = vmatpush1.msra.mxu0 %v568
    %584 = vmatprep.subr.mxu0 0.0
    %585 = vmatpush1.msra.mxu0 %v569
    %586 = vmatprep.subr.mxu0 0.0
    %587 = vmatpush1.msra.mxu0 0.0
    %588 = vmatprep.subr.mxu0 0.0
    %589 = vmatpush1.msra.mxu0 0.0
    %590 = vmatprep.subr.mxu0 0.0
    %591 = vmatpush1.msra.mxu0 0.0
    %592 = vmatprep.subr.mxu0 0.0
    %593 = vmatpush1.msra.mxu0 0.0
    %594 = vmatprep.subr.mxu0 0.0
    %595 = vmatpush1.msra.mxu0 0.0
    %596 = vmatprep.subr.mxu0 0.0
    %597 = vmatpush1.msra.mxu0 0.0
    %598 = vmatprep.subr.mxu0 0.0
    %599 = vmatpush1.msra.mxu0 0.0
    %600 = vmatprep.subr.mxu0 0.0
    %601 = vmatpush1.msra.mxu0 0.0
    %602 = vmatprep.subr.mxu0 0.0
    %603 = vmatpush1.msra.mxu0 0.0
    %604 = vmatprep.subr.mxu0 0.0
    %605 = vmatpush1.msra.mxu0 0.0
    %606 = vmatprep.subr.mxu0 0.0
    %607 = vmatpush1.msra.mxu0 0.0
    %608 = vmatprep.subr.mxu0 0.0
    %609 = vmatpush1.msra.mxu0 0.0
    %610 = vmatprep.subr.mxu0 0.0
    %611 = vmatpush1.msra.mxu0 0.0
    %612 = vmatprep.subr.mxu0 0.0
    %613 = vmatpush1.msra.mxu0 0.0
    %614 = vmatprep.subr.mxu0 0.0
    %615 = vmatpush1.msra.mxu0 0.0
    %616 = vmatprep.subr.mxu0 0.0
    %617 = vmatpush1.msra.mxu0 0.0
    %618 = vmatprep.subr.mxu0 0.0
    %619 = vmatpush1.msra.mxu0 0.0
    %620 = vmatprep.subr.mxu0 0.0
    %621 = vmatpush1.msra.mxu0 0.0
    %622 = vmatprep.subr.mxu0 0.0
    %623 = vmatpush1.msra.mxu0 0.0
    %624 = vmatprep.subr.mxu0 0.0
    %625 = vmatpush1.msra.mxu0 0.0
    %626 = vmatprep.subr.mxu0 0.0
    %627 = vmatpush1.msra.mxu0 0.0
    %628 = vmatprep.subr.mxu0 0.0
    %629 = vmatpush1.msra.mxu0 0.0
    %630 = vmatprep.subr.mxu0 0.0
    %631 = vmatpush1.msra.mxu0 0.0
    %632 = vmatprep.subr.mxu0 0.0
    %633 = vmatpush1.msra.mxu0 0.0
    %634 = vmatprep.subr.mxu0 0.0
    %635 = vmatpush1.msra.mxu0 0.0
    %636 = vmatprep.subr.mxu0 0.0
    %637 = vmatpush1.msra.mxu0 0.0
    %638 = vmatprep.subr.mxu0 0.0
    %639 = vmatpush1.msra.mxu0 0.0
    %640 = vmatprep.subr.mxu0 0.0
    %641 = vmatpush1.msra.mxu0 0.0
    %642 = vmatprep.mubr.f32.mxu0 0.0
    %643 = vmatmul.mubr.f32.gmra.mrb[0].mxu0 %v57
    %v644 = vpop.f32.mrb[0].mxu0
    %v645 = vadd.f32 %v576, %v644
    %v646 = vpop.f32.mrb[0].mxu0
    %647 = vmatprep.mubr.f32.mxu0 0.0
    %648 = vmatmul.mubr.f32.gmra.mrb[0].mxu0 %v60
    %v649 = vpop.f32.mrb[0].mxu0
    %v650 = vadd.f32 %v576, %v649
    %v651 = vpop.f32.mrb[0].mxu0
    %652 = vmatprep.mubr.f32.mxu0 0.0
    %653 = vmatmul.mubr.f32.gmra.mrb[0].mxu0 %v63
    %v654 = vpop.f32.mrb[0].mxu0
    %v655 = vadd.f32 %v576, %v654
    %v656 = vpop.f32.mrb[0].mxu0
    %657 = vmatprep.mubr.f32.mxu0 0.0
    %658 = vmatmul.mubr.f32.gmra.mrb[0].mxu0 %v66
    %v659 = vpop.f32.mrb[0].mxu0
    %v660 = vadd.f32 %v576, %v659
    %v661 = vpop.f32.mrb[0].mxu0
    %662 = vdwg.mxu0
    %663 = vst.msk [vmem:[#allocation7] sm:$0xff] %vm55, %v645
    %664 = vst.msk [vmem:[#allocation7 + $0x8] sm:$0xff] %vm55, %v650
    %665 = vst.msk [vmem:[#allocation7 + $0x10] sm:$0xff] %vm55, %v655
    %666 = vst.msk [vmem:[#allocation7 + $0x18] sm:$0xff] %vm55, %v660
    %v667 = vld [vmem:[#allocation8] sm:$0xff]
    %v668 = vld [vmem:[#allocation8 + $0x8] sm:$0xff]
    %v669 = vld [vmem:[#allocation8 + $0x10] sm:$0xff]
    %v670 = vld [vmem:[#allocation8 + $0x18] sm:$0xff]
    %s671 = scalar_lea.vmem [#allocation8], 32
    %v672 = vld [vmem:[%s671] sm:$0xff]
    %v673 = vld [vmem:[%s671 + $0x8] sm:$0xff]
    %v674 = vld [vmem:[%s671 + $0x10] sm:$0xff]
    %v675 = vld [vmem:[%s671 + $0x18] sm:$0xff]
    %s676 = scalar_lea.vmem [#allocation8], 64
    %v677 = vld [vmem:[%s676] sm:$0xff]
    %v678 = vld [vmem:[%s676 + $0x8] sm:$0xff]
    %v679 = vld [vmem:[%s676 + $0x10] sm:$0xff]
    %v680 = vld [vmem:[%s676 + $0x18] sm:$0xff]
    %s681 = scalar_lea.vmem [#allocation8], 96
    %v682 = vld [vmem:[%s681] sm:$0xff]
    %v683 = vld [vmem:[%s681 + $0x8] sm:$0xff]
    %v684 = vld [vmem:[%s681 + $0x10] sm:$0xff]
    %v685 = vld [vmem:[%s681 + $0x18] sm:$0xff]
    %s686 = scalar_lea.vmem [#allocation8], 128
    %v687 = vld [vmem:[%s686] sm:$0xff]
    %v688 = vld [vmem:[%s686 + $0x8] sm:$0xff]
    %v689 = vld [vmem:[%s686 + $0x10] sm:$0xff]
    %v690 = vld [vmem:[%s686 + $0x18] sm:$0xff]
    %s691 = scalar_lea.vmem [#allocation8], 160
    %v692 = vld [vmem:[%s691] sm:$0xff]
    %v693 = vld [vmem:[%s691 + $0x8] sm:$0xff]
    %v694 = vld [vmem:[%s691 + $0x10] sm:$0xff]
    %v695 = vld [vmem:[%s691 + $0x18] sm:$0xff]
    %v696 = vld [vmem:[%s5] sm:$0x1]
    %v698 = vlaneseq
    %v699 = vshrl.u32 %v698, 7
    %v700 = vsub.s32 0, %v699
    %v701 = vrot.slane %v696, %v700
    %s703 = scalar_lea.vmem %s5, 1
    %v704 = vld [vmem:[%s703] sm:$0x1]
    %v706 = vlaneseq
    %v707 = vshrl.u32 %v706, 7
    %v708 = vsub.s32 0, %v707
    %v709 = vrot.slane %v704, %v708
    %s711 = scalar_lea.vmem %s5, 2
    %v712 = vld [vmem:[%s711] sm:$0x1]
    %v714 = vlaneseq
    %v715 = vshrl.u32 %v714, 7
    %v716 = vsub.s32 0, %v715
    %v717 = vrot.slane %v712, %v716
    %s719 = scalar_lea.vmem %s5, 3
    %v720 = vld [vmem:[%s719] sm:$0x1]
    %v722 = vlaneseq
    %v723 = vshrl.u32 %v722, 7
    %v724 = vsub.s32 0, %v723
    %v725 = vrot.slane %v720, %v724
    %s727 = scalar_lea.vmem %s5, 4
    %v728 = vld [vmem:[%s727] sm:$0x1]
    %v730 = vlaneseq
    %v731 = vshrl.u32 %v730, 7
    %v732 = vsub.s32 0, %v731
    %v733 = vrot.slane %v728, %v732
    %s735 = scalar_lea.vmem %s5, 5
    %v736 = vld [vmem:[%s735] sm:$0x1]
    %v738 = vlaneseq
    %v739 = vshrl.u32 %v738, 7
    %v740 = vsub.s32 0, %v739
    %v741 = vrot.slane %v736, %v740
    %v743 = vld [vmem:[%s0] sm:$0xf]
    %v744 = vld [vmem:[#allocation2] sm:$0xf]
    %v745 = vld [vmem:[#allocation3] sm:$0xf]
    %v746 = vld [vmem:[#allocation4] sm:$0xf]
    %v748 = vsel %vm55, 0.0, 0
    %750 = vmatprep.subr.mxu0 0.0
    %751 = vmatpush1.msra.mxu0 %v667
    %752 = vmatprep.subr.mxu0 0.0
    %753 = vmatpush1.msra.mxu0 %v668
    %754 = vmatprep.subr.mxu0 0.0
    %755 = vmatpush1.msra.mxu0 %v669
    %756 = vmatprep.subr.mxu0 0.0
    %757 = vmatpush1.msra.mxu0 %v670
    %758 = vmatprep.subr.mxu0 0.0
    %759 = vmatpush1.msra.mxu0 0.0
    %760 = vmatprep.subr.mxu0 0.0
    %761 = vmatpush1.msra.mxu0 0.0
    %762 = vmatprep.subr.mxu0 0.0
    %763 = vmatpush1.msra.mxu0 0.0
    %764 = vmatprep.subr.mxu0 0.0
    %765 = vmatpush1.msra.mxu0 0.0
    %766 = vmatprep.subr.mxu0 0.0
    %767 = vmatpush1.msra.mxu0 0.0
    %768 = vmatprep.subr.mxu0 0.0
    %769 = vmatpush1.msra.mxu0 0.0
    %770 = vmatprep.subr.mxu0 0.0
    %771 = vmatpush1.msra.mxu0 0.0
    %772 = vmatprep.subr.mxu0 0.0
    %773 = vmatpush1.msra.mxu0 0.0
    %774 = vmatprep.subr.mxu0 0.0
    %775 = vmatpush1.msra.mxu0 0.0
    %776 = vmatprep.subr.mxu0 0.0
    %777 = vmatpush1.msra.mxu0 0.0
    %778 = vmatprep.subr.mxu0 0.0
    %779 = vmatpush1.msra.mxu0 0.0
    %780 = vmatprep.subr.mxu0 0.0
    %781 = vmatpush1.msra.mxu0 0.0
    %782 = vmatprep.subr.mxu0 0.0
    %783 = vmatpush1.msra.mxu0 0.0
    %784 = vmatprep.subr.mxu0 0.0
    %785 = vmatpush1.msra.mxu0 0.0
    %786 = vmatprep.subr.mxu0 0.0
    %787 = vmatpush1.msra.mxu0 0.0
    %788 = vmatprep.subr.mxu0 0.0
    %789 = vmatpush1.msra.mxu0 0.0
    %790 = vmatprep.subr.mxu0 0.0
    %791 = vmatpush1.msra.mxu0 0.0
    %792 = vmatprep.subr.mxu0 0.0
    %793 = vmatpush1.msra.mxu0 0.0
    %794 = vmatprep.subr.mxu0 0.0
    %795 = vmatpush1.msra.mxu0 0.0
    %796 = vmatprep.subr.mxu0 0.0
    %797 = vmatpush1.msra.mxu0 0.0
    %798 = vmatprep.subr.mxu0 0.0
    %799 = vmatpush1.msra.mxu0 0.0
    %800 = vmatprep.subr.mxu0 0.0
    %801 = vmatpush1.msra.mxu0 0.0
    %802 = vmatprep.subr.mxu0 0.0
    %803 = vmatpush1.msra.mxu0 0.0
    %804 = vmatprep.subr.mxu0 0.0
    %805 = vmatpush1.msra.mxu0 0.0
    %806 = vmatprep.subr.mxu0 0.0
    %807 = vmatpush1.msra.mxu0 0.0
    %808 = vmatprep.subr.mxu0 0.0
    %809 = vmatpush1.msra.mxu0 0.0
    %810 = vmatprep.subr.mxu0 0.0
    %811 = vmatpush1.msra.mxu0 0.0
    %812 = vmatprep.subr.mxu0 0.0
    %813 = vmatpush1.msra.mxu0 0.0
    %814 = vmatprep.mubr.f32.mxu0 0.0
    %815 = vmatmul.mubr.f32.gmra.mrb[0].mxu0 %v748
    %v816 = vpop.f32.mrb[0].mxu0
    %v817 = vadd.f32 %v701, %v816
    %v818 = vpop.f32.mrb[0].mxu0
    %819 = vdwg.mxu0
    %820 = vmatprep.subr.mxu0 0.0
    %821 = vmatpush1.msra.mxu0 %v672
    %822 = vmatprep.subr.mxu0 0.0
    %823 = vmatpush1.msra.mxu0 %v673
    %824 = vmatprep.subr.mxu0 0.0
    %825 = vmatpush1.msra.mxu0 %v674
    %826 = vmatprep.subr.mxu0 0.0
    %827 = vmatpush1.msra.mxu0 %v675
    %828 = vmatprep.subr.mxu0 0.0
    %829 = vmatpush1.msra.mxu0 0.0
    %830 = vmatprep.subr.mxu0 0.0
    %831 = vmatpush1.msra.mxu0 0.0
    %832 = vmatprep.subr.mxu0 0.0
    %833 = vmatpush1.msra.mxu0 0.0
    %834 = vmatprep.subr.mxu0 0.0
    %835 = vmatpush1.msra.mxu0 0.0
    %836 = vmatprep.subr.mxu0 0.0
    %837 = vmatpush1.msra.mxu0 0.0
    %838 = vmatprep.subr.mxu0 0.0
    %839 = vmatpush1.msra.mxu0 0.0
    %840 = vmatprep.subr.mxu0 0.0
    %841 = vmatpush1.msra.mxu0 0.0
    %842 = vmatprep.subr.mxu0 0.0
    %843 = vmatpush1.msra.mxu0 0.0
    %844 = vmatprep.subr.mxu0 0.0
    %845 = vmatpush1.msra.mxu0 0.0
    %846 = vmatprep.subr.mxu0 0.0
    %847 = vmatpush1.msra.mxu0 0.0
    %848 = vmatprep.subr.mxu0 0.0
    %849 = vmatpush1.msra.mxu0 0.0
    %850 = vmatprep.subr.mxu0 0.0
    %851 = vmatpush1.msra.mxu0 0.0
    %852 = vmatprep.subr.mxu0 0.0
    %853 = vmatpush1.msra.mxu0 0.0
    %854 = vmatprep.subr.mxu0 0.0
    %855 = vmatpush1.msra.mxu0 0.0
    %856 = vmatprep.subr.mxu0 0.0
    %857 = vmatpush1.msra.mxu0 0.0
    %858 = vmatprep.subr.mxu0 0.0
    %859 = vmatpush1.msra.mxu0 0.0
    %860 = vmatprep.subr.mxu0 0.0
    %861 = vmatpush1.msra.mxu0 0.0
    %862 = vmatprep.subr.mxu0 0.0
    %863 = vmatpush1.msra.mxu0 0.0
    %864 = vmatprep.subr.mxu0 0.0
    %865 = vmatpush1.msra.mxu0 0.0
    %866 = vmatprep.subr.mxu0 0.0
    %867 = vmatpush1.msra.mxu0 0.0
    %868 = vmatprep.subr.mxu0 0.0
    %869 = vmatpush1.msra.mxu0 0.0
    %870 = vmatprep.subr.mxu0 0.0
    %871 = vmatpush1.msra.mxu0 0.0
    %872 = vmatprep.subr.mxu0 0.0
    %873 = vmatpush1.msra.mxu0 0.0
    %874 = vmatprep.subr.mxu0 0.0
    %875 = vmatpush1.msra.mxu0 0.0
    %876 = vmatprep.subr.mxu0 0.0
    %877 = vmatpush1.msra.mxu0 0.0
    %878 = vmatprep.subr.mxu0 0.0
    %879 = vmatpush1.msra.mxu0 0.0
    %880 = vmatprep.subr.mxu0 0.0
    %881 = vmatpush1.msra.mxu0 0.0
    %882 = vmatprep.subr.mxu0 0.0
    %883 = vmatpush1.msra.mxu0 0.0
    %884 = vmatprep.mubr.f32.mxu0 0.0
    %885 = vmatmul.mubr.f32.gmra.mrb[0].mxu0 %v748
    %v886 = vpop.f32.mrb[0].mxu0
    %v887 = vadd.f32 %v709, %v886
    %v888 = vpop.f32.mrb[0].mxu0
    %889 = vdwg.mxu0
    %890 = vmatprep.subr.mxu0 0.0
    %891 = vmatpush1.msra.mxu0 %v677
    %892 = vmatprep.subr.mxu0 0.0
    %893 = vmatpush1.msra.mxu0 %v678
    %894 = vmatprep.subr.mxu0 0.0
    %895 = vmatpush1.msra.mxu0 %v679
    %896 = vmatprep.subr.mxu0 0.0
    %897 = vmatpush1.msra.mxu0 %v680
    %898 = vmatprep.subr.mxu0 0.0
    %899 = vmatpush1.msra.mxu0 0.0
    %900 = vmatprep.subr.mxu0 0.0
    %901 = vmatpush1.msra.mxu0 0.0
    %902 = vmatprep.subr.mxu0 0.0
    %903 = vmatpush1.msra.mxu0 0.0
    %904 = vmatprep.subr.mxu0 0.0
    %905 = vmatpush1.msra.mxu0 0.0
    %906 = vmatprep.subr.mxu0 0.0
    %907 = vmatpush1.msra.mxu0 0.0
    %908 = vmatprep.subr.mxu0 0.0
    %909 = vmatpush1.msra.mxu0 0.0
    %910 = vmatprep.subr.mxu0 0.0
    %911 = vmatpush1.msra.mxu0 0.0
    %912 = vmatprep.subr.mxu0 0.0
    %913 = vmatpush1.msra.mxu0 0.0
    %914 = vmatprep.subr.mxu0 0.0
    %915 = vmatpush1.msra.mxu0 0.0
    %916 = vmatprep.subr.mxu0 0.0
    %917 = vmatpush1.msra.mxu0 0.0
    %918 = vmatprep.subr.mxu0 0.0
    %919 = vmatpush1.msra.mxu0 0.0
    %920 = vmatprep.subr.mxu0 0.0
    %921 = vmatpush1.msra.mxu0 0.0
    %922 = vmatprep.subr.mxu0 0.0
    %923 = vmatpush1.msra.mxu0 0.0
    %924 = vmatprep.subr.mxu0 0.0
    %925 = vmatpush1.msra.mxu0 0.0
    %926 = vmatprep.subr.mxu0 0.0
    %927 = vmatpush1.msra.mxu0 0.0
    %928 = vmatprep.subr.mxu0 0.0
    %929 = vmatpush1.msra.mxu0 0.0
    %930 = vmatprep.subr.mxu0 0.0
    %931 = vmatpush1.msra.mxu0 0.0
    %932 = vmatprep.subr.mxu0 0.0
    %933 = vmatpush1.msra.mxu0 0.0
    %934 = vmatprep.subr.mxu0 0.0
    %935 = vmatpush1.msra.mxu0 0.0
    %936 = vmatprep.subr.mxu0 0.0
    %937 = vmatpush1.msra.mxu0 0.0
    %938 = vmatprep.subr.mxu0 0.0
    %939 = vmatpush1.msra.mxu0 0.0
    %940 = vmatprep.subr.mxu0 0.0
    %941 = vmatpush1.msra.mxu0 0.0
    %942 = vmatprep.subr.mxu0 0.0
    %943 = vmatpush1.msra.mxu0 0.0
    %944 = vmatprep.subr.mxu0 0.0
    %945 = vmatpush1.msra.mxu0 0.0
    %946 = vmatprep.subr.mxu0 0.0
    %947 = vmatpush1.msra.mxu0 0.0
    %948 = vmatprep.subr.mxu0 0.0
    %949 = vmatpush1.msra.mxu0 0.0
    %950 = vmatprep.subr.mxu0 0.0
    %951 = vmatpush1.msra.mxu0 0.0
    %952 = vmatprep.subr.mxu0 0.0
    %953 = vmatpush1.msra.mxu0 0.0
    %954 = vmatprep.mubr.f32.mxu0 0.0
    %955 = vmatmul.mubr.f32.gmra.mrb[0].mxu0 %v748
    %v956 = vpop.f32.mrb[0].mxu0
    %v957 = vadd.f32 %v717, %v956
    %v958 = vpop.f32.mrb[0].mxu0
    %959 = vdwg.mxu0
    %v960 = vadd.f32 %v744, %v817
    %v961 = vxor.u32 %v960, 2147483648
    %v962 = vmul.f32 %v961, 1.442695
    %v963 = vpow.pop %v962
    %v964 = vadd.f32 %v963, 1.0
    %v965 = vrcp.pop %v964
    %v966 = vmul.f32 1.0, %v965
    %v967 = vadd.f32 %v745, %v887
    %v968 = vxor.u32 %v967, 2147483648
    %v969 = vmul.f32 %v968, 1.442695
    %v970 = vpow.pop %v969
    %v971 = vadd.f32 %v970, 1.0
    %v972 = vrcp.pop %v971
    %v973 = vmul.f32 1.0, %v972
    %v974 = vmul.f32 %v966, %v957
    %v975 = vadd.f32 %v746, %v974
    %v976 = vtanh.pop %v975
    %v977 = vsub.f32 1.0, %v973
    %v978 = vmul.f32 %v977, %v976
    %v979 = vmul.f32 %v973, 0.0
    %v980 = vadd.f32 %v978, %v979
    %vm981 = vcmp.gt.s32.totalorder %v743, 0
    %v982 = vsel %vm981, 1, 0
    %983 = vset.pattern.permute.xlu0 0
    %984 = vperm.xlu0 %983, %v982
    %v985 = vpop.permute.xlu0 %984
    %vm986 = vcmp.eq.s32.totalorder %v985, 1
    %v987 = vsel %vm986, %v980, 0.0
    %v988 = vld [vmem:[#allocation5 + $0x1c] sm:$0xf]
    %v989 = vld [vmem:[#allocation6 + $0x1c] sm:$0xf]
    %v990 = vld [vmem:[#allocation7 + $0x1c] sm:$0xf]
    %991 = vmatprep.subr.mxu0 0.0
    %992 = vmatpush1.msra.mxu0 %v682
    %993 = vmatprep.subr.mxu0 0.0
    %994 = vmatpush1.msra.mxu0 %v683
    %995 = vmatprep.subr.mxu0 0.0
    %996 = vmatpush1.msra.mxu0 %v684
    %997 = vmatprep.subr.mxu0 0.0
    %998 = vmatpush1.msra.mxu0 %v685
    %999 = vmatprep.subr.mxu0 0.0
    %1000 = vmatpush1.msra.mxu0 0.0
    %1001 = vmatprep.subr.mxu0 0.0
    %1002 = vmatpush1.msra.mxu0 0.0
    %1003 = vmatprep.subr.mxu0 0.0
    %1004 = vmatpush1.msra.mxu0 0.0
    %1005 = vmatprep.subr.mxu0 0.0
    %1006 = vmatpush1.msra.mxu0 0.0
    %1007 = vmatprep.subr.mxu0 0.0
    %1008 = vmatpush1.msra.mxu0 0.0
    %1009 = vmatprep.subr.mxu0 0.0
    %1010 = vmatpush1.msra.mxu0 0.0
    %1011 = vmatprep.subr.mxu0 0.0
    %1012 = vmatpush1.msra.mxu0 0.0
    %1013 = vmatprep.subr.mxu0 0.0
    %1014 = vmatpush1.msra.mxu0 0.0
    %1015 = vmatprep.subr.mxu0 0.0
    %1016 = vmatpush1.msra.mxu0 0.0
    %1017 = vmatprep.subr.mxu0 0.0
    %1018 = vmatpush1.msra.mxu0 0.0
    %1019 = vmatprep.subr.mxu0 0.0
    %1020 = vmatpush1.msra.mxu0 0.0
    %1021 = vmatprep.subr.mxu0 0.0
    %1022 = vmatpush1.msra.mxu0 0.0
    %1023 = vmatprep.subr.mxu0 0.0
    %1024 = vmatpush1.msra.mxu0 0.0
    %1025 = vmatprep.subr.mxu0 0.0
    %1026 = vmatpush1.msra.mxu0 0.0
    %1027 = vmatprep.subr.mxu0 0.0
    %1028 = vmatpush1.msra.mxu0 0.0
    %1029 = vmatprep.subr.mxu0 0.0
    %1030 = vmatpush1.msra.mxu0 0.0
    %1031 = vmatprep.subr.mxu0 0.0
    %1032 = vmatpush1.msra.mxu0 0.0
    %1033 = vmatprep.subr.mxu0 0.0
    %1034 = vmatpush1.msra.mxu0 0.0
    %1035 = vmatprep.subr.mxu0 0.0
    %1036 = vmatpush1.msra.mxu0 0.0
    %1037 = vmatprep.subr.mxu0 0.0
    %1038 = vmatpush1.msra.mxu0 0.0
    %1039 = vmatprep.subr.mxu0 0.0
    %1040 = vmatpush1.msra.mxu0 0.0
    %1041 = vmatprep.subr.mxu0 0.0
    %1042 = vmatpush1.msra.mxu0 0.0
    %1043 = vmatprep.subr.mxu0 0.0
    %1044 = vmatpush1.msra.mxu0 0.0
    %1045 = vmatprep.subr.mxu0 0.0
    %1046 = vmatpush1.msra.mxu0 0.0
    %1047 = vmatprep.subr.mxu0 0.0
    %1048 = vmatpush1.msra.mxu0 0.0
    %1049 = vmatprep.subr.mxu0 0.0
    %1050 = vmatpush1.msra.mxu0 0.0
    %1051 = vmatprep.subr.mxu0 0.0
    %1052 = vmatpush1.msra.mxu0 0.0
    %1053 = vmatprep.subr.mxu0 0.0
    %1054 = vmatpush1.msra.mxu0 0.0
    %1055 = vmatprep.mubr.f32.mxu0 0.0
    %1056 = vmatmul.mubr.f32.gmra.mrb[0].mxu0 %v748
    %v1057 = vpop.f32.mrb[0].mxu0
    %v1058 = vadd.f32 %v725, %v1057
    %v1059 = vpop.f32.mrb[0].mxu0
    %1060 = vdwg.mxu0
    %1061 = vmatprep.subr.mxu0 0.0
    %1062 = vmatpush1.msra.mxu0 %v687
    %1063 = vmatprep.subr.mxu0 0.0
    %1064 = vmatpush1.msra.mxu0 %v688
    %1065 = vmatprep.subr.mxu0 0.0
    %1066 = vmatpush1.msra.mxu0 %v689
    %1067 = vmatprep.subr.mxu0 0.0
    %1068 = vmatpush1.msra.mxu0 %v690
    %1069 = vmatprep.subr.mxu0 0.0
    %1070 = vmatpush1.msra.mxu0 0.0
    %1071 = vmatprep.subr.mxu0 0.0
    %1072 = vmatpush1.msra.mxu0 0.0
    %1073 = vmatprep.subr.mxu0 0.0
    %1074 = vmatpush1.msra.mxu0 0.0
    %1075 = vmatprep.subr.mxu0 0.0
    %1076 = vmatpush1.msra.mxu0 0.0
    %1077 = vmatprep.subr.mxu0 0.0
    %1078 = vmatpush1.msra.mxu0 0.0
    %1079 = vmatprep.subr.mxu0 0.0
    %1080 = vmatpush1.msra.mxu0 0.0
    %1081 = vmatprep.subr.mxu0 0.0
    %1082 = vmatpush1.msra.mxu0 0.0
    %1083 = vmatprep.subr.mxu0 0.0
    %1084 = vmatpush1.msra.mxu0 0.0
    %1085 = vmatprep.subr.mxu0 0.0
    %1086 = vmatpush1.msra.mxu0 0.0
    %1087 = vmatprep.subr.mxu0 0.0
    %1088 = vmatpush1.msra.mxu0 0.0
    %1089 = vmatprep.subr.mxu0 0.0
    %1090 = vmatpush1.msra.mxu0 0.0
    %1091 = vmatprep.subr.mxu0 0.0
    %1092 = vmatpush1.msra.mxu0 0.0
    %1093 = vmatprep.subr.mxu0 0.0
    %1094 = vmatpush1.msra.mxu0 0.0
    %1095 = vmatprep.subr.mxu0 0.0
    %1096 = vmatpush1.msra.mxu0 0.0
    %1097 = vmatprep.subr.mxu0 0.0
    %1098 = vmatpush1.msra.mxu0 0.0
    %1099 = vmatprep.subr.mxu0 0.0
    %1100 = vmatpush1.msra.mxu0 0.0
    %1101 = vmatprep.subr.mxu0 0.0
    %1102 = vmatpush1.msra.mxu0 0.0
    %1103 = vmatprep.subr.mxu0 0.0
    %1104 = vmatpush1.msra.mxu0 0.0
    %1105 = vmatprep.subr.mxu0 0.0
    %1106 = vmatpush1.msra.mxu0 0.0
    %1107 = vmatprep.subr.mxu0 0.0
    %1108 = vmatpush1.msra.mxu0 0.0
    %1109 = vmatprep.subr.mxu0 0.0
    %1110 = vmatpush1.msra.mxu0 0.0
    %1111 = vmatprep.subr.mxu0 0.0
    %1112 = vmatpush1.msra.mxu0 0.0
    %1113 = vmatprep.subr.mxu0 0.0
    %1114 = vmatpush1.msra.mxu0 0.0
    %1115 = vmatprep.subr.mxu0 0.0
    %1116 = vmatpush1.msra.mxu0 0.0
    %1117 = vmatprep.subr.mxu0 0.0
    %1118 = vmatpush1.msra.mxu0 0.0
    %1119 = vmatprep.subr.mxu0 0.0
    %1120 = vmatpush1.msra.mxu0 0.0
    %1121 = vmatprep.subr.mxu0 0.0
    %1122 = vmatpush1.msra.mxu0 0.0
    %1123 = vmatprep.subr.mxu0 0.0
    %1124 = vmatpush1.msra.mxu0 0.0
    %1125 = vmatprep.mubr.f32.mxu0 0.0
    %1126 = vmatmul.mubr.f32.gmra.mrb[0].mxu0 %v748
    %v1127 = vpop.f32.mrb[0].mxu0
    %v1128 = vadd.f32 %v733, %v1127
    %v1129 = vpop.f32.mrb[0].mxu0
    %1130 = vdwg.mxu0
    %1131 = vmatprep.subr.mxu0 0.0
    %1132 = vmatpush1.msra.mxu0 %v692
    %1133 = vmatprep.subr.mxu0 0.0
    %1134 = vmatpush1.msra.mxu0 %v693
    %1135 = vmatprep.subr.mxu0 0.0
    %1136 = vmatpush1.msra.mxu0 %v694
    %1137 = vmatprep.subr.mxu0 0.0
    %1138 = vmatpush1.msra.mxu0 %v695
    %1139 = vmatprep.subr.mxu0 0.0
    %1140 = vmatpush1.msra.mxu0 0.0
    %1141 = vmatprep.subr.mxu0 0.0
    %1142 = vmatpush1.msra.mxu0 0.0
    %1143 = vmatprep.subr.mxu0 0.0
    %1144 = vmatpush1.msra.mxu0 0.0
    %1145 = vmatprep.subr.mxu0 0.0
    %1146 = vmatpush1.msra.mxu0 0.0
    %1147 = vmatprep.subr.mxu0 0.0
    %1148 = vmatpush1.msra.mxu0 0.0
    %1149 = vmatprep.subr.mxu0 0.0
    %1150 = vmatpush1.msra.mxu0 0.0
    %1151 = vmatprep.subr.mxu0 0.0
    %1152 = vmatpush1.msra.mxu0 0.0
    %1153 = vmatprep.subr.mxu0 0.0
    %1154 = vmatpush1.msra.mxu0 0.0
    %1155 = vmatprep.subr.mxu0 0.0
    %1156 = vmatpush1.msra.mxu0 0.0
    %1157 = vmatprep.subr.mxu0 0.0
    %1158 = vmatpush1.msra.mxu0 0.0
    %1159 = vmatprep.subr.mxu0 0.0
    %1160 = vmatpush1.msra.mxu0 0.0
    %1161 = vmatprep.subr.mxu0 0.0
    %1162 = vmatpush1.msra.mxu0 0.0
    %1163 = vmatprep.subr.mxu0 0.0
    %1164 = vmatpush1.msra.mxu0 0.0
    %1165 = vmatprep.subr.mxu0 0.0
    %1166 = vmatpush1.msra.mxu0 0.0
    %1167 = vmatprep.subr.mxu0 0.0
    %1168 = vmatpush1.msra.mxu0 0.0
    %1169 = vmatprep.subr.mxu0 0.0
    %1170 = vmatpush1.msra.mxu0 0.0
    %1171 = vmatprep.subr.mxu0 0.0
    %1172 = vmatpush1.msra.mxu0 0.0
    %1173 = vmatprep.subr.mxu0 0.0
    %1174 = vmatpush1.msra.mxu0 0.0
    %1175 = vmatprep.subr.mxu0 0.0
    %1176 = vmatpush1.msra.mxu0 0.0
    %1177 = vmatprep.subr.mxu0 0.0
    %1178 = vmatpush1.msra.mxu0 0.0
    %1179 = vmatprep.subr.mxu0 0.0
    %1180 = vmatpush1.msra.mxu0 0.0
    %1181 = vmatprep.subr.mxu0 0.0
    %1182 = vmatpush1.msra.mxu0 0.0
    %1183 = vmatprep.subr.mxu0 0.0
    %1184 = vmatpush1.msra.mxu0 0.0
    %1185 = vmatprep.subr.mxu0 0.0
    %1186 = vmatpush1.msra.mxu0 0.0
    %1187 = vmatprep.subr.mxu0 0.0
    %1188 = vmatpush1.msra.mxu0 0.0
    %1189 = vmatprep.subr.mxu0 0.0
    %1190 = vmatpush1.msra.mxu0 0.0
    %1191 = vmatprep.subr.mxu0 0.0
    %1192 = vmatpush1.msra.mxu0 0.0
    %1193 = vmatprep.subr.mxu0 0.0
    %1194 = vmatpush1.msra.mxu0 0.0
    %1195 = vmatprep.mubr.f32.mxu0 0.0
    %1196 = vmatmul.mubr.f32.gmra.mrb[0].mxu0 %v748
    %v1197 = vpop.f32.mrb[0].mxu0
    %v1198 = vadd.f32 %v741, %v1197
    %v1199 = vpop.f32.mrb[0].mxu0
    %1200 = vdwg.mxu0
    %v1201 = vadd.f32 %v988, %v1058
    %v1202 = vxor.u32 %v1201, 2147483648
    %v1203 = vmul.f32 %v1202, 1.442695
    %v1204 = vpow.pop %v1203
    %v1205 = vadd.f32 %v1204, 1.0
    %v1206 = vrcp.pop %v1205
    %v1207 = vmul.f32 1.0, %v1206
    %v1208 = vadd.f32 %v989, %v1128
    %v1209 = vxor.u32 %v1208, 2147483648
    %v1210 = vmul.f32 %v1209, 1.442695
    %v1211 = vpow.pop %v1210
    %v1212 = vadd.f32 %v1211, 1.0
    %v1213 = vrcp.pop %v1212
    %v1214 = vmul.f32 1.0, %v1213
    %v1215 = vmul.f32 %v1207, %v1198
    %v1216 = vadd.f32 %v990, %v1215
    %v1217 = vtanh.pop %v1216
    %v1218 = vsub.f32 1.0, %v1214
    %v1219 = vmul.f32 %v1218, %v1217
    %v1220 = vmul.f32 %v1214, 0.0
    %v1221 = vadd.f32 %v1219, %v1220
    %vm1222 = vcmp.gt.s32.totalorder %v743, 7
    %v1223 = vsel %vm1222, 1, 0
    %1224 = vset.pattern.permute.xlu0 0
    %1225 = vperm.xlu0 %1224, %v1223
    %v1226 = vpop.permute.xlu0 %1225
    %vm1227 = vcmp.eq.s32.totalorder %v1226, 1
    %v1228 = vsel %vm1227, %v1221, 0.0
    %vm1229 = vcmask 257024
    %1230 = vst.msk [vmem:[%s6 + $0x1c] sm:$0xf] %vm1229, %v1228
    %v1231 = vld [vmem:[#allocation2 + $0x4] sm:$0xf]
    %v1232 = vld [vmem:[#allocation3 + $0x4] sm:$0xf]
    %v1233 = vld [vmem:[#allocation4 + $0x4] sm:$0xf]
    %v1235 = vsel %vm55, %v987, 0
    %1237 = vmatprep.subr.mxu0 0.0
    %1238 = vmatpush1.msra.mxu0 %v667
    %1239 = vmatprep.subr.mxu0 0.0
    %1240 = vmatpush1.msra.mxu0 %v668
    %1241 = vmatprep.subr.mxu0 0.0
    %1242 = vmatpush1.msra.mxu0 %v669
    %1243 = vmatprep.subr.mxu0 0.0
    %1244 = vmatpush1.msra.mxu0 %v670
    %1245 = vmatprep.subr.mxu0 0.0
    %1246 = vmatpush1.msra.mxu0 0.0
    %1247 = vmatprep.subr.mxu0 0.0
    %1248 = vmatpush1.msra.mxu0 0.0
    %1249 = vmatprep.subr.mxu0 0.0
    %1250 = vmatpush1.msra.mxu0 0.0
    %1251 = vmatprep.subr.mxu0 0.0
    %1252 = vmatpush1.msra.mxu0 0.0
    %1253 = vmatprep.subr.mxu0 0.0
    %1254 = vmatpush1.msra.mxu0 0.0
    %1255 = vmatprep.subr.mxu0 0.0
    %1256 = vmatpush1.msra.mxu0 0.0
    %1257 = vmatprep.subr.mxu0 0.0
    %1258 = vmatpush1.msra.mxu0 0.0
    %1259 = vmatprep.subr.mxu0 0.0
    %1260 = vmatpush1.msra.mxu0 0.0
    %1261 = vmatprep.subr.mxu0 0.0
    %1262 = vmatpush1.msra.mxu0 0.0
    %1263 = vmatprep.subr.mxu0 0.0
    %1264 = vmatpush1.msra.mxu0 0.0
    %1265 = vmatprep.subr.mxu0 0.0
    %1266 = vmatpush1.msra.mxu0 0.0
    %1267 = vmatprep.subr.mxu0 0.0
    %1268 = vmatpush1.msra.mxu0 0.0
    %1269 = vmatprep.subr.mxu0 0.0
    %1270 = vmatpush1.msra.mxu0 0.0
    %1271 = vmatprep.subr.mxu0 0.0
    %1272 = vmatpush1.msra.mxu0 0.0
    %1273 = vmatprep.subr.mxu0 0.0
    %1274 = vmatpush1.msra.mxu0 0.0
    %1275 = vmatprep.subr.mxu0 0.0
    %1276 = vmatpush1.msra.mxu0 0.0
    %1277 = vmatprep.subr.mxu0 0.0
    %1278 = vmatpush1.msra.mxu0 0.0
    %1279 = vmatprep.subr.mxu0 0.0
    %1280 = vmatpush1.msra.mxu0 0.0
    %1281 = vmatprep.subr.mxu0 0.0
    %1282 = vmatpush1.msra.mxu0 0.0
    %1283 = vmatprep.subr.mxu0 0.0
    %1284 = vmatpush1.msra.mxu0 0.0
    %1285 = vmatprep.subr.mxu0 0.0
    %1286 = vmatpush1.msra.mxu0 0.0
    %1287 = vmatprep.subr.mxu0 0.0
    %1288 = vmatpush1.msra.mxu0 0.0
    %1289 = vmatprep.subr.mxu0 0.0
    %1290 = vmatpush1.msra.mxu0 0.0
    %1291 = vmatprep.subr.mxu0 0.0
    %1292 = vmatpush1.msra.mxu0 0.0
    %1293 = vmatprep.subr.mxu0 0.0
    %1294 = vmatpush1.msra.mxu0 0.0
    %1295 = vmatprep.subr.mxu0 0.0
    %1296 = vmatpush1.msra.mxu0 0.0
    %1297 = vmatprep.subr.mxu0 0.0
    %1298 = vmatpush1.msra.mxu0 0.0
    %1299 = vmatprep.subr.mxu0 0.0
    %1300 = vmatpush1.msra.mxu0 0.0
    %1301 = vmatprep.mubr.f32.mxu0 0.0
    %1302 = vmatmul.mubr.f32.gmra.mrb[0].mxu0 %v1235
    %v1303 = vpop.f32.mrb[0].mxu0
    %v1304 = vadd.f32 %v701, %v1303
    %v1305 = vpop.f32.mrb[0].mxu0
    %1306 = vdwg.mxu0
    %1307 = vmatprep.subr.mxu0 0.0
    %1308 = vmatpush1.msra.mxu0 %v672
    %1309 = vmatprep.subr.mxu0 0.0
    %1310 = vmatpush1.msra.mxu0 %v673
    %1311 = vmatprep.subr.mxu0 0.0
    %1312 = vmatpush1.msra.mxu0 %v674
    %1313 = vmatprep.subr.mxu0 0.0
    %1314 = vmatpush1.msra.mxu0 %v675
    %1315 = vmatprep.subr.mxu0 0.0
    %1316 = vmatpush1.msra.mxu0 0.0
    %1317 = vmatprep.subr.mxu0 0.0
    %1318 = vmatpush1.msra.mxu0 0.0
    %1319 = vmatprep.subr.mxu0 0.0
    %1320 = vmatpush1.msra.mxu0 0.0
    %1321 = vmatprep.subr.mxu0 0.0
    %1322 = vmatpush1.msra.mxu0 0.0
    %1323 = vmatprep.subr.mxu0 0.0
    %1324 = vmatpush1.msra.mxu0 0.0
    %1325 = vmatprep.subr.mxu0 0.0
    %1326 = vmatpush1.msra.mxu0 0.0
    %1327 = vmatprep.subr.mxu0 0.0
    %1328 = vmatpush1.msra.mxu0 0.0
    %1329 = vmatprep.subr.mxu0 0.0
    %1330 = vmatpush1.msra.mxu0 0.0
    %1331 = vmatprep.subr.mxu0 0.0
    %1332 = vmatpush1.msra.mxu0 0.0
    %1333 = vmatprep.subr.mxu0 0.0
    %1334 = vmatpush1.msra.mxu0 0.0
    %1335 = vmatprep.subr.mxu0 0.0
    %1336 = vmatpush1.msra.mxu0 0.0
    %1337 = vmatprep.subr.mxu0 0.0
    %1338 = vmatpush1.msra.mxu0 0.0
    %1339 = vmatprep.subr.mxu0 0.0
    %1340 = vmatpush1.msra.mxu0 0.0
    %1341 = vmatprep.subr.mxu0 0.0
    %1342 = vmatpush1.msra.mxu0 0.0
    %1343 = vmatprep.subr.mxu0 0.0
    %1344 = vmatpush1.msra.mxu0 0.0
    %1345 = vmatprep.subr.mxu0 0.0
    %1346 = vmatpush1.msra.mxu0 0.0
    %1347 = vmatprep.subr.mxu0 0.0
    %1348 = vmatpush1.msra.mxu0 0.0
    %1349 = vmatprep.subr.mxu0 0.0
    %1350 = vmatpush1.msra.mxu0 0.0
    %1351 = vmatprep.subr.mxu0 0.0
    %1352 = vmatpush1.msra.mxu0 0.0
    %1353 = vmatprep.subr.mxu0 0.0
    %1354 = vmatpush1.msra.mxu0 0.0
    %1355 = vmatprep.subr.mxu0 0.0
    %1356 = vmatpush1.msra.mxu0 0.0
    %1357 = vmatprep.subr.mxu0 0.0
    %1358 = vmatpush1.msra.mxu0 0.0
    %1359 = vmatprep.subr.mxu0 0.0
    %1360 = vmatpush1.msra.mxu0 0.0
    %1361 = vmatprep.subr.mxu0 0.0
    %1362 = vmatpush1.msra.mxu0 0.0
    %1363 = vmatprep.subr.mxu0 0.0
    %1364 = vmatpush1.msra.mxu0 0.0
    %1365 = vmatprep.subr.mxu0 0.0
    %1366 = vmatpush1.msra.mxu0 0.0
    %1367 = vmatprep.subr.mxu0 0.0
    %1368 = vmatpush1.msra.mxu0 0.0
    %1369 = vmatprep.subr.mxu0 0.0
    %1370 = vmatpush1.msra.mxu0 0.0
    %1371 = vmatprep.mubr.f32.mxu0 0.0
    %1372 = vmatmul.mubr.f32.gmra.mrb[0].mxu0 %v1235
    %v1373 = vpop.f32.mrb[0].mxu0
    %v1374 = vadd.f32 %v709, %v1373
    %v1375 = vpop.f32.mrb[0].mxu0
    %1376 = vdwg.mxu0
    %1377 = vmatprep.subr.mxu0 0.0
    %1378 = vmatpush1.msra.mxu0 %v677
    %1379 = vmatprep.subr.mxu0 0.0
    %1380 = vmatpush1.msra.mxu0 %v678
    %1381 = vmatprep.subr.mxu0 0.0
    %1382 = vmatpush1.msra.mxu0 %v679
    %1383 = vmatprep.subr.mxu0 0.0
    %1384 = vmatpush1.msra.mxu0 %v680
    %1385 = vmatprep.subr.mxu0 0.0
    %1386 = vmatpush1.msra.mxu0 0.0
    %1387 = vmatprep.subr.mxu0 0.0
    %1388 = vmatpush1.msra.mxu0 0.0
    %1389 = vmatprep.subr.mxu0 0.0
    %1390 = vmatpush1.msra.mxu0 0.0
    %1391 = vmatprep.subr.mxu0 0.0
    %1392 = vmatpush1.msra.mxu0 0.0
    %1393 = vmatprep.subr.mxu0 0.0
    %1394 = vmatpush1.msra.mxu0 0.0
    %1395 = vmatprep.subr.mxu0 0.0
    %1396 = vmatpush1.msra.mxu0 0.0
    %1397 = vmatprep.subr.mxu0 0.0
    %1398 = vmatpush1.msra.mxu0 0.0
    %1399 = vmatprep.subr.mxu0 0.0
    %1400 = vmatpush1.msra.mxu0 0.0
    %1401 = vmatprep.subr.mxu0 0.0
    %1402 = vmatpush1.msra.mxu0 0.0
    %1403 = vmatprep.subr.mxu0 0.0
    %1404 = vmatpush1.msra.mxu0 0.0
    %1405 = vmatprep.subr.mxu0 0.0
    %1406 = vmatpush1.msra.mxu0 0.0
    %1407 = vmatprep.subr.mxu0 0.0
    %1408 = vmatpush1.msra.mxu0 0.0
    %1409 = vmatprep.subr.mxu0 0.0
    %1410 = vmatpush1.msra.mxu0 0.0
    %1411 = vmatprep.subr.mxu0 0.0
    %1412 = vmatpush1.msra.mxu0 0.0
    %1413 = vmatprep.subr.mxu0 0.0
    %1414 = vmatpush1.msra.mxu0 0.0
    %1415 = vmatprep.subr.mxu0 0.0
    %1416 = vmatpush1.msra.mxu0 0.0
    %1417 = vmatprep.subr.mxu0 0.0
    %1418 = vmatpush1.msra.mxu0 0.0
    %1419 = vmatprep.subr.mxu0 0.0
    %1420 = vmatpush1.msra.mxu0 0.0
    %1421 = vmatprep.subr.mxu0 0.0
    %1422 = vmatpush1.msra.mxu0 0.0
    %1423 = vmatprep.subr.mxu0 0.0
    %1424 = vmatpush1.msra.mxu0 0.0
    %1425 = vmatprep.subr.mxu0 0.0
    %1426 = vmatpush1.msra.mxu0 0.0
    %1427 = vmatprep.subr.mxu0 0.0
    %1428 = vmatpush1.msra.mxu0 0.0
    %1429 = vmatprep.subr.mxu0 0.0
    %1430 = vmatpush1.msra.mxu0 0.0
    %1431 = vmatprep.subr.mxu0 0.0
    %1432 = vmatpush1.msra.mxu0 0.0
    %1433 = vmatprep.subr.mxu0 0.0
    %1434 = vmatpush1.msra.mxu0 0.0
    %1435 = vmatprep.subr.mxu0 0.0
    %1436 = vmatpush1.msra.mxu0 0.0
    %1437 = vmatprep.subr.mxu0 0.0
    %1438 = vmatpush1.msra.mxu0 0.0
    %1439 = vmatprep.subr.mxu0 0.0
    %1440 = vmatpush1.msra.mxu0 0.0
    %1441 = vmatprep.mubr.f32.mxu0 0.0
    %1442 = vmatmul.mubr.f32.gmra.mrb[0].mxu0 %v1235
    %v1443 = vpop.f32.mrb[0].mxu0
    %v1444 = vadd.f32 %v717, %v1443
    %v1445 = vpop.f32.mrb[0].mxu0
    %1446 = vdwg.mxu0
    %v1447 = vadd.f32 %v1231, %v1304
    %v1448 = vxor.u32 %v1447, 2147483648
    %v1449 = vmul.f32 %v1448, 1.442695
    %v1450 = vpow.pop %v1449
    %v1451 = vadd.f32 %v1450, 1.0
    %v1452 = vrcp.pop %v1451
    %v1453 = vmul.f32 1.0, %v1452
    %v1454 = vadd.f32 %v1232, %v1374
    %v1455 = vxor.u32 %v1454, 2147483648
    %v1456 = vmul.f32 %v1455, 1.442695
    %v1457 = vpow.pop %v1456
    %v1458 = vadd.f32 %v1457, 1.0
    %v1459 = vrcp.pop %v1458
    %v1460 = vmul.f32 1.0, %v1459
    %v1461 = vmul.f32 %v1453, %v1444
    %v1462 = vadd.f32 %v1233, %v1461
    %v1463 = vtanh.pop %v1462
    %v1464 = vsub.f32 1.0, %v1460
    %v1465 = vmul.f32 %v1464, %v1463
    %v1466 = vmul.f32 %v1460, %v987
    %v1467 = vadd.f32 %v1465, %v1466
    %vm1468 = vcmp.gt.s32.totalorder %v743, 1
    %v1469 = vsel %vm1468, 1, 0
    %1470 = vset.pattern.permute.xlu0 0
    %1471 = vperm.xlu0 %1470, %v1469
    %v1472 = vpop.permute.xlu0 %1471
    %vm1473 = vcmp.eq.s32.totalorder %v1472, 1
    %v1474 = vsel %vm1473, %v1467, %v987
    %v1475 = vld [vmem:[#allocation5 + $0x18] sm:$0xf]
    %v1476 = vld [vmem:[#allocation6 + $0x18] sm:$0xf]
    %v1477 = vld [vmem:[#allocation7 + $0x18] sm:$0xf]
    %v1479 = vsel %vm55, %v1228, 0
    %1481 = vmatprep.subr.mxu0 0.0
    %1482 = vmatpush1.msra.mxu0 %v682
    %1483 = vmatprep.subr.mxu0 0.0
    %1484 = vmatpush1.msra.mxu0 %v683
    %1485 = vmatprep.subr.mxu0 0.0
    %1486 = vmatpush1.msra.mxu0 %v684
    %1487 = vmatprep.subr.mxu0 0.0
    %1488 = vmatpush1.msra.mxu0 %v685
    %1489 = vmatprep.subr.mxu0 0.0
    %1490 = vmatpush1.msra.mxu0 0.0
    %1491 = vmatprep.subr.mxu0 0.0
    %1492 = vmatpush1.msra.mxu0 0.0
    %1493 = vmatprep.subr.mxu0 0.0
    %1494 = vmatpush1.msra.mxu0 0.0
    %1495 = vmatprep.subr.mxu0 0.0
    %1496 = vmatpush1.msra.mxu0 0.0
    %1497 = vmatprep.subr.mxu0 0.0
    %1498 = vmatpush1.msra.mxu0 0.0
    %1499 = vmatprep.subr.mxu0 0.0
    %1500 = vmatpush1.msra.mxu0 0.0
    %1501 = vmatprep.subr.mxu0 0.0
    %1502 = vmatpush1.msra.mxu0 0.0
    %1503 = vmatprep.subr.mxu0 0.0
    %1504 = vmatpush1.msra.mxu0 0.0
    %1505 = vmatprep.subr.mxu0 0.0
    %1506 = vmatpush1.msra.mxu0 0.0
    %1507 = vmatprep.subr.mxu0 0.0
    %1508 = vmatpush1.msra.mxu0 0.0
    %1509 = vmatprep.subr.mxu0 0.0
    %1510 = vmatpush1.msra.mxu0 0.0
    %1511 = vmatprep.subr.mxu0 0.0
    %1512 = vmatpush1.msra.mxu0 0.0
    %1513 = vmatprep.subr.mxu0 0.0
    %1514 = vmatpush1.msra.mxu0 0.0
    %1515 = vmatprep.subr.mxu0 0.0
    %1516 = vmatpush1.msra.mxu0 0.0
    %1517 = vmatprep.subr.mxu0 0.0
    %1518 = vmatpush1.msra.mxu0 0.0
    %1519 = vmatprep.subr.mxu0 0.0
    %1520 = vmatpush1.msra.mxu0 0.0
    %1521 = vmatprep.subr.mxu0 0.0
    %1522 = vmatpush1.msra.mxu0 0.0
    %1523 = vmatprep.subr.mxu0 0.0
    %1524 = vmatpush1.msra.mxu0 0.0
    %1525 = vmatprep.subr.mxu0 0.0
    %1526 = vmatpush1.msra.mxu0 0.0
    %1527 = vmatprep.subr.mxu0 0.0
    %1528 = vmatpush1.msra.mxu0 0.0
    %1529 = vmatprep.subr.mxu0 0.0
    %1530 = vmatpush1.msra.mxu0 0.0
    %1531 = vmatprep.subr.mxu0 0.0
    %1532 = vmatpush1.msra.mxu0 0.0
    %1533 = vmatprep.subr.mxu0 0.0
    %1534 = vmatpush1.msra.mxu0 0.0
    %1535 = vmatprep.subr.mxu0 0.0
    %1536 = vmatpush1.msra.mxu0 0.0
    %1537 = vmatprep.subr.mxu0 0.0
    %1538 = vmatpush1.msra.mxu0 0.0
    %1539 = vmatprep.subr.mxu0 0.0
    %1540 = vmatpush1.msra.mxu0 0.0
    %1541 = vmatprep.subr.mxu0 0.0
    %1542 = vmatpush1.msra.mxu0 0.0
    %1543 = vmatprep.subr.mxu0 0.0
    %1544 = vmatpush1.msra.mxu0 0.0
    %1545 = vmatprep.mubr.f32.mxu0 0.0
    %1546 = vmatmul.mubr.f32.gmra.mrb[0].mxu0 %v1479
    %v1547 = vpop.f32.mrb[0].mxu0
    %v1548 = vadd.f32 %v725, %v1547
    %v1549 = vpop.f32.mrb[0].mxu0
    %1550 = vdwg.mxu0
    %1551 = vmatprep.subr.mxu0 0.0
    %1552 = vmatpush1.msra.mxu0 %v687
    %1553 = vmatprep.subr.mxu0 0.0
    %1554 = vmatpush1.msra.mxu0 %v688
    %1555 = vmatprep.subr.mxu0 0.0
    %1556 = vmatpush1.msra.mxu0 %v689
    %1557 = vmatprep.subr.mxu0 0.0
    %1558 = vmatpush1.msra.mxu0 %v690
    %1559 = vmatprep.subr.mxu0 0.0
    %1560 = vmatpush1.msra.mxu0 0.0
    %1561 = vmatprep.subr.mxu0 0.0
    %1562 = vmatpush1.msra.mxu0 0.0
    %1563 = vmatprep.subr.mxu0 0.0
    %1564 = vmatpush1.msra.mxu0 0.0
    %1565 = vmatprep.subr.mxu0 0.0
    %1566 = vmatpush1.msra.mxu0 0.0
    %1567 = vmatprep.subr.mxu0 0.0
    %1568 = vmatpush1.msra.mxu0 0.0
    %1569 = vmatprep.subr.mxu0 0.0
    %1570 = vmatpush1.msra.mxu0 0.0
    %1571 = vmatprep.subr.mxu0 0.0
    %1572 = vmatpush1.msra.mxu0 0.0
    %1573 = vmatprep.subr.mxu0 0.0
    %1574 = vmatpush1.msra.mxu0 0.0
    %1575 = vmatprep.subr.mxu0 0.0
    %1576 = vmatpush1.msra.mxu0 0.0
    %1577 = vmatprep.subr.mxu0 0.0
    %1578 = vmatpush1.msra.mxu0 0.0
    %1579 = vmatprep.subr.mxu0 0.0
    %1580 = vmatpush1.msra.mxu0 0.0
    %1581 = vmatprep.subr.mxu0 0.0
    %1582 = vmatpush1.msra.mxu0 0.0
    %1583 = vmatprep.subr.mxu0 0.0
    %1584 = vmatpush1.msra.mxu0 0.0
    %1585 = vmatprep.subr.mxu0 0.0
    %1586 = vmatpush1.msra.mxu0 0.0
    %1587 = vmatprep.subr.mxu0 0.0
    %1588 = vmatpush1.msra.mxu0 0.0
    %1589 = vmatprep.subr.mxu0 0.0
    %1590 = vmatpush1.msra.mxu0 0.0
    %1591 = vmatprep.subr.mxu0 0.0
    %1592 = vmatpush1.msra.mxu0 0.0
    %1593 = vmatprep.subr.mxu0 0.0
    %1594 = vmatpush1.msra.mxu0 0.0
    %1595 = vmatprep.subr.mxu0 0.0
    %1596 = vmatpush1.msra.mxu0 0.0
    %1597 = vmatprep.subr.mxu0 0.0
    %1598 = vmatpush1.msra.mxu0 0.0
    %1599 = vmatprep.subr.mxu0 0.0
    %1600 = vmatpush1.msra.mxu0 0.0
    %1601 = vmatprep.subr.mxu0 0.0
    %1602 = vmatpush1.msra.mxu0 0.0
    %1603 = vmatprep.subr.mxu0 0.0
    %1604 = vmatpush1.msra.mxu0 0.0
    %1605 = vmatprep.subr.mxu0 0.0
    %1606 = vmatpush1.msra.mxu0 0.0
    %1607 = vmatprep.subr.mxu0 0.0
    %1608 = vmatpush1.msra.mxu0 0.0
    %1609 = vmatprep.subr.mxu0 0.0
    %1610 = vmatpush1.msra.mxu0 0.0
    %1611 = vmatprep.subr.mxu0 0.0
    %1612 = vmatpush1.msra.mxu0 0.0
    %1613 = vmatprep.subr.mxu0 0.0
    %1614 = vmatpush1.msra.mxu0 0.0
    %1615 = vmatprep.mubr.f32.mxu0 0.0
    %1616 = vmatmul.mubr.f32.gmra.mrb[0].mxu0 %v1479
    %v1617 = vpop.f32.mrb[0].mxu0
    %v1618 = vadd.f32 %v733, %v1617
    %v1619 = vpop.f32.mrb[0].mxu0
    %1620 = vdwg.mxu0
    %1621 = vmatprep.subr.mxu0 0.0
    %1622 = vmatpush1.msra.mxu0 %v692
    %1623 = vmatprep.subr.mxu0 0.0
    %1624 = vmatpush1.msra.mxu0 %v693
    %1625 = vmatprep.subr.mxu0 0.0
    %1626 = vmatpush1.msra.mxu0 %v694
    %1627 = vmatprep.subr.mxu0 0.0
    %1628 = vmatpush1.msra.mxu0 %v695
    %1629 = vmatprep.subr.mxu0 0.0
    %1630 = vmatpush1.msra.mxu0 0.0
    %1631 = vmatprep.subr.mxu0 0.0
    %1632 = vmatpush1.msra.mxu0 0.0
    %1633 = vmatprep.subr.mxu0 0.0
    %1634 = vmatpush1.msra.mxu0 0.0
    %1635 = vmatprep.subr.mxu0 0.0
    %1636 = vmatpush1.msra.mxu0 0.0
    %1637 = vmatprep.subr.mxu0 0.0
    %1638 = vmatpush1.msra.mxu0 0.0
    %1639 = vmatprep.subr.mxu0 0.0
    %1640 = vmatpush1.msra.mxu0 0.0
    %1641 = vmatprep.subr.mxu0 0.0
    %1642 = vmatpush1.msra.mxu0 0.0
    %1643 = vmatprep.subr.mxu0 0.0
    %1644 = vmatpush1.msra.mxu0 0.0
    %1645 = vmatprep.subr.mxu0 0.0
    %1646 = vmatpush1.msra.mxu0 0.0
    %1647 = vmatprep.subr.mxu0 0.0
    %1648 = vmatpush1.msra.mxu0 0.0
    %1649 = vmatprep.subr.mxu0 0.0
    %1650 = vmatpush1.msra.mxu0 0.0
    %1651 = vmatprep.subr.mxu0 0.0
    %1652 = vmatpush1.msra.mxu0 0.0
    %1653 = vmatprep.subr.mxu0 0.0
    %1654 = vmatpush1.msra.mxu0 0.0
    %1655 = vmatprep.subr.mxu0 0.0
    %1656 = vmatpush1.msra.mxu0 0.0
    %1657 = vmatprep.subr.mxu0 0.0
    %1658 = vmatpush1.msra.mxu0 0.0
    %1659 = vmatprep.subr.mxu0 0.0
    %1660 = vmatpush1.msra.mxu0 0.0
    %1661 = vmatprep.subr.mxu0 0.0
    %1662 = vmatpush1.msra.mxu0 0.0
    %1663 = vmatprep.subr.mxu0 0.0
    %1664 = vmatpush1.msra.mxu0 0.0
    %1665 = vmatprep.subr.mxu0 0.0
    %1666 = vmatpush1.msra.mxu0 0.0
    %1667 = vmatprep.subr.mxu0 0.0
    %1668 = vmatpush1.msra.mxu0 0.0
    %1669 = vmatprep.subr.mxu0 0.0
    %1670 = vmatpush1.msra.mxu0 0.0
    %1671 = vmatprep.subr.mxu0 0.0
    %1672 = vmatpush1.msra.mxu0 0.0
    %1673 = vmatprep.subr.mxu0 0.0
    %1674 = vmatpush1.msra.mxu0 0.0
    %1675 = vmatprep.subr.mxu0 0.0
    %1676 = vmatpush1.msra.mxu0 0.0
    %1677 = vmatprep.subr.mxu0 0.0
    %1678 = vmatpush1.msra.mxu0 0.0
    %1679 = vmatprep.subr.mxu0 0.0
    %1680 = vmatpush1.msra.mxu0 0.0
    %1681 = vmatprep.subr.mxu0 0.0
    %1682 = vmatpush1.msra.mxu0 0.0
    %1683 = vmatprep.subr.mxu0 0.0
    %1684 = vmatpush1.msra.mxu0 0.0
    %1685 = vmatprep.mubr.f32.mxu0 0.0
    %1686 = vmatmul.mubr.f32.gmra.mrb[0].mxu0 %v1479
    %v1687 = vpop.f32.mrb[0].mxu0
    %v1688 = vadd.f32 %v741, %v1687
    %v1689 = vpop.f32.mrb[0].mxu0
    %1690 = vdwg.mxu0
    %v1691 = vadd.f32 %v1475, %v1548
    %v1692 = vxor.u32 %v1691, 2147483648
    %v1693 = vmul.f32 %v1692, 1.442695
    %v1694 = vpow.pop %v1693
    %v1695 = vadd.f32 %v1694, 1.0
    %v1696 = vrcp.pop %v1695
    %v1697 = vmul.f32 1.0, %v1696
    %v1698 = vadd.f32 %v1476, %v1618
    %v1699 = vxor.u32 %v1698, 2147483648
    %v1700 = vmul.f32 %v1699, 1.442695
    %v1701 = vpow.pop %v1700
    %v1702 = vadd.f32 %v1701, 1.0
    %v1703 = vrcp.pop %v1702
    %v1704 = vmul.f32 1.0, %v1703
    %v1705 = vmul.f32 %v1697, %v1688
    %v1706 = vadd.f32 %v1477, %v1705
    %v1707 = vtanh.pop %v1706
    %v1708 = vsub.f32 1.0, %v1704
    %v1709 = vmul.f32 %v1708, %v1707
    %v1710 = vmul.f32 %v1704, %v1228
    %v1711 = vadd.f32 %v1709, %v1710
    %vm1712 = vcmp.gt.s32.totalorder %v743, 6
    %v1713 = vsel %vm1712, 1, 0
    %1714 = vset.pattern.permute.xlu0 0
    %1715 = vperm.xlu0 %1714, %v1713
    %v1716 = vpop.permute.xlu0 %1715
    %vm1717 = vcmp.eq.s32.totalorder %v1716, 1
    %v1718 = vsel %vm1717, %v1711, 0.0
    %1719 = vst.msk [vmem:[%s6 + $0x18] sm:$0xf] %vm1229, %v1718
    %v1720 = vsel %vm1717, %v1711, %v1228
    %v1721 = vld [vmem:[#allocation2 + $0x8] sm:$0xf]
    %v1722 = vld [vmem:[#allocation3 + $0x8] sm:$0xf]
    %v1723 = vld [vmem:[#allocation4 + $0x8] sm:$0xf]
    %v1725 = vsel %vm55, %v1474, 0
    %1727 = vmatprep.subr.mxu0 0.0
    %1728 = vmatpush1.msra.mxu0 %v667
    %1729 = vmatprep.subr.mxu0 0.0
    %1730 = vmatpush1.msra.mxu0 %v668
    %1731 = vmatprep.subr.mxu0 0.0
    %1732 = vmatpush1.msra.mxu0 %v669
    %1733 = vmatprep.subr.mxu0 0.0
    %1734 = vmatpush1.msra.mxu0 %v670
    %1735 = vmatprep.subr.mxu0 0.0
    %1736 = vmatpush1.msra.mxu0 0.0
    %1737 = vmatprep.subr.mxu0 0.0
    %1738 = vmatpush1.msra.mxu0 0.0
    %1739 = vmatprep.subr.mxu0 0.0
    %1740 = vmatpush1.msra.mxu0 0.0
    %1741 = vmatprep.subr.mxu0 0.0
    %1742 = vmatpush1.msra.mxu0 0.0
    %1743 = vmatprep.subr.mxu0 0.0
    %1744 = vmatpush1.msra.mxu0 0.0
    %1745 = vmatprep.subr.mxu0 0.0
    %1746 = vmatpush1.msra.mxu0 0.0
    %1747 = vmatprep.subr.mxu0 0.0
    %1748 = vmatpush1.msra.mxu0 0.0
    %1749 = vmatprep.subr.mxu0 0.0
    %1750 = vmatpush1.msra.mxu0 0.0
    %1751 = vmatprep.subr.mxu0 0.0
    %1752 = vmatpush1.msra.mxu0 0.0
    %1753 = vmatprep.subr.mxu0 0.0
    %1754 = vmatpush1.msra.mxu0 0.0
    %1755 = vmatprep.subr.mxu0 0.0
    %1756 = vmatpush1.msra.mxu0 0.0
    %1757 = vmatprep.subr.mxu0 0.0
    %1758 = vmatpush1.msra.mxu0 0.0
    %1759 = vmatprep.subr.mxu0 0.0
    %1760 = vmatpush1.msra.mxu0 0.0
    %1761 = vmatprep.subr.mxu0 0.0
    %1762 = vmatpush1.msra.mxu0 0.0
    %1763 = vmatprep.subr.mxu0 0.0
    %1764 = vmatpush1.msra.mxu0 0.0
    %1765 = vmatprep.subr.mxu0 0.0
    %1766 = vmatpush1.msra.mxu0 0.0
    %1767 = vmatprep.subr.mxu0 0.0
    %1768 = vmatpush1.msra.mxu0 0.0
    %1769 = vmatprep.subr.mxu0 0.0
    %1770 = vmatpush1.msra.mxu0 0.0
    %1771 = vmatprep.subr.mxu0 0.0
    %1772 = vmatpush1.msra.mxu0 0.0
    %1773 = vmatprep.subr.mxu0 0.0
    %1774 = vmatpush1.msra.mxu0 0.0
    %1775 = vmatprep.subr.mxu0 0.0
    %1776 = vmatpush1.msra.mxu0 0.0
    %1777 = vmatprep.subr.mxu0 0.0
    %1778 = vmatpush1.msra.mxu0 0.0
    %1779 = vmatprep.subr.mxu0 0.0
    %1780 = vmatpush1.msra.mxu0 0.0
    %1781 = vmatprep.subr.mxu0 0.0
    %1782 = vmatpush1.msra.mxu0 0.0
    %1783 = vmatprep.subr.mxu0 0.0
    %1784 = vmatpush1.msra.mxu0 0.0
    %1785 = vmatprep.subr.mxu0 0.0
    %1786 = vmatpush1.msra.mxu0 0.0
    %1787 = vmatprep.subr.mxu0 0.0
    %1788 = vmatpush1.msra.mxu0 0.0
    %1789 = vmatprep.subr.mxu0 0.0
    %1790 = vmatpush1.msra.mxu0 0.0
    %1791 = vmatprep.mubr.f32.mxu0 0.0
    %1792 = vmatmul.mubr.f32.gmra.mrb[0].mxu0 %v1725
    %v1793 = vpop.f32.mrb[0].mxu0
    %v1794 = vadd.f32 %v701, %v1793
    %v1795 = vpop.f32.mrb[0].mxu0
    %1796 = vdwg.mxu0
    %1797 = vmatprep.subr.mxu0 0.0
    %1798 = vmatpush1.msra.mxu0 %v672
    %1799 = vmatprep.subr.mxu0 0.0
    %1800 = vmatpush1.msra.mxu0 %v673
    %1801 = vmatprep.subr.mxu0 0.0
    %1802 = vmatpush1.msra.mxu0 %v674
    %1803 = vmatprep.subr.mxu0 0.0
    %1804 = vmatpush1.msra.mxu0 %v675
    %1805 = vmatprep.subr.mxu0 0.0
    %1806 = vmatpush1.msra.mxu0 0.0
    %1807 = vmatprep.subr.mxu0 0.0
    %1808 = vmatpush1.msra.mxu0 0.0
    %1809 = vmatprep.subr.mxu0 0.0
    %1810 = vmatpush1.msra.mxu0 0.0
    %1811 = vmatprep.subr.mxu0 0.0
    %1812 = vmatpush1.msra.mxu0 0.0
    %1813 = vmatprep.subr.mxu0 0.0
    %1814 = vmatpush1.msra.mxu0 0.0
    %1815 = vmatprep.subr.mxu0 0.0
    %1816 = vmatpush1.msra.mxu0 0.0
    %1817 = vmatprep.subr.mxu0 0.0
    %1818 = vmatpush1.msra.mxu0 0.0
    %1819 = vmatprep.subr.mxu0 0.0
    %1820 = vmatpush1.msra.mxu0 0.0
    %1821 = vmatprep.subr.mxu0 0.0
    %1822 = vmatpush1.msra.mxu0 0.0
    %1823 = vmatprep.subr.mxu0 0.0
    %1824 = vmatpush1.msra.mxu0 0.0
    %1825 = vmatprep.subr.mxu0 0.0
    %1826 = vmatpush1.msra.mxu0 0.0
    %1827 = vmatprep.subr.mxu0 0.0
    %1828 = vmatpush1.msra.mxu0 0.0
    %1829 = vmatprep.subr.mxu0 0.0
    %1830 = vmatpush1.msra.mxu0 0.0
    %1831 = vmatprep.subr.mxu0 0.0
    %1832 = vmatpush1.msra.mxu0 0.0
    %1833 = vmatprep.subr.mxu0 0.0
    %1834 = vmatpush1.msra.mxu0 0.0
    %1835 = vmatprep.subr.mxu0 0.0
    %1836 = vmatpush1.msra.mxu0 0.0
    %1837 = vmatprep.subr.mxu0 0.0
    %1838 = vmatpush1.msra.mxu0 0.0
    %1839 = vmatprep.subr.mxu0 0.0
    %1840 = vmatpush1.msra.mxu0 0.0
    %1841 = vmatprep.subr.mxu0 0.0
    %1842 = vmatpush1.msra.mxu0 0.0
    %1843 = vmatprep.subr.mxu0 0.0
    %1844 = vmatpush1.msra.mxu0 0.0
    %1845 = vmatprep.subr.mxu0 0.0
    %1846 = vmatpush1.msra.mxu0 0.0
    %1847 = vmatprep.subr.mxu0 0.0
    %1848 = vmatpush1.msra.mxu0 0.0
    %1849 = vmatprep.subr.mxu0 0.0
    %1850 = vmatpush1.msra.mxu0 0.0
    %1851 = vmatprep.subr.mxu0 0.0
    %1852 = vmatpush1.msra.mxu0 0.0
    %1853 = vmatprep.subr.mxu0 0.0
    %1854 = vmatpush1.msra.mxu0 0.0
    %1855 = vmatprep.subr.mxu0 0.0
    %1856 = vmatpush1.msra.mxu0 0.0
    %1857 = vmatprep.subr.mxu0 0.0
    %1858 = vmatpush1.msra.mxu0 0.0
    %1859 = vmatprep.subr.mxu0 0.0
    %1860 = vmatpush1.msra.mxu0 0.0
    %1861 = vmatprep.mubr.f32.mxu0 0.0
    %1862 = vmatmul.mubr.f32.gmra.mrb[0].mxu0 %v1725
    %v1863 = vpop.f32.mrb[0].mxu0
    %v1864 = vadd.f32 %v709, %v1863
    %v1865 = vpop.f32.mrb[0].mxu0
    %1866 = vdwg.mxu0
    %1867 = vmatprep.subr.mxu0 0.0
    %1868 = vmatpush1.msra.mxu0 %v677
    %1869 = vmatprep.subr.mxu0 0.0
    %1870 = vmatpush1.msra.mxu0 %v678
    %1871 = vmatprep.subr.mxu0 0.0
    %1872 = vmatpush1.msra.mxu0 %v679
    %1873 = vmatprep.subr.mxu0 0.0
    %1874 = vmatpush1.msra.mxu0 %v680
    %1875 = vmatprep.subr.mxu0 0.0
    %1876 = vmatpush1.msra.mxu0 0.0
    %1877 = vmatprep.subr.mxu0 0.0
    %1878 = vmatpush1.msra.mxu0 0.0
    %1879 = vmatprep.subr.mxu0 0.0
    %1880 = vmatpush1.msra.mxu0 0.0
    %1881 = vmatprep.subr.mxu0 0.0
    %1882 = vmatpush1.msra.mxu0 0.0
    %1883 = vmatprep.subr.mxu0 0.0
    %1884 = vmatpush1.msra.mxu0 0.0
    %1885 = vmatprep.subr.mxu0 0.0
    %1886 = vmatpush1.msra.mxu0 0.0
    %1887 = vmatprep.subr.mxu0 0.0
    %1888 = vmatpush1.msra.mxu0 0.0
    %1889 = vmatprep.subr.mxu0 0.0
    %1890 = vmatpush1.msra.mxu0 0.0
    %1891 = vmatprep.subr.mxu0 0.0
    %1892 = vmatpush1.msra.mxu0 0.0
    %1893 = vmatprep.subr.mxu0 0.0
    %1894 = vmatpush1.msra.mxu0 0.0
    %1895 = vmatprep.subr.mxu0 0.0
    %1896 = vmatpush1.msra.mxu0 0.0
    %1897 = vmatprep.subr.mxu0 0.0
    %1898 = vmatpush1.msra.mxu0 0.0
    %1899 = vmatprep.subr.mxu0 0.0
    %1900 = vmatpush1.msra.mxu0 0.0
    %1901 = vmatprep.subr.mxu0 0.0
    %1902 = vmatpush1.msra.mxu0 0.0
    %1903 = vmatprep.subr.mxu0 0.0
    %1904 = vmatpush1.msra.mxu0 0.0
    %1905 = vmatprep.subr.mxu0 0.0
    %1906 = vmatpush1.msra.mxu0 0.0
    %1907 = vmatprep.subr.mxu0 0.0
    %1908 = vmatpush1.msra.mxu0 0.0
    %1909 = vmatprep.subr.mxu0 0.0
    %1910 = vmatpush1.msra.mxu0 0.0
    %1911 = vmatprep.subr.mxu0 0.0
    %1912 = vmatpush1.msra.mxu0 0.0
    %1913 = vmatprep.subr.mxu0 0.0
    %1914 = vmatpush1.msra.mxu0 0.0
    %1915 = vmatprep.subr.mxu0 0.0
    %1916 = vmatpush1.msra.mxu0 0.0
    %1917 = vmatprep.subr.mxu0 0.0
    %1918 = vmatpush1.msra.mxu0 0.0
    %1919 = vmatprep.subr.mxu0 0.0
    %1920 = vmatpush1.msra.mxu0 0.0
    %1921 = vmatprep.subr.mxu0 0.0
    %1922 = vmatpush1.msra.mxu0 0.0
    %1923 = vmatprep.subr.mxu0 0.0
    %1924 = vmatpush1.msra.mxu0 0.0
    %1925 = vmatprep.subr.mxu0 0.0
    %1926 = vmatpush1.msra.mxu0 0.0
    %1927 = vmatprep.subr.mxu0 0.0
    %1928 = vmatpush1.msra.mxu0 0.0
    %1929 = vmatprep.subr.mxu0 0.0
    %1930 = vmatpush1.msra.mxu0 0.0
    %1931 = vmatprep.mubr.f32.mxu0 0.0
    %1932 = vmatmul.mubr.f32.gmra.mrb[0].mxu0 %v1725
    %v1933 = vpop.f32.mrb[0].mxu0
    %v1934 = vadd.f32 %v717, %v1933
    %v1935 = vpop.f32.mrb[0].mxu0
    %1936 = vdwg.mxu0
    %v1937 = vadd.f32 %v1721, %v1794
    %v1938 = vxor.u32 %v1937, 2147483648
    %v1939 = vmul.f32 %v1938, 1.442695
    %v1940 = vpow.pop %v1939
    %v1941 = vadd.f32 %v1940, 1.0
    %v1942 = vrcp.pop %v1941
    %v1943 = vmul.f32 1.0, %v1942
    %v1944 = vadd.f32 %v1722, %v1864
    %v1945 = vxor.u32 %v1944, 2147483648
    %v1946 = vmul.f32 %v1945, 1.442695
    %v1947 = vpow.pop %v1946
    %v1948 = vadd.f32 %v1947, 1.0
    %v1949 = vrcp.pop %v1948
    %v1950 = vmul.f32 1.0, %v1949
    %v1951 = vmul.f32 %v1943, %v1934
    %v1952 = vadd.f32 %v1723, %v1951
    %v1953 = vtanh.pop %v1952
    %v1954 = vsub.f32 1.0, %v1950
    %v1955 = vmul.f32 %v1954, %v1953
    %v1956 = vmul.f32 %v1950, %v1474
    %v1957 = vadd.f32 %v1955, %v1956
    %vm1958 = vcmp.gt.s32.totalorder %v743, 2
    %v1959 = vsel %vm1958, 1, 0
    %1960 = vset.pattern.permute.xlu0 0
    %1961 = vperm.xlu0 %1960, %v1959
    %v1962 = vpop.permute.xlu0 %1961
    %vm1963 = vcmp.eq.s32.totalorder %v1962, 1
    %v1964 = vsel %vm1963, %v1957, %v1474
    %v1965 = vld [vmem:[#allocation5 + $0x14] sm:$0xf]
    %v1966 = vld [vmem:[#allocation6 + $0x14] sm:$0xf]
    %v1967 = vld [vmem:[#allocation7 + $0x14] sm:$0xf]
    %v1969 = vsel %vm55, %v1720, 0
    %1971 = vmatprep.subr.mxu0 0.0
    %1972 = vmatpush1.msra.mxu0 %v682
    %1973 = vmatprep.subr.mxu0 0.0
    %1974 = vmatpush1.msra.mxu0 %v683
    %1975 = vmatprep.subr.mxu0 0.0
    %1976 = vmatpush1.msra.mxu0 %v684
    %1977 = vmatprep.subr.mxu0 0.0
    %1978 = vmatpush1.msra.mxu0 %v685
    %1979 = vmatprep.subr.mxu0 0.0
    %1980 = vmatpush1.msra.mxu0 0.0
    %1981 = vmatprep.subr.mxu0 0.0
    %1982 = vmatpush1.msra.mxu0 0.0
    %1983 = vmatprep.subr.mxu0 0.0
    %1984 = vmatpush1.msra.mxu0 0.0
    %1985 = vmatprep.subr.mxu0 0.0
    %1986 = vmatpush1.msra.mxu0 0.0
    %1987 = vmatprep.subr.mxu0 0.0
    %1988 = vmatpush1.msra.mxu0 0.0
    %1989 = vmatprep.subr.mxu0 0.0
    %1990 = vmatpush1.msra.mxu0 0.0
    %1991 = vmatprep.subr.mxu0 0.0
    %1992 = vmatpush1.msra.mxu0 0.0
    %1993 = vmatprep.subr.mxu0 0.0
    %1994 = vmatpush1.msra.mxu0 0.0
    %1995 = vmatprep.subr.mxu0 0.0
    %1996 = vmatpush1.msra.mxu0 0.0
    %1997 = vmatprep.subr.mxu0 0.0
    %1998 = vmatpush1.msra.mxu0 0.0
    %1999 = vmatprep.subr.mxu0 0.0
    %2000 = vmatpush1.msra.mxu0 0.0
    %2001 = vmatprep.subr.mxu0 0.0
    %2002 = vmatpush1.msra.mxu0 0.0
    %2003 = vmatprep.subr.mxu0 0.0
    %2004 = vmatpush1.msra.mxu0 0.0
    %2005 = vmatprep.subr.mxu0 0.0
    %2006 = vmatpush1.msra.mxu0 0.0
    %2007 = vmatprep.subr.mxu0 0.0
    %2008 = vmatpush1.msra.mxu0 0.0
    %2009 = vmatprep.subr.mxu0 0.0
    %2010 = vmatpush1.msra.mxu0 0.0
    %2011 = vmatprep.subr.mxu0 0.0
    %2012 = vmatpush1.msra.mxu0 0.0
    %2013 = vmatprep.subr.mxu0 0.0
    %2014 = vmatpush1.msra.mxu0 0.0
    %2015 = vmatprep.subr.mxu0 0.0
    %2016 = vmatpush1.msra.mxu0 0.0
    %2017 = vmatprep.subr.mxu0 0.0
    %2018 = vmatpush1.msra.mxu0 0.0
    %2019 = vmatprep.subr.mxu0 0.0
    %2020 = vmatpush1.msra.mxu0 0.0
    %2021 = vmatprep.subr.mxu0 0.0
    %2022 = vmatpush1.msra.mxu0 0.0
    %2023 = vmatprep.subr.mxu0 0.0
    %2024 = vmatpush1.msra.mxu0 0.0
    %2025 = vmatprep.subr.mxu0 0.0
    %2026 = vmatpush1.msra.mxu0 0.0
    %2027 = vmatprep.subr.mxu0 0.0
    %2028 = vmatpush1.msra.mxu0 0.0
    %2029 = vmatprep.subr.mxu0 0.0
    %2030 = vmatpush1.msra.mxu0 0.0
    %2031 = vmatprep.subr.mxu0 0.0
    %2032 = vmatpush1.msra.mxu0 0.0
    %2033 = vmatprep.subr.mxu0 0.0
    %2034 = vmatpush1.msra.mxu0 0.0
    %2035 = vmatprep.mubr.f32.mxu0 0.0
    %2036 = vmatmul.mubr.f32.gmra.mrb[0].mxu0 %v1969
    %v2037 = vpop.f32.mrb[0].mxu0
    %v2038 = vadd.f32 %v725, %v2037
    %v2039 = vpop.f32.mrb[0].mxu0
    %2040 = vdwg.mxu0
    %2041 = vmatprep.subr.mxu0 0.0
    %2042 = vmatpush1.msra.mxu0 %v687
    %2043 = vmatprep.subr.mxu0 0.0
    %2044 = vmatpush1.msra.mxu0 %v688
    %2045 = vmatprep.subr.mxu0 0.0
    %2046 = vmatpush1.msra.mxu0 %v689
    %2047 = vmatprep.subr.mxu0 0.0
    %2048 = vmatpush1.msra.mxu0 %v690
    %2049 = vmatprep.subr.mxu0 0.0
    %2050 = vmatpush1.msra.mxu0 0.0
    %2051 = vmatprep.subr.mxu0 0.0
    %2052 = vmatpush1.msra.mxu0 0.0
    %2053 = vmatprep.subr.mxu0 0.0
    %2054 = vmatpush1.msra.mxu0 0.0
    %2055 = vmatprep.subr.mxu0 0.0
    %2056 = vmatpush1.msra.mxu0 0.0
    %2057 = vmatprep.subr.mxu0 0.0
    %2058 = vmatpush1.msra.mxu0 0.0
    %2059 = vmatprep.subr.mxu0 0.0
    %2060 = vmatpush1.msra.mxu0 0.0
    %2061 = vmatprep.subr.mxu0 0.0
    %2062 = vmatpush1.msra.mxu0 0.0
    %2063 = vmatprep.subr.mxu0 0.0
    %2064 = vmatpush1.msra.mxu0 0.0
    %2065 = vmatprep.subr.mxu0 0.0
    %2066 = vmatpush1.msra.mxu0 0.0
    %2067 = vmatprep.subr.mxu0 0.0
    %2068 = vmatpush1.msra.mxu0 0.0
    %2069 = vmatprep.subr.mxu0 0.0
    %2070 = vmatpush1.msra.mxu0 0.0
    %2071 = vmatprep.subr.mxu0 0.0
    %2072 = vmatpush1.msra.mxu0 0.0
    %2073 = vmatprep.subr.mxu0 0.0
    %2074 = vmatpush1.msra.mxu0 0.0
    %2075 = vmatprep.subr.mxu0 0.0
    %2076 = vmatpush1.msra.mxu0 0.0
    %2077 = vmatprep.subr.mxu0 0.0
    %2078 = vmatpush1.msra.mxu0 0.0
    %2079 = vmatprep.subr.mxu0 0.0
    %2080 = vmatpush1.msra.mxu0 0.0
    %2081 = vmatprep.subr.mxu0 0.0
    %2082 = vmatpush1.msra.mxu0 0.0
    %2083 = vmatprep.subr.mxu0 0.0
    %2084 = vmatpush1.msra.mxu0 0.0
    %2085 = vmatprep.subr.mxu0 0.0
    %2086 = vmatpush1.msra.mxu0 0.0
    %2087 = vmatprep.subr.mxu0 0.0
    %2088 = vmatpush1.msra.mxu0 0.0
    %2089 = vmatprep.subr.mxu0 0.0
    %2090 = vmatpush1.msra.mxu0 0.0
    %2091 = vmatprep.subr.mxu0 0.0
    %2092 = vmatpush1.msra.mxu0 0.0
    %2093 = vmatprep.subr.mxu0 0.0
    %2094 = vmatpush1.msra.mxu0 0.0
    %2095 = vmatprep.subr.mxu0 0.0
    %2096 = vmatpush1.msra.mxu0 0.0
    %2097 = vmatprep.subr.mxu0 0.0
    %2098 = vmatpush1.msra.mxu0 0.0
    %2099 = vmatprep.subr.mxu0 0.0
    %2100 = vmatpush1.msra.mxu0 0.0
    %2101 = vmatprep.subr.mxu0 0.0
    %2102 = vmatpush1.msra.mxu0 0.0
    %2103 = vmatprep.subr.mxu0 0.0
    %2104 = vmatpush1.msra.mxu0 0.0
    %2105 = vmatprep.mubr.f32.mxu0 0.0
    %2106 = vmatmul.mubr.f32.gmra.mrb[0].mxu0 %v1969
    %v2107 = vpop.f32.mrb[0].mxu0
    %v2108 = vadd.f32 %v733, %v2107
    %v2109 = vpop.f32.mrb[0].mxu0
    %2110 = vdwg.mxu0
    %2111 = vmatprep.subr.mxu0 0.0
    %2112 = vmatpush1.msra.mxu0 %v692
    %2113 = vmatprep.subr.mxu0 0.0
    %2114 = vmatpush1.msra.mxu0 %v693
    %2115 = vmatprep.subr.mxu0 0.0
    %2116 = vmatpush1.msra.mxu0 %v694
    %2117 = vmatprep.subr.mxu0 0.0
    %2118 = vmatpush1.msra.mxu0 %v695
    %2119 = vmatprep.subr.mxu0 0.0
    %2120 = vmatpush1.msra.mxu0 0.0
    %2121 = vmatprep.subr.mxu0 0.0
    %2122 = vmatpush1.msra.mxu0 0.0
    %2123 = vmatprep.subr.mxu0 0.0
    %2124 = vmatpush1.msra.mxu0 0.0
    %2125 = vmatprep.subr.mxu0 0.0
    %2126 = vmatpush1.msra.mxu0 0.0
    %2127 = vmatprep.subr.mxu0 0.0
    %2128 = vmatpush1.msra.mxu0 0.0
    %2129 = vmatprep.subr.mxu0 0.0
    %2130 = vmatpush1.msra.mxu0 0.0
    %2131 = vmatprep.subr.mxu0 0.0
    %2132 = vmatpush1.msra.mxu0 0.0
    %2133 = vmatprep.subr.mxu0 0.0
    %2134 = vmatpush1.msra.mxu0 0.0
    %2135 = vmatprep.subr.mxu0 0.0
    %2136 = vmatpush1.msra.mxu0 0.0
    %2137 = vmatprep.subr.mxu0 0.0
    %2138 = vmatpush1.msra.mxu0 0.0
    %2139 = vmatprep.subr.mxu0 0.0
    %2140 = vmatpush1.msra.mxu0 0.0
    %2141 = vmatprep.subr.mxu0 0.0
    %2142 = vmatpush1.msra.mxu0 0.0
    %2143 = vmatprep.subr.mxu0 0.0
    %2144 = vmatpush1.msra.mxu0 0.0
    %2145 = vmatprep.subr.mxu0 0.0
    %2146 = vmatpush1.msra.mxu0 0.0
    %2147 = vmatprep.subr.mxu0 0.0
    %2148 = vmatpush1.msra.mxu0 0.0
    %2149 = vmatprep.subr.mxu0 0.0
    %2150 = vmatpush1.msra.mxu0 0.0
    %2151 = vmatprep.subr.mxu0 0.0
    %2152 = vmatpush1.msra.mxu0 0.0
    %2153 = vmatprep.subr.mxu0 0.0
    %2154 = vmatpush1.msra.mxu0 0.0
    %2155 = vmatprep.subr.mxu0 0.0
    %2156 = vmatpush1.msra.mxu0 0.0
    %2157 = vmatprep.subr.mxu0 0.0
    %2158 = vmatpush1.msra.mxu0 0.0
    %2159 = vmatprep.subr.mxu0 0.0
    %2160 = vmatpush1.msra.mxu0 0.0
    %2161 = vmatprep.subr.mxu0 0.0
    %2162 = vmatpush1.msra.mxu0 0.0
    %2163 = vmatprep.subr.mxu0 0.0
    %2164 = vmatpush1.msra.mxu0 0.0
    %2165 = vmatprep.subr.mxu0 0.0
    %2166 = vmatpush1.msra.mxu0 0.0
    %2167 = vmatprep.subr.mxu0 0.0
    %2168 = vmatpush1.msra.mxu0 0.0
    %2169 = vmatprep.subr.mxu0 0.0
    %2170 = vmatpush1.msra.mxu0 0.0
    %2171 = vmatprep.subr.mxu0 0.0
    %2172 = vmatpush1.msra.mxu0 0.0
    %2173 = vmatprep.subr.mxu0 0.0
    %2174 = vmatpush1.msra.mxu0 0.0
    %2175 = vmatprep.mubr.f32.mxu0 0.0
    %2176 = vmatmul.mubr.f32.gmra.mrb[0].mxu0 %v1969
    %v2177 = vpop.f32.mrb[0].mxu0
    %v2178 = vadd.f32 %v741, %v2177
    %v2179 = vpop.f32.mrb[0].mxu0
    %2180 = vdwg.mxu0
    %v2181 = vadd.f32 %v1965, %v2038
    %v2182 = vxor.u32 %v2181, 2147483648
    %v2183 = vmul.f32 %v2182, 1.442695
    %v2184 = vpow.pop %v2183
    %v2185 = vadd.f32 %v2184, 1.0
    %v2186 = vrcp.pop %v2185
    %v2187 = vmul.f32 1.0, %v2186
    %v2188 = vadd.f32 %v1966, %v2108
    %v2189 = vxor.u32 %v2188, 2147483648
    %v2190 = vmul.f32 %v2189, 1.442695
    %v2191 = vpow.pop %v2190
    %v2192 = vadd.f32 %v2191, 1.0
    %v2193 = vrcp.pop %v2192
    %v2194 = vmul.f32 1.0, %v2193
    %v2195 = vmul.f32 %v2187, %v2178
    %v2196 = vadd.f32 %v1967, %v2195
    %v2197 = vtanh.pop %v2196
    %v2198 = vsub.f32 1.0, %v2194
    %v2199 = vmul.f32 %v2198, %v2197
    %v2200 = vmul.f32 %v2194, %v1720
    %v2201 = vadd.f32 %v2199, %v2200
    %vm2202 = vcmp.gt.s32.totalorder %v743, 5
    %v2203 = vsel %vm2202, 1, 0
    %2204 = vset.pattern.permute.xlu0 0
    %2205 = vperm.xlu0 %2204, %v2203
    %v2206 = vpop.permute.xlu0 %2205
    %vm2207 = vcmp.eq.s32.totalorder %v2206, 1
    %v2208 = vsel %vm2207, %v2201, 0.0
    %2209 = vst.msk [vmem:[%s6 + $0x14] sm:$0xf] %vm1229, %v2208
    %v2210 = vsel %vm2207, %v2201, %v1720
    %v2211 = vld [vmem:[#allocation2 + $0xc] sm:$0xf]
    %v2212 = vld [vmem:[#allocation3 + $0xc] sm:$0xf]
    %v2213 = vld [vmem:[#allocation4 + $0xc] sm:$0xf]
    %v2215 = vsel %vm55, %v1964, 0
    %2217 = vmatprep.subr.mxu0 0.0
    %2218 = vmatpush1.msra.mxu0 %v667
    %2219 = vmatprep.subr.mxu0 0.0
    %2220 = vmatpush1.msra.mxu0 %v668
    %2221 = vmatprep.subr.mxu0 0.0
    %2222 = vmatpush1.msra.mxu0 %v669
    %2223 = vmatprep.subr.mxu0 0.0
    %2224 = vmatpush1.msra.mxu0 %v670
    %2225 = vmatprep.subr.mxu0 0.0
    %2226 = vmatpush1.msra.mxu0 0.0
    %2227 = vmatprep.subr.mxu0 0.0
    %2228 = vmatpush1.msra.mxu0 0.0
    %2229 = vmatprep.subr.mxu0 0.0
    %2230 = vmatpush1.msra.mxu0 0.0
    %2231 = vmatprep.subr.mxu0 0.0
    %2232 = vmatpush1.msra.mxu0 0.0
    %2233 = vmatprep.subr.mxu0 0.0
    %2234 = vmatpush1.msra.mxu0 0.0
    %2235 = vmatprep.subr.mxu0 0.0
    %2236 = vmatpush1.msra.mxu0 0.0
    %2237 = vmatprep.subr.mxu0 0.0
    %2238 = vmatpush1.msra.mxu0 0.0
    %2239 = vmatprep.subr.mxu0 0.0
    %2240 = vmatpush1.msra.mxu0 0.0
    %2241 = vmatprep.subr.mxu0 0.0
    %2242 = vmatpush1.msra.mxu0 0.0
    %2243 = vmatprep.subr.mxu0 0.0
    %2244 = vmatpush1.msra.mxu0 0.0
    %2245 = vmatprep.subr.mxu0 0.0
    %2246 = vmatpush1.msra.mxu0 0.0
    %2247 = vmatprep.subr.mxu0 0.0
    %2248 = vmatpush1.msra.mxu0 0.0
    %2249 = vmatprep.subr.mxu0 0.0
    %2250 = vmatpush1.msra.mxu0 0.0
    %2251 = vmatprep.subr.mxu0 0.0
    %2252 = vmatpush1.msra.mxu0 0.0
    %2253 = vmatprep.subr.mxu0 0.0
    %2254 = vmatpush1.msra.mxu0 0.0
    %2255 = vmatprep.subr.mxu0 0.0
    %2256 = vmatpush1.msra.mxu0 0.0
    %2257 = vmatprep.subr.mxu0 0.0
    %2258 = vmatpush1.msra.mxu0 0.0
    %2259 = vmatprep.subr.mxu0 0.0
    %2260 = vmatpush1.msra.mxu0 0.0
    %2261 = vmatprep.subr.mxu0 0.0
    %2262 = vmatpush1.msra.mxu0 0.0
    %2263 = vmatprep.subr.mxu0 0.0
    %2264 = vmatpush1.msra.mxu0 0.0
    %2265 = vmatprep.subr.mxu0 0.0
    %2266 = vmatpush1.msra.mxu0 0.0
    %2267 = vmatprep.subr.mxu0 0.0
    %2268 = vmatpush1.msra.mxu0 0.0
    %2269 = vmatprep.subr.mxu0 0.0
    %2270 = vmatpush1.msra.mxu0 0.0
    %2271 = vmatprep.subr.mxu0 0.0
    %2272 = vmatpush1.msra.mxu0 0.0
    %2273 = vmatprep.subr.mxu0 0.0
    %2274 = vmatpush1.msra.mxu0 0.0
    %2275 = vmatprep.subr.mxu0 0.0
    %2276 = vmatpush1.msra.mxu0 0.0
    %2277 = vmatprep.subr.mxu0 0.0
    %2278 = vmatpush1.msra.mxu0 0.0
    %2279 = vmatprep.subr.mxu0 0.0
    %2280 = vmatpush1.msra.mxu0 0.0
    %2281 = vmatprep.mubr.f32.mxu0 0.0
    %2282 = vmatmul.mubr.f32.gmra.mrb[0].mxu0 %v2215
    %v2283 = vpop.f32.mrb[0].mxu0
    %v2284 = vadd.f32 %v701, %v2283
    %v2285 = vpop.f32.mrb[0].mxu0
    %2286 = vdwg.mxu0
    %2287 = vmatprep.subr.mxu0 0.0
    %2288 = vmatpush1.msra.mxu0 %v672
    %2289 = vmatprep.subr.mxu0 0.0
    %2290 = vmatpush1.msra.mxu0 %v673
    %2291 = vmatprep.subr.mxu0 0.0
    %2292 = vmatpush1.msra.mxu0 %v674
    %2293 = vmatprep.subr.mxu0 0.0
    %2294 = vmatpush1.msra.mxu0 %v675
    %2295 = vmatprep.subr.mxu0 0.0
    %2296 = vmatpush1.msra.mxu0 0.0
    %2297 = vmatprep.subr.mxu0 0.0
    %2298 = vmatpush1.msra.mxu0 0.0
    %2299 = vmatprep.subr.mxu0 0.0
    %2300 = vmatpush1.msra.mxu0 0.0
    %2301 = vmatprep.subr.mxu0 0.0
    %2302 = vmatpush1.msra.mxu0 0.0
    %2303 = vmatprep.subr.mxu0 0.0
    %2304 = vmatpush1.msra.mxu0 0.0
    %2305 = vmatprep.subr.mxu0 0.0
    %2306 = vmatpush1.msra.mxu0 0.0
    %2307 = vmatprep.subr.mxu0 0.0
    %2308 = vmatpush1.msra.mxu0 0.0
    %2309 = vmatprep.subr.mxu0 0.0
    %2310 = vmatpush1.msra.mxu0 0.0
    %2311 = vmatprep.subr.mxu0 0.0
    %2312 = vmatpush1.msra.mxu0 0.0
    %2313 = vmatprep.subr.mxu0 0.0
    %2314 = vmatpush1.msra.mxu0 0.0
    %2315 = vmatprep.subr.mxu0 0.0
    %2316 = vmatpush1.msra.mxu0 0.0
    %2317 = vmatprep.subr.mxu0 0.0
    %2318 = vmatpush1.msra.mxu0 0.0
    %2319 = vmatprep.subr.mxu0 0.0
    %2320 = vmatpush1.msra.mxu0 0.0
    %2321 = vmatprep.subr.mxu0 0.0
    %2322 = vmatpush1.msra.mxu0 0.0
    %2323 = vmatprep.subr.mxu0 0.0
    %2324 = vmatpush1.msra.mxu0 0.0
    %2325 = vmatprep.subr.mxu0 0.0
    %2326 = vmatpush1.msra.mxu0 0.0
    %2327 = vmatprep.subr.mxu0 0.0
    %2328 = vmatpush1.msra.mxu0 0.0
    %2329 = vmatprep.subr.mxu0 0.0
    %2330 = vmatpush1.msra.mxu0 0.0
    %2331 = vmatprep.subr.mxu0 0.0
    %2332 = vmatpush1.msra.mxu0 0.0
    %2333 = vmatprep.subr.mxu0 0.0
    %2334 = vmatpush1.msra.mxu0 0.0
    %2335 = vmatprep.subr.mxu0 0.0
    %2336 = vmatpush1.msra.mxu0 0.0
    %2337 = vmatprep.subr.mxu0 0.0
    %2338 = vmatpush1.msra.mxu0 0.0
    %2339 = vmatprep.subr.mxu0 0.0
    %2340 = vmatpush1.msra.mxu0 0.0
    %2341 = vmatprep.subr.mxu0 0.0
    %2342 = vmatpush1.msra.mxu0 0.0
    %2343 = vmatprep.subr.mxu0 0.0
    %2344 = vmatpush1.msra.mxu0 0.0
    %2345 = vmatprep.subr.mxu0 0.0
    %2346 = vmatpush1.msra.mxu0 0.0
    %2347 = vmatprep.subr.mxu0 0.0
    %2348 = vmatpush1.msra.mxu0 0.0
    %2349 = vmatprep.subr.mxu0 0.0
    %2350 = vmatpush1.msra.mxu0 0.0
    %2351 = vmatprep.mubr.f32.mxu0 0.0
    %2352 = vmatmul.mubr.f32.gmra.mrb[0].mxu0 %v2215
    %v2353 = vpop.f32.mrb[0].mxu0
    %v2354 = vadd.f32 %v709, %v2353
    %v2355 = vpop.f32.mrb[0].mxu0
    %2356 = vdwg.mxu0
    %2357 = vmatprep.subr.mxu0 0.0
    %2358 = vmatpush1.msra.mxu0 %v677
    %2359 = vmatprep.subr.mxu0 0.0
    %2360 = vmatpush1.msra.mxu0 %v678
    %2361 = vmatprep.subr.mxu0 0.0
    %2362 = vmatpush1.msra.mxu0 %v679
    %2363 = vmatprep.subr.mxu0 0.0
    %2364 = vmatpush1.msra.mxu0 %v680
    %2365 = vmatprep.subr.mxu0 0.0
    %2366 = vmatpush1.msra.mxu0 0.0
    %2367 = vmatprep.subr.mxu0 0.0
    %2368 = vmatpush1.msra.mxu0 0.0
    %2369 = vmatprep.subr.mxu0 0.0
    %2370 = vmatpush1.msra.mxu0 0.0
    %2371 = vmatprep.subr.mxu0 0.0
    %2372 = vmatpush1.msra.mxu0 0.0
    %2373 = vmatprep.subr.mxu0 0.0
    %2374 = vmatpush1.msra.mxu0 0.0
    %2375 = vmatprep.subr.mxu0 0.0
    %2376 = vmatpush1.msra.mxu0 0.0
    %2377 = vmatprep.subr.mxu0 0.0
    %2378 = vmatpush1.msra.mxu0 0.0
    %2379 = vmatprep.subr.mxu0 0.0
    %2380 = vmatpush1.msra.mxu0 0.0
    %2381 = vmatprep.subr.mxu0 0.0
    %2382 = vmatpush1.msra.mxu0 0.0
    %2383 = vmatprep.subr.mxu0 0.0
    %2384 = vmatpush1.msra.mxu0 0.0
    %2385 = vmatprep.subr.mxu0 0.0
    %2386 = vmatpush1.msra.mxu0 0.0
    %2387 = vmatprep.subr.mxu0 0.0
    %2388 = vmatpush1.msra.mxu0 0.0
    %2389 = vmatprep.subr.mxu0 0.0
    %2390 = vmatpush1.msra.mxu0 0.0
    %2391 = vmatprep.subr.mxu0 0.0
    %2392 = vmatpush1.msra.mxu0 0.0
    %2393 = vmatprep.subr.mxu0 0.0
    %2394 = vmatpush1.msra.mxu0 0.0
    %2395 = vmatprep.subr.mxu0 0.0
    %2396 = vmatpush1.msra.mxu0 0.0
    %2397 = vmatprep.subr.mxu0 0.0
    %2398 = vmatpush1.msra.mxu0 0.0
    %2399 = vmatprep.subr.mxu0 0.0
    %2400 = vmatpush1.msra.mxu0 0.0
    %2401 = vmatprep.subr.mxu0 0.0
    %2402 = vmatpush1.msra.mxu0 0.0
    %2403 = vmatprep.subr.mxu0 0.0
    %2404 = vmatpush1.msra.mxu0 0.0
    %2405 = vmatprep.subr.mxu0 0.0
    %2406 = vmatpush1.msra.mxu0 0.0
    %2407 = vmatprep.subr.mxu0 0.0
    %2408 = vmatpush1.msra.mxu0 0.0
    %2409 = vmatprep.subr.mxu0 0.0
    %2410 = vmatpush1.msra.mxu0 0.0
    %2411 = vmatprep.subr.mxu0 0.0
    %2412 = vmatpush1.msra.mxu0 0.0
    %2413 = vmatprep.subr.mxu0 0.0
    %2414 = vmatpush1.msra.mxu0 0.0
    %2415 = vmatprep.subr.mxu0 0.0
    %2416 = vmatpush1.msra.mxu0 0.0
    %2417 = vmatprep.subr.mxu0 0.0
    %2418 = vmatpush1.msra.mxu0 0.0
    %2419 = vmatprep.subr.mxu0 0.0
    %2420 = vmatpush1.msra.mxu0 0.0
    %2421 = vmatprep.mubr.f32.mxu0 0.0
    %2422 = vmatmul.mubr.f32.gmra.mrb[0].mxu0 %v2215
    %v2423 = vpop.f32.mrb[0].mxu0
    %v2424 = vadd.f32 %v717, %v2423
    %v2425 = vpop.f32.mrb[0].mxu0
    %2426 = vdwg.mxu0
    %v2427 = vadd.f32 %v2211, %v2284
    %v2428 = vxor.u32 %v2427, 2147483648
    %v2429 = vmul.f32 %v2428, 1.442695
    %v2430 = vpow.pop %v2429
    %v2431 = vadd.f32 %v2430, 1.0
    %v2432 = vrcp.pop %v2431
    %v2433 = vmul.f32 1.0, %v2432
    %v2434 = vadd.f32 %v2212, %v2354
    %v2435 = vxor.u32 %v2434, 2147483648
    %v2436 = vmul.f32 %v2435, 1.442695
    %v2437 = vpow.pop %v2436
    %v2438 = vadd.f32 %v2437, 1.0
    %v2439 = vrcp.pop %v2438
    %v2440 = vmul.f32 1.0, %v2439
    %v2441 = vmul.f32 %v2433, %v2424
    %v2442 = vadd.f32 %v2213, %v2441
    %v2443 = vtanh.pop %v2442
    %v2444 = vsub.f32 1.0, %v2440
    %v2445 = vmul.f32 %v2444, %v2443
    %v2446 = vmul.f32 %v2440, %v1964
    %v2447 = vadd.f32 %v2445, %v2446
    %vm2448 = vcmp.gt.s32.totalorder %v743, 3
    %v2449 = vsel %vm2448, 1, 0
    %2450 = vset.pattern.permute.xlu0 0
    %2451 = vperm.xlu0 %2450, %v2449
    %v2452 = vpop.permute.xlu0 %2451
    %vm2453 = vcmp.eq.s32.totalorder %v2452, 1
    %v2454 = vsel %vm2453, %v2447, %v1964
    %v2455 = vld [vmem:[#allocation5 + $0x10] sm:$0xf]
    %v2456 = vld [vmem:[#allocation6 + $0x10] sm:$0xf]
    %v2457 = vld [vmem:[#allocation7 + $0x10] sm:$0xf]
    %v2459 = vsel %vm55, %v2210, 0
    %2461 = vmatprep.subr.mxu0 0.0
    %2462 = vmatpush1.msra.mxu0 %v682
    %2463 = vmatprep.subr.mxu0 0.0
    %2464 = vmatpush1.msra.mxu0 %v683
    %2465 = vmatprep.subr.mxu0 0.0
    %2466 = vmatpush1.msra.mxu0 %v684
    %2467 = vmatprep.subr.mxu0 0.0
    %2468 = vmatpush1.msra.mxu0 %v685
    %2469 = vmatprep.subr.mxu0 0.0
    %2470 = vmatpush1.msra.mxu0 0.0
    %2471 = vmatprep.subr.mxu0 0.0
    %2472 = vmatpush1.msra.mxu0 0.0
    %2473 = vmatprep.subr.mxu0 0.0
    %2474 = vmatpush1.msra.mxu0 0.0
    %2475 = vmatprep.subr.mxu0 0.0
    %2476 = vmatpush1.msra.mxu0 0.0
    %2477 = vmatprep.subr.mxu0 0.0
    %2478 = vmatpush1.msra.mxu0 0.0
    %2479 = vmatprep.subr.mxu0 0.0
    %2480 = vmatpush1.msra.mxu0 0.0
    %2481 = vmatprep.subr.mxu0 0.0
    %2482 = vmatpush1.msra.mxu0 0.0
    %2483 = vmatprep.subr.mxu0 0.0
    %2484 = vmatpush1.msra.mxu0 0.0
    %2485 = vmatprep.subr.mxu0 0.0
    %2486 = vmatpush1.msra.mxu0 0.0
    %2487 = vmatprep.subr.mxu0 0.0
    %2488 = vmatpush1.msra.mxu0 0.0
    %2489 = vmatprep.subr.mxu0 0.0
    %2490 = vmatpush1.msra.mxu0 0.0
    %2491 = vmatprep.subr.mxu0 0.0
    %2492 = vmatpush1.msra.mxu0 0.0
    %2493 = vmatprep.subr.mxu0 0.0
    %2494 = vmatpush1.msra.mxu0 0.0
    %2495 = vmatprep.subr.mxu0 0.0
    %2496 = vmatpush1.msra.mxu0 0.0
    %2497 = vmatprep.subr.mxu0 0.0
    %2498 = vmatpush1.msra.mxu0 0.0
    %2499 = vmatprep.subr.mxu0 0.0
    %2500 = vmatpush1.msra.mxu0 0.0
    %2501 = vmatprep.subr.mxu0 0.0
    %2502 = vmatpush1.msra.mxu0 0.0
    %2503 = vmatprep.subr.mxu0 0.0
    %2504 = vmatpush1.msra.mxu0 0.0
    %2505 = vmatprep.subr.mxu0 0.0
    %2506 = vmatpush1.msra.mxu0 0.0
    %2507 = vmatprep.subr.mxu0 0.0
    %2508 = vmatpush1.msra.mxu0 0.0
    %2509 = vmatprep.subr.mxu0 0.0
    %2510 = vmatpush1.msra.mxu0 0.0
    %2511 = vmatprep.subr.mxu0 0.0
    %2512 = vmatpush1.msra.mxu0 0.0
    %2513 = vmatprep.subr.mxu0 0.0
    %2514 = vmatpush1.msra.mxu0 0.0
    %2515 = vmatprep.subr.mxu0 0.0
    %2516 = vmatpush1.msra.mxu0 0.0
    %2517 = vmatprep.subr.mxu0 0.0
    %2518 = vmatpush1.msra.mxu0 0.0
    %2519 = vmatprep.subr.mxu0 0.0
    %2520 = vmatpush1.msra.mxu0 0.0
    %2521 = vmatprep.subr.mxu0 0.0
    %2522 = vmatpush1.msra.mxu0 0.0
    %2523 = vmatprep.subr.mxu0 0.0
    %2524 = vmatpush1.msra.mxu0 0.0
    %2525 = vmatprep.mubr.f32.mxu0 0.0
    %2526 = vmatmul.mubr.f32.gmra.mrb[0].mxu0 %v2459
    %v2527 = vpop.f32.mrb[0].mxu0
    %v2528 = vadd.f32 %v725, %v2527
    %v2529 = vpop.f32.mrb[0].mxu0
    %2530 = vdwg.mxu0
    %2531 = vmatprep.subr.mxu0 0.0
    %2532 = vmatpush1.msra.mxu0 %v687
    %2533 = vmatprep.subr.mxu0 0.0
    %2534 = vmatpush1.msra.mxu0 %v688
    %2535 = vmatprep.subr.mxu0 0.0
    %2536 = vmatpush1.msra.mxu0 %v689
    %2537 = vmatprep.subr.mxu0 0.0
    %2538 = vmatpush1.msra.mxu0 %v690
    %2539 = vmatprep.subr.mxu0 0.0
    %2540 = vmatpush1.msra.mxu0 0.0
    %2541 = vmatprep.subr.mxu0 0.0
    %2542 = vmatpush1.msra.mxu0 0.0
    %2543 = vmatprep.subr.mxu0 0.0
    %2544 = vmatpush1.msra.mxu0 0.0
    %2545 = vmatprep.subr.mxu0 0.0
    %2546 = vmatpush1.msra.mxu0 0.0
    %2547 = vmatprep.subr.mxu0 0.0
    %2548 = vmatpush1.msra.mxu0 0.0
    %2549 = vmatprep.subr.mxu0 0.0
    %2550 = vmatpush1.msra.mxu0 0.0
    %2551 = vmatprep.subr.mxu0 0.0
    %2552 = vmatpush1.msra.mxu0 0.0
    %2553 = vmatprep.subr.mxu0 0.0
    %2554 = vmatpush1.msra.mxu0 0.0
    %2555 = vmatprep.subr.mxu0 0.0
    %2556 = vmatpush1.msra.mxu0 0.0
    %2557 = vmatprep.subr.mxu0 0.0
    %2558 = vmatpush1.msra.mxu0 0.0
    %2559 = vmatprep.subr.mxu0 0.0
    %2560 = vmatpush1.msra.mxu0 0.0
    %2561 = vmatprep.subr.mxu0 0.0
    %2562 = vmatpush1.msra.mxu0 0.0
    %2563 = vmatprep.subr.mxu0 0.0
    %2564 = vmatpush1.msra.mxu0 0.0
    %2565 = vmatprep.subr.mxu0 0.0
    %2566 = vmatpush1.msra.mxu0 0.0
    %2567 = vmatprep.subr.mxu0 0.0
    %2568 = vmatpush1.msra.mxu0 0.0
    %2569 = vmatprep.subr.mxu0 0.0
    %2570 = vmatpush1.msra.mxu0 0.0
    %2571 = vmatprep.subr.mxu0 0.0
    %2572 = vmatpush1.msra.mxu0 0.0
    %2573 = vmatprep.subr.mxu0 0.0
    %2574 = vmatpush1.msra.mxu0 0.0
    %2575 = vmatprep.subr.mxu0 0.0
    %2576 = vmatpush1.msra.mxu0 0.0
    %2577 = vmatprep.subr.mxu0 0.0
    %2578 = vmatpush1.msra.mxu0 0.0
    %2579 = vmatprep.subr.mxu0 0.0
    %2580 = vmatpush1.msra.mxu0 0.0
    %2581 = vmatprep.subr.mxu0 0.0
    %2582 = vmatpush1.msra.mxu0 0.0
    %2583 = vmatprep.subr.mxu0 0.0
    %2584 = vmatpush1.msra.mxu0 0.0
    %2585 = vmatprep.subr.mxu0 0.0
    %2586 = vmatpush1.msra.mxu0 0.0
    %2587 = vmatprep.subr.mxu0 0.0
    %2588 = vmatpush1.msra.mxu0 0.0
    %2589 = vmatprep.subr.mxu0 0.0
    %2590 = vmatpush1.msra.mxu0 0.0
    %2591 = vmatprep.subr.mxu0 0.0
    %2592 = vmatpush1.msra.mxu0 0.0
    %2593 = vmatprep.subr.mxu0 0.0
    %2594 = vmatpush1.msra.mxu0 0.0
    %2595 = vmatprep.mubr.f32.mxu0 0.0
    %2596 = vmatmul.mubr.f32.gmra.mrb[0].mxu0 %v2459
    %v2597 = vpop.f32.mrb[0].mxu0
    %v2598 = vadd.f32 %v733, %v2597
    %v2599 = vpop.f32.mrb[0].mxu0
    %2600 = vdwg.mxu0
    %2601 = vmatprep.subr.mxu0 0.0
    %2602 = vmatpush1.msra.mxu0 %v692
    %2603 = vmatprep.subr.mxu0 0.0
    %2604 = vmatpush1.msra.mxu0 %v693
    %2605 = vmatprep.subr.mxu0 0.0
    %2606 = vmatpush1.msra.mxu0 %v694
    %2607 = vmatprep.subr.mxu0 0.0
    %2608 = vmatpush1.msra.mxu0 %v695
    %2609 = vmatprep.subr.mxu0 0.0
    %2610 = vmatpush1.msra.mxu0 0.0
    %2611 = vmatprep.subr.mxu0 0.0
    %2612 = vmatpush1.msra.mxu0 0.0
    %2613 = vmatprep.subr.mxu0 0.0
    %2614 = vmatpush1.msra.mxu0 0.0
    %2615 = vmatprep.subr.mxu0 0.0
    %2616 = vmatpush1.msra.mxu0 0.0
    %2617 = vmatprep.subr.mxu0 0.0
    %2618 = vmatpush1.msra.mxu0 0.0
    %2619 = vmatprep.subr.mxu0 0.0
    %2620 = vmatpush1.msra.mxu0 0.0
    %2621 = vmatprep.subr.mxu0 0.0
    %2622 = vmatpush1.msra.mxu0 0.0
    %2623 = vmatprep.subr.mxu0 0.0
    %2624 = vmatpush1.msra.mxu0 0.0
    %2625 = vmatprep.subr.mxu0 0.0
    %2626 = vmatpush1.msra.mxu0 0.0
    %2627 = vmatprep.subr.mxu0 0.0
    %2628 = vmatpush1.msra.mxu0 0.0
    %2629 = vmatprep.subr.mxu0 0.0
    %2630 = vmatpush1.msra.mxu0 0.0
    %2631 = vmatprep.subr.mxu0 0.0
    %2632 = vmatpush1.msra.mxu0 0.0
    %2633 = vmatprep.subr.mxu0 0.0
    %2634 = vmatpush1.msra.mxu0 0.0
    %2635 = vmatprep.subr.mxu0 0.0
    %2636 = vmatpush1.msra.mxu0 0.0
    %2637 = vmatprep.subr.mxu0 0.0
    %2638 = vmatpush1.msra.mxu0 0.0
    %2639 = vmatprep.subr.mxu0 0.0
    %2640 = vmatpush1.msra.mxu0 0.0
    %2641 = vmatprep.subr.mxu0 0.0
    %2642 = vmatpush1.msra.mxu0 0.0
    %2643 = vmatprep.subr.mxu0 0.0
    %2644 = vmatpush1.msra.mxu0 0.0
    %2645 = vmatprep.subr.mxu0 0.0
    %2646 = vmatpush1.msra.mxu0 0.0
    %2647 = vmatprep.subr.mxu0 0.0
    %2648 = vmatpush1.msra.mxu0 0.0
    %2649 = vmatprep.subr.mxu0 0.0
    %2650 = vmatpush1.msra.mxu0 0.0
    %2651 = vmatprep.subr.mxu0 0.0
    %2652 = vmatpush1.msra.mxu0 0.0
    %2653 = vmatprep.subr.mxu0 0.0
    %2654 = vmatpush1.msra.mxu0 0.0
    %2655 = vmatprep.subr.mxu0 0.0
    %2656 = vmatpush1.msra.mxu0 0.0
    %2657 = vmatprep.subr.mxu0 0.0
    %2658 = vmatpush1.msra.mxu0 0.0
    %2659 = vmatprep.subr.mxu0 0.0
    %2660 = vmatpush1.msra.mxu0 0.0
    %2661 = vmatprep.subr.mxu0 0.0
    %2662 = vmatpush1.msra.mxu0 0.0
    %2663 = vmatprep.subr.mxu0 0.0
    %2664 = vmatpush1.msra.mxu0 0.0
    %2665 = vmatprep.mubr.f32.mxu0 0.0
    %2666 = vmatmul.mubr.f32.gmra.mrb[0].mxu0 %v2459
    %v2667 = vpop.f32.mrb[0].mxu0
    %v2668 = vadd.f32 %v741, %v2667
    %v2669 = vpop.f32.mrb[0].mxu0
    %2670 = vdwg.mxu0
    %v2671 = vadd.f32 %v2455, %v2528
    %v2672 = vxor.u32 %v2671, 2147483648
    %v2673 = vmul.f32 %v2672, 1.442695
    %v2674 = vpow.pop %v2673
    %v2675 = vadd.f32 %v2674, 1.0
    %v2676 = vrcp.pop %v2675
    %v2677 = vmul.f32 1.0, %v2676
    %v2678 = vadd.f32 %v2456, %v2598
    %v2679 = vxor.u32 %v2678, 2147483648
    %v2680 = vmul.f32 %v2679, 1.442695
    %v2681 = vpow.pop %v2680
    %v2682 = vadd.f32 %v2681, 1.0
    %v2683 = vrcp.pop %v2682
    %v2684 = vmul.f32 1.0, %v2683
    %v2685 = vmul.f32 %v2677, %v2668
    %v2686 = vadd.f32 %v2457, %v2685
    %v2687 = vtanh.pop %v2686
    %v2688 = vsub.f32 1.0, %v2684
    %v2689 = vmul.f32 %v2688, %v2687
    %v2690 = vmul.f32 %v2684, %v2210
    %v2691 = vadd.f32 %v2689, %v2690
    %vm2692 = vcmp.gt.s32.totalorder %v743, 4
    %v2693 = vsel %vm2692, 1, 0
    %2694 = vset.pattern.permute.xlu0 0
    %2695 = vperm.xlu0 %2694, %v2693
    %v2696 = vpop.permute.xlu0 %2695
    %vm2697 = vcmp.eq.s32.totalorder %v2696, 1
    %v2698 = vsel %vm2697, %v2691, 0.0
    %2699 = vst.msk [vmem:[%s6 + $0x10] sm:$0xf] %vm1229, %v2698
    %v2700 = vsel %vm2697, %v2691, %v2210
    %v2701 = vld [vmem:[#allocation2 + $0x10] sm:$0xf]
    %v2702 = vld [vmem:[#allocation3 + $0x10] sm:$0xf]
    %v2703 = vld [vmem:[#allocation4 + $0x10] sm:$0xf]
    %v2705 = vsel %vm55, %v2454, 0
    %2707 = vmatprep.subr.mxu0 0.0
    %2708 = vmatpush1.msra.mxu0 %v667
    %2709 = vmatprep.subr.mxu0 0.0
    %2710 = vmatpush1.msra.mxu0 %v668
    %2711 = vmatprep.subr.mxu0 0.0
    %2712 = vmatpush1.msra.mxu0 %v669
    %2713 = vmatprep.subr.mxu0 0.0
    %2714 = vmatpush1.msra.mxu0 %v670
    %2715 = vmatprep.subr.mxu0 0.0
    %2716 = vmatpush1.msra.mxu0 0.0
    %2717 = vmatprep.subr.mxu0 0.0
    %2718 = vmatpush1.msra.mxu0 0.0
    %2719 = vmatprep.subr.mxu0 0.0
    %2720 = vmatpush1.msra.mxu0 0.0
    %2721 = vmatprep.subr.mxu0 0.0
    %2722 = vmatpush1.msra.mxu0 0.0
    %2723 = vmatprep.subr.mxu0 0.0
    %2724 = vmatpush1.msra.mxu0 0.0
    %2725 = vmatprep.subr.mxu0 0.0
    %2726 = vmatpush1.msra.mxu0 0.0
    %2727 = vmatprep.subr.mxu0 0.0
    %2728 = vmatpush1.msra.mxu0 0.0
    %2729 = vmatprep.subr.mxu0 0.0
    %2730 = vmatpush1.msra.mxu0 0.0
    %2731 = vmatprep.subr.mxu0 0.0
    %2732 = vmatpush1.msra.mxu0 0.0
    %2733 = vmatprep.subr.mxu0 0.0
    %2734 = vmatpush1.msra.mxu0 0.0
    %2735 = vmatprep.subr.mxu0 0.0
    %2736 = vmatpush1.msra.mxu0 0.0
    %2737 = vmatprep.subr.mxu0 0.0
    %2738 = vmatpush1.msra.mxu0 0.0
    %2739 = vmatprep.subr.mxu0 0.0
    %2740 = vmatpush1.msra.mxu0 0.0
    %2741 = vmatprep.subr.mxu0 0.0
    %2742 = vmatpush1.msra.mxu0 0.0
    %2743 = vmatprep.subr.mxu0 0.0
    %2744 = vmatpush1.msra.mxu0 0.0
    %2745 = vmatprep.subr.mxu0 0.0
    %2746 = vmatpush1.msra.mxu0 0.0
    %2747 = vmatprep.subr.mxu0 0.0
    %2748 = vmatpush1.msra.mxu0 0.0
    %2749 = vmatprep.subr.mxu0 0.0
    %2750 = vmatpush1.msra.mxu0 0.0
    %2751 = vmatprep.subr.mxu0 0.0
    %2752 = vmatpush1.msra.mxu0 0.0
    %2753 = vmatprep.subr.mxu0 0.0
    %2754 = vmatpush1.msra.mxu0 0.0
    %2755 = vmatprep.subr.mxu0 0.0
    %2756 = vmatpush1.msra.mxu0 0.0
    %2757 = vmatprep.subr.mxu0 0.0
    %2758 = vmatpush1.msra.mxu0 0.0
    %2759 = vmatprep.subr.mxu0 0.0
    %2760 = vmatpush1.msra.mxu0 0.0
    %2761 = vmatprep.subr.mxu0 0.0
    %2762 = vmatpush1.msra.mxu0 0.0
    %2763 = vmatprep.subr.mxu0 0.0
    %2764 = vmatpush1.msra.mxu0 0.0
    %2765 = vmatprep.subr.mxu0 0.0
    %2766 = vmatpush1.msra.mxu0 0.0
    %2767 = vmatprep.subr.mxu0 0.0
    %2768 = vmatpush1.msra.mxu0 0.0
    %2769 = vmatprep.subr.mxu0 0.0
    %2770 = vmatpush1.msra.mxu0 0.0
    %2771 = vmatprep.mubr.f32.mxu0 0.0
    %2772 = vmatmul.mubr.f32.gmra.mrb[0].mxu0 %v2705
    %v2773 = vpop.f32.mrb[0].mxu0
    %v2774 = vadd.f32 %v701, %v2773
    %v2775 = vpop.f32.mrb[0].mxu0
    %2776 = vdwg.mxu0
    %2777 = vmatprep.subr.mxu0 0.0
    %2778 = vmatpush1.msra.mxu0 %v672
    %2779 = vmatprep.subr.mxu0 0.0
    %2780 = vmatpush1.msra.mxu0 %v673
    %2781 = vmatprep.subr.mxu0 0.0
    %2782 = vmatpush1.msra.mxu0 %v674
    %2783 = vmatprep.subr.mxu0 0.0
    %2784 = vmatpush1.msra.mxu0 %v675
    %2785 = vmatprep.subr.mxu0 0.0
    %2786 = vmatpush1.msra.mxu0 0.0
    %2787 = vmatprep.subr.mxu0 0.0
    %2788 = vmatpush1.msra.mxu0 0.0
    %2789 = vmatprep.subr.mxu0 0.0
    %2790 = vmatpush1.msra.mxu0 0.0
    %2791 = vmatprep.subr.mxu0 0.0
    %2792 = vmatpush1.msra.mxu0 0.0
    %2793 = vmatprep.subr.mxu0 0.0
    %2794 = vmatpush1.msra.mxu0 0.0
    %2795 = vmatprep.subr.mxu0 0.0
    %2796 = vmatpush1.msra.mxu0 0.0
    %2797 = vmatprep.subr.mxu0 0.0
    %2798 = vmatpush1.msra.mxu0 0.0
    %2799 = vmatprep.subr.mxu0 0.0
    %2800 = vmatpush1.msra.mxu0 0.0
    %2801 = vmatprep.subr.mxu0 0.0
    %2802 = vmatpush1.msra.mxu0 0.0
    %2803 = vmatprep.subr.mxu0 0.0
    %2804 = vmatpush1.msra.mxu0 0.0
    %2805 = vmatprep.subr.mxu0 0.0
    %2806 = vmatpush1.msra.mxu0 0.0
    %2807 = vmatprep.subr.mxu0 0.0
    %2808 = vmatpush1.msra.mxu0 0.0
    %2809 = vmatprep.subr.mxu0 0.0
    %2810 = vmatpush1.msra.mxu0 0.0
    %2811 = vmatprep.subr.mxu0 0.0
    %2812 = vmatpush1.msra.mxu0 0.0
    %2813 = vmatprep.subr.mxu0 0.0
    %2814 = vmatpush1.msra.mxu0 0.0
    %2815 = vmatprep.subr.mxu0 0.0
    %2816 = vmatpush1.msra.mxu0 0.0
    %2817 = vmatprep.subr.mxu0 0.0
    %2818 = vmatpush1.msra.mxu0 0.0
    %2819 = vmatprep.subr.mxu0 0.0
    %2820 = vmatpush1.msra.mxu0 0.0
    %2821 = vmatprep.subr.mxu0 0.0
    %2822 = vmatpush1.msra.mxu0 0.0
    %2823 = vmatprep.subr.mxu0 0.0
    %2824 = vmatpush1.msra.mxu0 0.0
    %2825 = vmatprep.subr.mxu0 0.0
    %2826 = vmatpush1.msra.mxu0 0.0
    %2827 = vmatprep.subr.mxu0 0.0
    %2828 = vmatpush1.msra.mxu0 0.0
    %2829 = vmatprep.subr.mxu0 0.0
    %2830 = vmatpush1.msra.mxu0 0.0
    %2831 = vmatprep.subr.mxu0 0.0
    %2832 = vmatpush1.msra.mxu0 0.0
    %2833 = vmatprep.subr.mxu0 0.0
    %2834 = vmatpush1.msra.mxu0 0.0
    %2835 = vmatprep.subr.mxu0 0.0
    %2836 = vmatpush1.msra.mxu0 0.0
    %2837 = vmatprep.subr.mxu0 0.0
    %2838 = vmatpush1.msra.mxu0 0.0
    %2839 = vmatprep.subr.mxu0 0.0
    %2840 = vmatpush1.msra.mxu0 0.0
    %2841 = vmatprep.mubr.f32.mxu0 0.0
    %2842 = vmatmul.mubr.f32.gmra.mrb[0].mxu0 %v2705
    %v2843 = vpop.f32.mrb[0].mxu0
    %v2844 = vadd.f32 %v709, %v2843
    %v2845 = vpop.f32.mrb[0].mxu0
    %2846 = vdwg.mxu0
    %2847 = vmatprep.subr.mxu0 0.0
    %2848 = vmatpush1.msra.mxu0 %v677
    %2849 = vmatprep.subr.mxu0 0.0
    %2850 = vmatpush1.msra.mxu0 %v678
    %2851 = vmatprep.subr.mxu0 0.0
    %2852 = vmatpush1.msra.mxu0 %v679
    %2853 = vmatprep.subr.mxu0 0.0
    %2854 = vmatpush1.msra.mxu0 %v680
    %2855 = vmatprep.subr.mxu0 0.0
    %2856 = vmatpush1.msra.mxu0 0.0
    %2857 = vmatprep.subr.mxu0 0.0
    %2858 = vmatpush1.msra.mxu0 0.0
    %2859 = vmatprep.subr.mxu0 0.0
    %2860 = vmatpush1.msra.mxu0 0.0
    %2861 = vmatprep.subr.mxu0 0.0
    %2862 = vmatpush1.msra.mxu0 0.0
    %2863 = vmatprep.subr.mxu0 0.0
    %2864 = vmatpush1.msra.mxu0 0.0
    %2865 = vmatprep.subr.mxu0 0.0
    %2866 = vmatpush1.msra.mxu0 0.0
    %2867 = vmatprep.subr.mxu0 0.0
    %2868 = vmatpush1.msra.mxu0 0.0
    %2869 = vmatprep.subr.mxu0 0.0
    %2870 = vmatpush1.msra.mxu0 0.0
    %2871 = vmatprep.subr.mxu0 0.0
    %2872 = vmatpush1.msra.mxu0 0.0
    %2873 = vmatprep.subr.mxu0 0.0
    %2874 = vmatpush1.msra.mxu0 0.0
    %2875 = vmatprep.subr.mxu0 0.0
    %2876 = vmatpush1.msra.mxu0 0.0
    %2877 = vmatprep.subr.mxu0 0.0
    %2878 = vmatpush1.msra.mxu0 0.0
    %2879 = vmatprep.subr.mxu0 0.0
    %2880 = vmatpush1.msra.mxu0 0.0
    %2881 = vmatprep.subr.mxu0 0.0
    %2882 = vmatpush1.msra.mxu0 0.0
    %2883 = vmatprep.subr.mxu0 0.0
    %2884 = vmatpush1.msra.mxu0 0.0
    %2885 = vmatprep.subr.mxu0 0.0
    %2886 = vmatpush1.msra.mxu0 0.0
    %2887 = vmatprep.subr.mxu0 0.0
    %2888 = vmatpush1.msra.mxu0 0.0
    %2889 = vmatprep.subr.mxu0 0.0
    %2890 = vmatpush1.msra.mxu0 0.0
    %2891 = vmatprep.subr.mxu0 0.0
    %2892 = vmatpush1.msra.mxu0 0.0
    %2893 = vmatprep.subr.mxu0 0.0
    %2894 = vmatpush1.msra.mxu0 0.0
    %2895 = vmatprep.subr.mxu0 0.0
    %2896 = vmatpush1.msra.mxu0 0.0
    %2897 = vmatprep.subr.mxu0 0.0
    %2898 = vmatpush1.msra.mxu0 0.0
    %2899 = vmatprep.subr.mxu0 0.0
    %2900 = vmatpush1.msra.mxu0 0.0
    %2901 = vmatprep.subr.mxu0 0.0
    %2902 = vmatpush1.msra.mxu0 0.0
    %2903 = vmatprep.subr.mxu0 0.0
    %2904 = vmatpush1.msra.mxu0 0.0
    %2905 = vmatprep.subr.mxu0 0.0
    %2906 = vmatpush1.msra.mxu0 0.0
    %2907 = vmatprep.subr.mxu0 0.0
    %2908 = vmatpush1.msra.mxu0 0.0
    %2909 = vmatprep.subr.mxu0 0.0
    %2910 = vmatpush1.msra.mxu0 0.0
    %2911 = vmatprep.mubr.f32.mxu0 0.0
    %2912 = vmatmul.mubr.f32.gmra.mrb[0].mxu0 %v2705
    %v2913 = vpop.f32.mrb[0].mxu0
    %v2914 = vadd.f32 %v717, %v2913
    %v2915 = vpop.f32.mrb[0].mxu0
    %2916 = vdwg.mxu0
    %v2917 = vadd.f32 %v2701, %v2774
    %v2918 = vxor.u32 %v2917, 2147483648
    %v2919 = vmul.f32 %v2918, 1.442695
    %v2920 = vpow.pop %v2919
    %v2921 = vadd.f32 %v2920, 1.0
    %v2922 = vrcp.pop %v2921
    %v2923 = vmul.f32 1.0, %v2922
    %v2924 = vadd.f32 %v2702, %v2844
    %v2925 = vxor.u32 %v2924, 2147483648
    %v2926 = vmul.f32 %v2925, 1.442695
    %v2927 = vpow.pop %v2926
    %v2928 = vadd.f32 %v2927, 1.0
    %v2929 = vrcp.pop %v2928
    %v2930 = vmul.f32 1.0, %v2929
    %v2931 = vmul.f32 %v2923, %v2914
    %v2932 = vadd.f32 %v2703, %v2931
    %v2933 = vtanh.pop %v2932
    %v2934 = vsub.f32 1.0, %v2930
    %v2935 = vmul.f32 %v2934, %v2933
    %v2936 = vmul.f32 %v2930, %v2454
    %v2937 = vadd.f32 %v2935, %v2936
    %v2938 = vsel %vm2697, %v2937, %v2454
    %v2939 = vld [vmem:[#allocation5 + $0xc] sm:$0xf]
    %v2940 = vld [vmem:[#allocation6 + $0xc] sm:$0xf]
    %v2941 = vld [vmem:[#allocation7 + $0xc] sm:$0xf]
    %v2943 = vsel %vm55, %v2700, 0
    %2945 = vmatprep.subr.mxu0 0.0
    %2946 = vmatpush1.msra.mxu0 %v682
    %2947 = vmatprep.subr.mxu0 0.0
    %2948 = vmatpush1.msra.mxu0 %v683
    %2949 = vmatprep.subr.mxu0 0.0
    %2950 = vmatpush1.msra.mxu0 %v684
    %2951 = vmatprep.subr.mxu0 0.0
    %2952 = vmatpush1.msra.mxu0 %v685
    %2953 = vmatprep.subr.mxu0 0.0
    %2954 = vmatpush1.msra.mxu0 0.0
    %2955 = vmatprep.subr.mxu0 0.0
    %2956 = vmatpush1.msra.mxu0 0.0
    %2957 = vmatprep.subr.mxu0 0.0
    %2958 = vmatpush1.msra.mxu0 0.0
    %2959 = vmatprep.subr.mxu0 0.0
    %2960 = vmatpush1.msra.mxu0 0.0
    %2961 = vmatprep.subr.mxu0 0.0
    %2962 = vmatpush1.msra.mxu0 0.0
    %2963 = vmatprep.subr.mxu0 0.0
    %2964 = vmatpush1.msra.mxu0 0.0
    %2965 = vmatprep.subr.mxu0 0.0
    %2966 = vmatpush1.msra.mxu0 0.0
    %2967 = vmatprep.subr.mxu0 0.0
    %2968 = vmatpush1.msra.mxu0 0.0
    %2969 = vmatprep.subr.mxu0 0.0
    %2970 = vmatpush1.msra.mxu0 0.0
    %2971 = vmatprep.subr.mxu0 0.0
    %2972 = vmatpush1.msra.mxu0 0.0
    %2973 = vmatprep.subr.mxu0 0.0
    %2974 = vmatpush1.msra.mxu0 0.0
    %2975 = vmatprep.subr.mxu0 0.0
    %2976 = vmatpush1.msra.mxu0 0.0
    %2977 = vmatprep.subr.mxu0 0.0
    %2978 = vmatpush1.msra.mxu0 0.0
    %2979 = vmatprep.subr.mxu0 0.0
    %2980 = vmatpush1.msra.mxu0 0.0
    %2981 = vmatprep.subr.mxu0 0.0
    %2982 = vmatpush1.msra.mxu0 0.0
    %2983 = vmatprep.subr.mxu0 0.0
    %2984 = vmatpush1.msra.mxu0 0.0
    %2985 = vmatprep.subr.mxu0 0.0
    %2986 = vmatpush1.msra.mxu0 0.0
    %2987 = vmatprep.subr.mxu0 0.0
    %2988 = vmatpush1.msra.mxu0 0.0
    %2989 = vmatprep.subr.mxu0 0.0
    %2990 = vmatpush1.msra.mxu0 0.0
    %2991 = vmatprep.subr.mxu0 0.0
    %2992 = vmatpush1.msra.mxu0 0.0
    %2993 = vmatprep.subr.mxu0 0.0
    %2994 = vmatpush1.msra.mxu0 0.0
    %2995 = vmatprep.subr.mxu0 0.0
    %2996 = vmatpush1.msra.mxu0 0.0
    %2997 = vmatprep.subr.mxu0 0.0
    %2998 = vmatpush1.msra.mxu0 0.0
    %2999 = vmatprep.subr.mxu0 0.0
    %3000 = vmatpush1.msra.mxu0 0.0
    %3001 = vmatprep.subr.mxu0 0.0
    %3002 = vmatpush1.msra.mxu0 0.0
    %3003 = vmatprep.subr.mxu0 0.0
    %3004 = vmatpush1.msra.mxu0 0.0
    %3005 = vmatprep.subr.mxu0 0.0
    %3006 = vmatpush1.msra.mxu0 0.0
    %3007 = vmatprep.subr.mxu0 0.0
    %3008 = vmatpush1.msra.mxu0 0.0
    %3009 = vmatprep.mubr.f32.mxu0 0.0
    %3010 = vmatmul.mubr.f32.gmra.mrb[0].mxu0 %v2943
    %v3011 = vpop.f32.mrb[0].mxu0
    %v3012 = vadd.f32 %v725, %v3011
    %v3013 = vpop.f32.mrb[0].mxu0
    %3014 = vdwg.mxu0
    %3015 = vmatprep.subr.mxu0 0.0
    %3016 = vmatpush1.msra.mxu0 %v687
    %3017 = vmatprep.subr.mxu0 0.0
    %3018 = vmatpush1.msra.mxu0 %v688
    %3019 = vmatprep.subr.mxu0 0.0
    %3020 = vmatpush1.msra.mxu0 %v689
    %3021 = vmatprep.subr.mxu0 0.0
    %3022 = vmatpush1.msra.mxu0 %v690
    %3023 = vmatprep.subr.mxu0 0.0
    %3024 = vmatpush1.msra.mxu0 0.0
    %3025 = vmatprep.subr.mxu0 0.0
    %3026 = vmatpush1.msra.mxu0 0.0
    %3027 = vmatprep.subr.mxu0 0.0
    %3028 = vmatpush1.msra.mxu0 0.0
    %3029 = vmatprep.subr.mxu0 0.0
    %3030 = vmatpush1.msra.mxu0 0.0
    %3031 = vmatprep.subr.mxu0 0.0
    %3032 = vmatpush1.msra.mxu0 0.0
    %3033 = vmatprep.subr.mxu0 0.0
    %3034 = vmatpush1.msra.mxu0 0.0
    %3035 = vmatprep.subr.mxu0 0.0
    %3036 = vmatpush1.msra.mxu0 0.0
    %3037 = vmatprep.subr.mxu0 0.0
    %3038 = vmatpush1.msra.mxu0 0.0
    %3039 = vmatprep.subr.mxu0 0.0
    %3040 = vmatpush1.msra.mxu0 0.0
    %3041 = vmatprep.subr.mxu0 0.0
    %3042 = vmatpush1.msra.mxu0 0.0
    %3043 = vmatprep.subr.mxu0 0.0
    %3044 = vmatpush1.msra.mxu0 0.0
    %3045 = vmatprep.subr.mxu0 0.0
    %3046 = vmatpush1.msra.mxu0 0.0
    %3047 = vmatprep.subr.mxu0 0.0
    %3048 = vmatpush1.msra.mxu0 0.0
    %3049 = vmatprep.subr.mxu0 0.0
    %3050 = vmatpush1.msra.mxu0 0.0
    %3051 = vmatprep.subr.mxu0 0.0
    %3052 = vmatpush1.msra.mxu0 0.0
    %3053 = vmatprep.subr.mxu0 0.0
    %3054 = vmatpush1.msra.mxu0 0.0
    %3055 = vmatprep.subr.mxu0 0.0
    %3056 = vmatpush1.msra.mxu0 0.0
    %3057 = vmatprep.subr.mxu0 0.0
    %3058 = vmatpush1.msra.mxu0 0.0
    %3059 = vmatprep.subr.mxu0 0.0
    %3060 = vmatpush1.msra.mxu0 0.0
    %3061 = vmatprep.subr.mxu0 0.0
    %3062 = vmatpush1.msra.mxu0 0.0
    %3063 = vmatprep.subr.mxu0 0.0
    %3064 = vmatpush1.msra.mxu0 0.0
    %3065 = vmatprep.subr.mxu0 0.0
    %3066 = vmatpush1.msra.mxu0 0.0
    %3067 = vmatprep.subr.mxu0 0.0
    %3068 = vmatpush1.msra.mxu0 0.0
    %3069 = vmatprep.subr.mxu0 0.0
    %3070 = vmatpush1.msra.mxu0 0.0
    %3071 = vmatprep.subr.mxu0 0.0
    %3072 = vmatpush1.msra.mxu0 0.0
    %3073 = vmatprep.subr.mxu0 0.0
    %3074 = vmatpush1.msra.mxu0 0.0
    %3075 = vmatprep.subr.mxu0 0.0
    %3076 = vmatpush1.msra.mxu0 0.0
    %3077 = vmatprep.subr.mxu0 0.0
    %3078 = vmatpush1.msra.mxu0 0.0
    %3079 = vmatprep.mubr.f32.mxu0 0.0
    %3080 = vmatmul.mubr.f32.gmra.mrb[0].mxu0 %v2943
    %v3081 = vpop.f32.mrb[0].mxu0
    %v3082 = vadd.f32 %v733, %v3081
    %v3083 = vpop.f32.mrb[0].mxu0
    %3084 = vdwg.mxu0
    %3085 = vmatprep.subr.mxu0 0.0
    %3086 = vmatpush1.msra.mxu0 %v692
    %3087 = vmatprep.subr.mxu0 0.0
    %3088 = vmatpush1.msra.mxu0 %v693
    %3089 = vmatprep.subr.mxu0 0.0
    %3090 = vmatpush1.msra.mxu0 %v694
    %3091 = vmatprep.subr.mxu0 0.0
    %3092 = vmatpush1.msra.mxu0 %v695
    %3093 = vmatprep.subr.mxu0 0.0
    %3094 = vmatpush1.msra.mxu0 0.0
    %3095 = vmatprep.subr.mxu0 0.0
    %3096 = vmatpush1.msra.mxu0 0.0
    %3097 = vmatprep.subr.mxu0 0.0
    %3098 = vmatpush1.msra.mxu0 0.0
    %3099 = vmatprep.subr.mxu0 0.0
    %3100 = vmatpush1.msra.mxu0 0.0
    %3101 = vmatprep.subr.mxu0 0.0
    %3102 = vmatpush1.msra.mxu0 0.0
    %3103 = vmatprep.subr.mxu0 0.0
    %3104 = vmatpush1.msra.mxu0 0.0
    %3105 = vmatprep.subr.mxu0 0.0
    %3106 = vmatpush1.msra.mxu0 0.0
    %3107 = vmatprep.subr.mxu0 0.0
    %3108 = vmatpush1.msra.mxu0 0.0
    %3109 = vmatprep.subr.mxu0 0.0
    %3110 = vmatpush1.msra.mxu0 0.0
    %3111 = vmatprep.subr.mxu0 0.0
    %3112 = vmatpush1.msra.mxu0 0.0
    %3113 = vmatprep.subr.mxu0 0.0
    %3114 = vmatpush1.msra.mxu0 0.0
    %3115 = vmatprep.subr.mxu0 0.0
    %3116 = vmatpush1.msra.mxu0 0.0
    %3117 = vmatprep.subr.mxu0 0.0
    %3118 = vmatpush1.msra.mxu0 0.0
    %3119 = vmatprep.subr.mxu0 0.0
    %3120 = vmatpush1.msra.mxu0 0.0
    %3121 = vmatprep.subr.mxu0 0.0
    %3122 = vmatpush1.msra.mxu0 0.0
    %3123 = vmatprep.subr.mxu0 0.0
    %3124 = vmatpush1.msra.mxu0 0.0
    %3125 = vmatprep.subr.mxu0 0.0
    %3126 = vmatpush1.msra.mxu0 0.0
    %3127 = vmatprep.subr.mxu0 0.0
    %3128 = vmatpush1.msra.mxu0 0.0
    %3129 = vmatprep.subr.mxu0 0.0
    %3130 = vmatpush1.msra.mxu0 0.0
    %3131 = vmatprep.subr.mxu0 0.0
    %3132 = vmatpush1.msra.mxu0 0.0
    %3133 = vmatprep.subr.mxu0 0.0
    %3134 = vmatpush1.msra.mxu0 0.0
    %3135 = vmatprep.subr.mxu0 0.0
    %3136 = vmatpush1.msra.mxu0 0.0
    %3137 = vmatprep.subr.mxu0 0.0
    %3138 = vmatpush1.msra.mxu0 0.0
    %3139 = vmatprep.subr.mxu0 0.0
    %3140 = vmatpush1.msra.mxu0 0.0
    %3141 = vmatprep.subr.mxu0 0.0
    %3142 = vmatpush1.msra.mxu0 0.0
    %3143 = vmatprep.subr.mxu0 0.0
    %3144 = vmatpush1.msra.mxu0 0.0
    %3145 = vmatprep.subr.mxu0 0.0
    %3146 = vmatpush1.msra.mxu0 0.0
    %3147 = vmatprep.subr.mxu0 0.0
    %3148 = vmatpush1.msra.mxu0 0.0
    %3149 = vmatprep.mubr.f32.mxu0 0.0
    %3150 = vmatmul.mubr.f32.gmra.mrb[0].mxu0 %v2943
    %v3151 = vpop.f32.mrb[0].mxu0
    %v3152 = vadd.f32 %v741, %v3151
    %v3153 = vpop.f32.mrb[0].mxu0
    %3154 = vdwg.mxu0
    %v3155 = vadd.f32 %v2939, %v3012
    %v3156 = vxor.u32 %v3155, 2147483648
    %v3157 = vmul.f32 %v3156, 1.442695
    %v3158 = vpow.pop %v3157
    %v3159 = vadd.f32 %v3158, 1.0
    %v3160 = vrcp.pop %v3159
    %v3161 = vmul.f32 1.0, %v3160
    %v3162 = vadd.f32 %v2940, %v3082
    %v3163 = vxor.u32 %v3162, 2147483648
    %v3164 = vmul.f32 %v3163, 1.442695
    %v3165 = vpow.pop %v3164
    %v3166 = vadd.f32 %v3165, 1.0
    %v3167 = vrcp.pop %v3166
    %v3168 = vmul.f32 1.0, %v3167
    %v3169 = vmul.f32 %v3161, %v3152
    %v3170 = vadd.f32 %v2941, %v3169
    %v3171 = vtanh.pop %v3170
    %v3172 = vsub.f32 1.0, %v3168
    %v3173 = vmul.f32 %v3172, %v3171
    %v3174 = vmul.f32 %v3168, %v2700
    %v3175 = vadd.f32 %v3173, %v3174
    %v3176 = vsel %vm2453, %v3175, 0.0
    %3177 = vst.msk [vmem:[%s6 + $0xc] sm:$0xf] %vm1229, %v3176
    %v3178 = vsel %vm2453, %v3175, %v2700
    %v3179 = vld [vmem:[#allocation2 + $0x14] sm:$0xf]
    %v3180 = vld [vmem:[#allocation3 + $0x14] sm:$0xf]
    %v3181 = vld [vmem:[#allocation4 + $0x14] sm:$0xf]
    %v3183 = vsel %vm55, %v2938, 0
    %3185 = vmatprep.subr.mxu0 0.0
    %3186 = vmatpush1.msra.mxu0 %v667
    %3187 = vmatprep.subr.mxu0 0.0
    %3188 = vmatpush1.msra.mxu0 %v668
    %3189 = vmatprep.subr.mxu0 0.0
    %3190 = vmatpush1.msra.mxu0 %v669
    %3191 = vmatprep.subr.mxu0 0.0
    %3192 = vmatpush1.msra.mxu0 %v670
    %3193 = vmatprep.subr.mxu0 0.0
    %3194 = vmatpush1.msra.mxu0 0.0
    %3195 = vmatprep.subr.mxu0 0.0
    %3196 = vmatpush1.msra.mxu0 0.0
    %3197 = vmatprep.subr.mxu0 0.0
    %3198 = vmatpush1.msra.mxu0 0.0
    %3199 = vmatprep.subr.mxu0 0.0
    %3200 = vmatpush1.msra.mxu0 0.0
    %3201 = vmatprep.subr.mxu0 0.0
    %3202 = vmatpush1.msra.mxu0 0.0
    %3203 = vmatprep.subr.mxu0 0.0
    %3204 = vmatpush1.msra.mxu0 0.0
    %3205 = vmatprep.subr.mxu0 0.0
    %3206 = vmatpush1.msra.mxu0 0.0
    %3207 = vmatprep.subr.mxu0 0.0
    %3208 = vmatpush1.msra.mxu0 0.0
    %3209 = vmatprep.subr.mxu0 0.0
    %3210 = vmatpush1.msra.mxu0 0.0
    %3211 = vmatprep.subr.mxu0 0.0
    %3212 = vmatpush1.msra.mxu0 0.0
    %3213 = vmatprep.subr.mxu0 0.0
    %3214 = vmatpush1.msra.mxu0 0.0
    %3215 = vmatprep.subr.mxu0 0.0
    %3216 = vmatpush1.msra.mxu0 0.0
    %3217 = vmatprep.subr.mxu0 0.0
    %3218 = vmatpush1.msra.mxu0 0.0
    %3219 = vmatprep.subr.mxu0 0.0
    %3220 = vmatpush1.msra.mxu0 0.0
    %3221 = vmatprep.subr.mxu0 0.0
    %3222 = vmatpush1.msra.mxu0 0.0
    %3223 = vmatprep.subr.mxu0 0.0
    %3224 = vmatpush1.msra.mxu0 0.0
    %3225 = vmatprep.subr.mxu0 0.0
    %3226 = vmatpush1.msra.mxu0 0.0
    %3227 = vmatprep.subr.mxu0 0.0
    %3228 = vmatpush1.msra.mxu0 0.0
    %3229 = vmatprep.subr.mxu0 0.0
    %3230 = vmatpush1.msra.mxu0 0.0
    %3231 = vmatprep.subr.mxu0 0.0
    %3232 = vmatpush1.msra.mxu0 0.0
    %3233 = vmatprep.subr.mxu0 0.0
    %3234 = vmatpush1.msra.mxu0 0.0
    %3235 = vmatprep.subr.mxu0 0.0
    %3236 = vmatpush1.msra.mxu0 0.0
    %3237 = vmatprep.subr.mxu0 0.0
    %3238 = vmatpush1.msra.mxu0 0.0
    %3239 = vmatprep.subr.mxu0 0.0
    %3240 = vmatpush1.msra.mxu0 0.0
    %3241 = vmatprep.subr.mxu0 0.0
    %3242 = vmatpush1.msra.mxu0 0.0
    %3243 = vmatprep.subr.mxu0 0.0
    %3244 = vmatpush1.msra.mxu0 0.0
    %3245 = vmatprep.subr.mxu0 0.0
    %3246 = vmatpush1.msra.mxu0 0.0
    %3247 = vmatprep.subr.mxu0 0.0
    %3248 = vmatpush1.msra.mxu0 0.0
    %3249 = vmatprep.mubr.f32.mxu0 0.0
    %3250 = vmatmul.mubr.f32.gmra.mrb[0].mxu0 %v3183
    %v3251 = vpop.f32.mrb[0].mxu0
    %v3252 = vadd.f32 %v701, %v3251
    %v3253 = vpop.f32.mrb[0].mxu0
    %3254 = vdwg.mxu0
    %3255 = vmatprep.subr.mxu0 0.0
    %3256 = vmatpush1.msra.mxu0 %v672
    %3257 = vmatprep.subr.mxu0 0.0
    %3258 = vmatpush1.msra.mxu0 %v673
    %3259 = vmatprep.subr.mxu0 0.0
    %3260 = vmatpush1.msra.mxu0 %v674
    %3261 = vmatprep.subr.mxu0 0.0
    %3262 = vmatpush1.msra.mxu0 %v675
    %3263 = vmatprep.subr.mxu0 0.0
    %3264 = vmatpush1.msra.mxu0 0.0
    %3265 = vmatprep.subr.mxu0 0.0
    %3266 = vmatpush1.msra.mxu0 0.0
    %3267 = vmatprep.subr.mxu0 0.0
    %3268 = vmatpush1.msra.mxu0 0.0
    %3269 = vmatprep.subr.mxu0 0.0
    %3270 = vmatpush1.msra.mxu0 0.0
    %3271 = vmatprep.subr.mxu0 0.0
    %3272 = vmatpush1.msra.mxu0 0.0
    %3273 = vmatprep.subr.mxu0 0.0
    %3274 = vmatpush1.msra.mxu0 0.0
    %3275 = vmatprep.subr.mxu0 0.0
    %3276 = vmatpush1.msra.mxu0 0.0
    %3277 = vmatprep.subr.mxu0 0.0
    %3278 = vmatpush1.msra.mxu0 0.0
    %3279 = vmatprep.subr.mxu0 0.0
    %3280 = vmatpush1.msra.mxu0 0.0
    %3281 = vmatprep.subr.mxu0 0.0
    %3282 = vmatpush1.msra.mxu0 0.0
    %3283 = vmatprep.subr.mxu0 0.0
    %3284 = vmatpush1.msra.mxu0 0.0
    %3285 = vmatprep.subr.mxu0 0.0
    %3286 = vmatpush1.msra.mxu0 0.0
    %3287 = vmatprep.subr.mxu0 0.0
    %3288 = vmatpush1.msra.mxu0 0.0
    %3289 = vmatprep.subr.mxu0 0.0
    %3290 = vmatpush1.msra.mxu0 0.0
    %3291 = vmatprep.subr.mxu0 0.0
    %3292 = vmatpush1.msra.mxu0 0.0
    %3293 = vmatprep.subr.mxu0 0.0
    %3294 = vmatpush1.msra.mxu0 0.0
    %3295 = vmatprep.subr.mxu0 0.0
    %3296 = vmatpush1.msra.mxu0 0.0
    %3297 = vmatprep.subr.mxu0 0.0
    %3298 = vmatpush1.msra.mxu0 0.0
    %3299 = vmatprep.subr.mxu0 0.0
    %3300 = vmatpush1.msra.mxu0 0.0
    %3301 = vmatprep.subr.mxu0 0.0
    %3302 = vmatpush1.msra.mxu0 0.0
    %3303 = vmatprep.subr.mxu0 0.0
    %3304 = vmatpush1.msra.mxu0 0.0
    %3305 = vmatprep.subr.mxu0 0.0
    %3306 = vmatpush1.msra.mxu0 0.0
    %3307 = vmatprep.subr.mxu0 0.0
    %3308 = vmatpush1.msra.mxu0 0.0
    %3309 = vmatprep.subr.mxu0 0.0
    %3310 = vmatpush1.msra.mxu0 0.0
    %3311 = vmatprep.subr.mxu0 0.0
    %3312 = vmatpush1.msra.mxu0 0.0
    %3313 = vmatprep.subr.mxu0 0.0
    %3314 = vmatpush1.msra.mxu0 0.0
    %3315 = vmatprep.subr.mxu0 0.0
    %3316 = vmatpush1.msra.mxu0 0.0
    %3317 = vmatprep.subr.mxu0 0.0
    %3318 = vmatpush1.msra.mxu0 0.0
    %3319 = vmatprep.mubr.f32.mxu0 0.0
    %3320 = vmatmul.mubr.f32.gmra.mrb[0].mxu0 %v3183
    %v3321 = vpop.f32.mrb[0].mxu0
    %v3322 = vadd.f32 %v709, %v3321
    %v3323 = vpop.f32.mrb[0].mxu0
    %3324 = vdwg.mxu0
    %3325 = vmatprep.subr.mxu0 0.0
    %3326 = vmatpush1.msra.mxu0 %v677
    %3327 = vmatprep.subr.mxu0 0.0
    %3328 = vmatpush1.msra.mxu0 %v678
    %3329 = vmatprep.subr.mxu0 0.0
    %3330 = vmatpush1.msra.mxu0 %v679
    %3331 = vmatprep.subr.mxu0 0.0
    %3332 = vmatpush1.msra.mxu0 %v680
    %3333 = vmatprep.subr.mxu0 0.0
    %3334 = vmatpush1.msra.mxu0 0.0
    %3335 = vmatprep.subr.mxu0 0.0
    %3336 = vmatpush1.msra.mxu0 0.0
    %3337 = vmatprep.subr.mxu0 0.0
    %3338 = vmatpush1.msra.mxu0 0.0
    %3339 = vmatprep.subr.mxu0 0.0
    %3340 = vmatpush1.msra.mxu0 0.0
    %3341 = vmatprep.subr.mxu0 0.0
    %3342 = vmatpush1.msra.mxu0 0.0
    %3343 = vmatprep.subr.mxu0 0.0
    %3344 = vmatpush1.msra.mxu0 0.0
    %3345 = vmatprep.subr.mxu0 0.0
    %3346 = vmatpush1.msra.mxu0 0.0
    %3347 = vmatprep.subr.mxu0 0.0
    %3348 = vmatpush1.msra.mxu0 0.0
    %3349 = vmatprep.subr.mxu0 0.0
    %3350 = vmatpush1.msra.mxu0 0.0
    %3351 = vmatprep.subr.mxu0 0.0
    %3352 = vmatpush1.msra.mxu0 0.0
    %3353 = vmatprep.subr.mxu0 0.0
    %3354 = vmatpush1.msra.mxu0 0.0
    %3355 = vmatprep.subr.mxu0 0.0
    %3356 = vmatpush1.msra.mxu0 0.0
    %3357 = vmatprep.subr.mxu0 0.0
    %3358 = vmatpush1.msra.mxu0 0.0
    %3359 = vmatprep.subr.mxu0 0.0
    %3360 = vmatpush1.msra.mxu0 0.0
    %3361 = vmatprep.subr.mxu0 0.0
    %3362 = vmatpush1.msra.mxu0 0.0
    %3363 = vmatprep.subr.mxu0 0.0
    %3364 = vmatpush1.msra.mxu0 0.0
    %3365 = vmatprep.subr.mxu0 0.0
    %3366 = vmatpush1.msra.mxu0 0.0
    %3367 = vmatprep.subr.mxu0 0.0
    %3368 = vmatpush1.msra.mxu0 0.0
    %3369 = vmatprep.subr.mxu0 0.0
    %3370 = vmatpush1.msra.mxu0 0.0
    %3371 = vmatprep.subr.mxu0 0.0
    %3372 = vmatpush1.msra.mxu0 0.0
    %3373 = vmatprep.subr.mxu0 0.0
    %3374 = vmatpush1.msra.mxu0 0.0
    %3375 = vmatprep.subr.mxu0 0.0
    %3376 = vmatpush1.msra.mxu0 0.0
    %3377 = vmatprep.subr.mxu0 0.0
    %3378 = vmatpush1.msra.mxu0 0.0
    %3379 = vmatprep.subr.mxu0 0.0
    %3380 = vmatpush1.msra.mxu0 0.0
    %3381 = vmatprep.subr.mxu0 0.0
    %3382 = vmatpush1.msra.mxu0 0.0
    %3383 = vmatprep.subr.mxu0 0.0
    %3384 = vmatpush1.msra.mxu0 0.0
    %3385 = vmatprep.subr.mxu0 0.0
    %3386 = vmatpush1.msra.mxu0 0.0
    %3387 = vmatprep.subr.mxu0 0.0
    %3388 = vmatpush1.msra.mxu0 0.0
    %3389 = vmatprep.mubr.f32.mxu0 0.0
    %3390 = vmatmul.mubr.f32.gmra.mrb[0].mxu0 %v3183
    %v3391 = vpop.f32.mrb[0].mxu0
    %v3392 = vadd.f32 %v717, %v3391
    %v3393 = vpop.f32.mrb[0].mxu0
    %3394 = vdwg.mxu0
    %v3395 = vadd.f32 %v3179, %v3252
    %v3396 = vxor.u32 %v3395, 2147483648
    %v3397 = vmul.f32 %v3396, 1.442695
    %v3398 = vpow.pop %v3397
    %v3399 = vadd.f32 %v3398, 1.0
    %v3400 = vrcp.pop %v3399
    %v3401 = vmul.f32 1.0, %v3400
    %v3402 = vadd.f32 %v3180, %v3322
    %v3403 = vxor.u32 %v3402, 2147483648
    %v3404 = vmul.f32 %v3403, 1.442695
    %v3405 = vpow.pop %v3404
    %v3406 = vadd.f32 %v3405, 1.0
    %v3407 = vrcp.pop %v3406
    %v3408 = vmul.f32 1.0, %v3407
    %v3409 = vmul.f32 %v3401, %v3392
    %v3410 = vadd.f32 %v3181, %v3409
    %v3411 = vtanh.pop %v3410
    %v3412 = vsub.f32 1.0, %v3408
    %v3413 = vmul.f32 %v3412, %v3411
    %v3414 = vmul.f32 %v3408, %v2938
    %v3415 = vadd.f32 %v3413, %v3414
    %v3416 = vsel %vm2207, %v3415, %v2938
    %v3417 = vld [vmem:[#allocation5 + $0x8] sm:$0xf]
    %v3418 = vld [vmem:[#allocation6 + $0x8] sm:$0xf]
    %v3419 = vld [vmem:[#allocation7 + $0x8] sm:$0xf]
    %v3421 = vsel %vm55, %v3178, 0
    %3423 = vmatprep.subr.mxu0 0.0
    %3424 = vmatpush1.msra.mxu0 %v682
    %3425 = vmatprep.subr.mxu0 0.0
    %3426 = vmatpush1.msra.mxu0 %v683
    %3427 = vmatprep.subr.mxu0 0.0
    %3428 = vmatpush1.msra.mxu0 %v684
    %3429 = vmatprep.subr.mxu0 0.0
    %3430 = vmatpush1.msra.mxu0 %v685
    %3431 = vmatprep.subr.mxu0 0.0
    %3432 = vmatpush1.msra.mxu0 0.0
    %3433 = vmatprep.subr.mxu0 0.0
    %3434 = vmatpush1.msra.mxu0 0.0
    %3435 = vmatprep.subr.mxu0 0.0
    %3436 = vmatpush1.msra.mxu0 0.0
    %3437 = vmatprep.subr.mxu0 0.0
    %3438 = vmatpush1.msra.mxu0 0.0
    %3439 = vmatprep.subr.mxu0 0.0
    %3440 = vmatpush1.msra.mxu0 0.0
    %3441 = vmatprep.subr.mxu0 0.0
    %3442 = vmatpush1.msra.mxu0 0.0
    %3443 = vmatprep.subr.mxu0 0.0
    %3444 = vmatpush1.msra.mxu0 0.0
    %3445 = vmatprep.subr.mxu0 0.0
    %3446 = vmatpush1.msra.mxu0 0.0
    %3447 = vmatprep.subr.mxu0 0.0
    %3448 = vmatpush1.msra.mxu0 0.0
    %3449 = vmatprep.subr.mxu0 0.0
    %3450 = vmatpush1.msra.mxu0 0.0
    %3451 = vmatprep.subr.mxu0 0.0
    %3452 = vmatpush1.msra.mxu0 0.0
    %3453 = vmatprep.subr.mxu0 0.0
    %3454 = vmatpush1.msra.mxu0 0.0
    %3455 = vmatprep.subr.mxu0 0.0
    %3456 = vmatpush1.msra.mxu0 0.0
    %3457 = vmatprep.subr.mxu0 0.0
    %3458 = vmatpush1.msra.mxu0 0.0
    %3459 = vmatprep.subr.mxu0 0.0
    %3460 = vmatpush1.msra.mxu0 0.0
    %3461 = vmatprep.subr.mxu0 0.0
    %3462 = vmatpush1.msra.mxu0 0.0
    %3463 = vmatprep.subr.mxu0 0.0
    %3464 = vmatpush1.msra.mxu0 0.0
    %3465 = vmatprep.subr.mxu0 0.0
    %3466 = vmatpush1.msra.mxu0 0.0
    %3467 = vmatprep.subr.mxu0 0.0
    %3468 = vmatpush1.msra.mxu0 0.0
    %3469 = vmatprep.subr.mxu0 0.0
    %3470 = vmatpush1.msra.mxu0 0.0
    %3471 = vmatprep.subr.mxu0 0.0
    %3472 = vmatpush1.msra.mxu0 0.0
    %3473 = vmatprep.subr.mxu0 0.0
    %3474 = vmatpush1.msra.mxu0 0.0
    %3475 = vmatprep.subr.mxu0 0.0
    %3476 = vmatpush1.msra.mxu0 0.0
    %3477 = vmatprep.subr.mxu0 0.0
    %3478 = vmatpush1.msra.mxu0 0.0
    %3479 = vmatprep.subr.mxu0 0.0
    %3480 = vmatpush1.msra.mxu0 0.0
    %3481 = vmatprep.subr.mxu0 0.0
    %3482 = vmatpush1.msra.mxu0 0.0
    %3483 = vmatprep.subr.mxu0 0.0
    %3484 = vmatpush1.msra.mxu0 0.0
    %3485 = vmatprep.subr.mxu0 0.0
    %3486 = vmatpush1.msra.mxu0 0.0
    %3487 = vmatprep.mubr.f32.mxu0 0.0
    %3488 = vmatmul.mubr.f32.gmra.mrb[0].mxu0 %v3421
    %v3489 = vpop.f32.mrb[0].mxu0
    %v3490 = vadd.f32 %v725, %v3489
    %v3491 = vpop.f32.mrb[0].mxu0
    %3492 = vdwg.mxu0
    %3493 = vmatprep.subr.mxu0 0.0
    %3494 = vmatpush1.msra.mxu0 %v687
    %3495 = vmatprep.subr.mxu0 0.0
    %3496 = vmatpush1.msra.mxu0 %v688
    %3497 = vmatprep.subr.mxu0 0.0
    %3498 = vmatpush1.msra.mxu0 %v689
    %3499 = vmatprep.subr.mxu0 0.0
    %3500 = vmatpush1.msra.mxu0 %v690
    %3501 = vmatprep.subr.mxu0 0.0
    %3502 = vmatpush1.msra.mxu0 0.0
    %3503 = vmatprep.subr.mxu0 0.0
    %3504 = vmatpush1.msra.mxu0 0.0
    %3505 = vmatprep.subr.mxu0 0.0
    %3506 = vmatpush1.msra.mxu0 0.0
    %3507 = vmatprep.subr.mxu0 0.0
    %3508 = vmatpush1.msra.mxu0 0.0
    %3509 = vmatprep.subr.mxu0 0.0
    %3510 = vmatpush1.msra.mxu0 0.0
    %3511 = vmatprep.subr.mxu0 0.0
    %3512 = vmatpush1.msra.mxu0 0.0
    %3513 = vmatprep.subr.mxu0 0.0
    %3514 = vmatpush1.msra.mxu0 0.0
    %3515 = vmatprep.subr.mxu0 0.0
    %3516 = vmatpush1.msra.mxu0 0.0
    %3517 = vmatprep.subr.mxu0 0.0
    %3518 = vmatpush1.msra.mxu0 0.0
    %3519 = vmatprep.subr.mxu0 0.0
    %3520 = vmatpush1.msra.mxu0 0.0
    %3521 = vmatprep.subr.mxu0 0.0
    %3522 = vmatpush1.msra.mxu0 0.0
    %3523 = vmatprep.subr.mxu0 0.0
    %3524 = vmatpush1.msra.mxu0 0.0
    %3525 = vmatprep.subr.mxu0 0.0
    %3526 = vmatpush1.msra.mxu0 0.0
    %3527 = vmatprep.subr.mxu0 0.0
    %3528 = vmatpush1.msra.mxu0 0.0
    %3529 = vmatprep.subr.mxu0 0.0
    %3530 = vmatpush1.msra.mxu0 0.0
    %3531 = vmatprep.subr.mxu0 0.0
    %3532 = vmatpush1.msra.mxu0 0.0
    %3533 = vmatprep.subr.mxu0 0.0
    %3534 = vmatpush1.msra.mxu0 0.0
    %3535 = vmatprep.subr.mxu0 0.0
    %3536 = vmatpush1.msra.mxu0 0.0
    %3537 = vmatprep.subr.mxu0 0.0
    %3538 = vmatpush1.msra.mxu0 0.0
    %3539 = vmatprep.subr.mxu0 0.0
    %3540 = vmatpush1.msra.mxu0 0.0
    %3541 = vmatprep.subr.mxu0 0.0
    %3542 = vmatpush1.msra.mxu0 0.0
    %3543 = vmatprep.subr.mxu0 0.0
    %3544 = vmatpush1.msra.mxu0 0.0
    %3545 = vmatprep.subr.mxu0 0.0
    %3546 = vmatpush1.msra.mxu0 0.0
    %3547 = vmatprep.subr.mxu0 0.0
    %3548 = vmatpush1.msra.mxu0 0.0
    %3549 = vmatprep.subr.mxu0 0.0
    %3550 = vmatpush1.msra.mxu0 0.0
    %3551 = vmatprep.subr.mxu0 0.0
    %3552 = vmatpush1.msra.mxu0 0.0
    %3553 = vmatprep.subr.mxu0 0.0
    %3554 = vmatpush1.msra.mxu0 0.0
    %3555 = vmatprep.subr.mxu0 0.0
    %3556 = vmatpush1.msra.mxu0 0.0
    %3557 = vmatprep.mubr.f32.mxu0 0.0
    %3558 = vmatmul.mubr.f32.gmra.mrb[0].mxu0 %v3421
    %v3559 = vpop.f32.mrb[0].mxu0
    %v3560 = vadd.f32 %v733, %v3559
    %v3561 = vpop.f32.mrb[0].mxu0
    %3562 = vdwg.mxu0
    %3563 = vmatprep.subr.mxu0 0.0
    %3564 = vmatpush1.msra.mxu0 %v692
    %3565 = vmatprep.subr.mxu0 0.0
    %3566 = vmatpush1.msra.mxu0 %v693
    %3567 = vmatprep.subr.mxu0 0.0
    %3568 = vmatpush1.msra.mxu0 %v694
    %3569 = vmatprep.subr.mxu0 0.0
    %3570 = vmatpush1.msra.mxu0 %v695
    %3571 = vmatprep.subr.mxu0 0.0
    %3572 = vmatpush1.msra.mxu0 0.0
    %3573 = vmatprep.subr.mxu0 0.0
    %3574 = vmatpush1.msra.mxu0 0.0
    %3575 = vmatprep.subr.mxu0 0.0
    %3576 = vmatpush1.msra.mxu0 0.0
    %3577 = vmatprep.subr.mxu0 0.0
    %3578 = vmatpush1.msra.mxu0 0.0
    %3579 = vmatprep.subr.mxu0 0.0
    %3580 = vmatpush1.msra.mxu0 0.0
    %3581 = vmatprep.subr.mxu0 0.0
    %3582 = vmatpush1.msra.mxu0 0.0
    %3583 = vmatprep.subr.mxu0 0.0
    %3584 = vmatpush1.msra.mxu0 0.0
    %3585 = vmatprep.subr.mxu0 0.0
    %3586 = vmatpush1.msra.mxu0 0.0
    %3587 = vmatprep.subr.mxu0 0.0
    %3588 = vmatpush1.msra.mxu0 0.0
    %3589 = vmatprep.subr.mxu0 0.0
    %3590 = vmatpush1.msra.mxu0 0.0
    %3591 = vmatprep.subr.mxu0 0.0
    %3592 = vmatpush1.msra.mxu0 0.0
    %3593 = vmatprep.subr.mxu0 0.0
    %3594 = vmatpush1.msra.mxu0 0.0
    %3595 = vmatprep.subr.mxu0 0.0
    %3596 = vmatpush1.msra.mxu0 0.0
    %3597 = vmatprep.subr.mxu0 0.0
    %3598 = vmatpush1.msra.mxu0 0.0
    %3599 = vmatprep.subr.mxu0 0.0
    %3600 = vmatpush1.msra.mxu0 0.0
    %3601 = vmatprep.subr.mxu0 0.0
    %3602 = vmatpush1.msra.mxu0 0.0
    %3603 = vmatprep.subr.mxu0 0.0
    %3604 = vmatpush1.msra.mxu0 0.0
    %3605 = vmatprep.subr.mxu0 0.0
    %3606 = vmatpush1.msra.mxu0 0.0
    %3607 = vmatprep.subr.mxu0 0.0
    %3608 = vmatpush1.msra.mxu0 0.0
    %3609 = vmatprep.subr.mxu0 0.0
    %3610 = vmatpush1.msra.mxu0 0.0
    %3611 = vmatprep.subr.mxu0 0.0
    %3612 = vmatpush1.msra.mxu0 0.0
    %3613 = vmatprep.subr.mxu0 0.0
    %3614 = vmatpush1.msra.mxu0 0.0
    %3615 = vmatprep.subr.mxu0 0.0
    %3616 = vmatpush1.msra.mxu0 0.0
    %3617 = vmatprep.subr.mxu0 0.0
    %3618 = vmatpush1.msra.mxu0 0.0
    %3619 = vmatprep.subr.mxu0 0.0
    %3620 = vmatpush1.msra.mxu0 0.0
    %3621 = vmatprep.subr.mxu0 0.0
    %3622 = vmatpush1.msra.mxu0 0.0
    %3623 = vmatprep.subr.mxu0 0.0
    %3624 = vmatpush1.msra.mxu0 0.0
    %3625 = vmatprep.subr.mxu0 0.0
    %3626 = vmatpush1.msra.mxu0 0.0
    %3627 = vmatprep.mubr.f32.mxu0 0.0
    %3628 = vmatmul.mubr.f32.gmra.mrb[0].mxu0 %v3421
    %v3629 = vpop.f32.mrb[0].mxu0
    %v3630 = vadd.f32 %v741, %v3629
    %v3631 = vpop.f32.mrb[0].mxu0
    %3632 = vdwg.mxu0
    %v3633 = vadd.f32 %v3417, %v3490
    %v3634 = vxor.u32 %v3633, 2147483648
    %v3635 = vmul.f32 %v3634, 1.442695
    %v3636 = vpow.pop %v3635
    %v3637 = vadd.f32 %v3636, 1.0
    %v3638 = vrcp.pop %v3637
    %v3639 = vmul.f32 1.0, %v3638
    %v3640 = vadd.f32 %v3418, %v3560
    %v3641 = vxor.u32 %v3640, 2147483648
    %v3642 = vmul.f32 %v3641, 1.442695
    %v3643 = vpow.pop %v3642
    %v3644 = vadd.f32 %v3643, 1.0
    %v3645 = vrcp.pop %v3644
    %v3646 = vmul.f32 1.0, %v3645
    %v3647 = vmul.f32 %v3639, %v3630
    %v3648 = vadd.f32 %v3419, %v3647
    %v3649 = vtanh.pop %v3648
    %v3650 = vsub.f32 1.0, %v3646
    %v3651 = vmul.f32 %v3650, %v3649
    %v3652 = vmul.f32 %v3646, %v3178
    %v3653 = vadd.f32 %v3651, %v3652
    %v3654 = vsel %vm1963, %v3653, 0.0
    %3655 = vst.msk [vmem:[%s6 + $0x8] sm:$0xf] %vm1229, %v3654
    %v3656 = vsel %vm1963, %v3653, %v3178
    %v3657 = vld [vmem:[#allocation2 + $0x18] sm:$0xf]
    %v3658 = vld [vmem:[#allocation3 + $0x18] sm:$0xf]
    %v3659 = vld [vmem:[#allocation4 + $0x18] sm:$0xf]
    %v3661 = vsel %vm55, %v3416, 0
    %3663 = vmatprep.subr.mxu0 0.0
    %3664 = vmatpush1.msra.mxu0 %v667
    %3665 = vmatprep.subr.mxu0 0.0
    %3666 = vmatpush1.msra.mxu0 %v668
    %3667 = vmatprep.subr.mxu0 0.0
    %3668 = vmatpush1.msra.mxu0 %v669
    %3669 = vmatprep.subr.mxu0 0.0
    %3670 = vmatpush1.msra.mxu0 %v670
    %3671 = vmatprep.subr.mxu0 0.0
    %3672 = vmatpush1.msra.mxu0 0.0
    %3673 = vmatprep.subr.mxu0 0.0
    %3674 = vmatpush1.msra.mxu0 0.0
    %3675 = vmatprep.subr.mxu0 0.0
    %3676 = vmatpush1.msra.mxu0 0.0
    %3677 = vmatprep.subr.mxu0 0.0
    %3678 = vmatpush1.msra.mxu0 0.0
    %3679 = vmatprep.subr.mxu0 0.0
    %3680 = vmatpush1.msra.mxu0 0.0
    %3681 = vmatprep.subr.mxu0 0.0
    %3682 = vmatpush1.msra.mxu0 0.0
    %3683 = vmatprep.subr.mxu0 0.0
    %3684 = vmatpush1.msra.mxu0 0.0
    %3685 = vmatprep.subr.mxu0 0.0
    %3686 = vmatpush1.msra.mxu0 0.0
    %3687 = vmatprep.subr.mxu0 0.0
    %3688 = vmatpush1.msra.mxu0 0.0
    %3689 = vmatprep.subr.mxu0 0.0
    %3690 = vmatpush1.msra.mxu0 0.0
    %3691 = vmatprep.subr.mxu0 0.0
    %3692 = vmatpush1.msra.mxu0 0.0
    %3693 = vmatprep.subr.mxu0 0.0
    %3694 = vmatpush1.msra.mxu0 0.0
    %3695 = vmatprep.subr.mxu0 0.0
    %3696 = vmatpush1.msra.mxu0 0.0
    %3697 = vmatprep.subr.mxu0 0.0
    %3698 = vmatpush1.msra.mxu0 0.0
    %3699 = vmatprep.subr.mxu0 0.0
    %3700 = vmatpush1.msra.mxu0 0.0
    %3701 = vmatprep.subr.mxu0 0.0
    %3702 = vmatpush1.msra.mxu0 0.0
    %3703 = vmatprep.subr.mxu0 0.0
    %3704 = vmatpush1.msra.mxu0 0.0
    %3705 = vmatprep.subr.mxu0 0.0
    %3706 = vmatpush1.msra.mxu0 0.0
    %3707 = vmatprep.subr.mxu0 0.0
    %3708 = vmatpush1.msra.mxu0 0.0
    %3709 = vmatprep.subr.mxu0 0.0
    %3710 = vmatpush1.msra.mxu0 0.0
    %3711 = vmatprep.subr.mxu0 0.0
    %3712 = vmatpush1.msra.mxu0 0.0
    %3713 = vmatprep.subr.mxu0 0.0
    %3714 = vmatpush1.msra.mxu0 0.0
    %3715 = vmatprep.subr.mxu0 0.0
    %3716 = vmatpush1.msra.mxu0 0.0
    %3717 = vmatprep.subr.mxu0 0.0
    %3718 = vmatpush1.msra.mxu0 0.0
    %3719 = vmatprep.subr.mxu0 0.0
    %3720 = vmatpush1.msra.mxu0 0.0
    %3721 = vmatprep.subr.mxu0 0.0
    %3722 = vmatpush1.msra.mxu0 0.0
    %3723 = vmatprep.subr.mxu0 0.0
    %3724 = vmatpush1.msra.mxu0 0.0
    %3725 = vmatprep.subr.mxu0 0.0
    %3726 = vmatpush1.msra.mxu0 0.0
    %3727 = vmatprep.mubr.f32.mxu0 0.0
    %3728 = vmatmul.mubr.f32.gmra.mrb[0].mxu0 %v3661
    %v3729 = vpop.f32.mrb[0].mxu0
    %v3730 = vadd.f32 %v701, %v3729
    %v3731 = vpop.f32.mrb[0].mxu0
    %3732 = vdwg.mxu0
    %3733 = vmatprep.subr.mxu0 0.0
    %3734 = vmatpush1.msra.mxu0 %v672
    %3735 = vmatprep.subr.mxu0 0.0
    %3736 = vmatpush1.msra.mxu0 %v673
    %3737 = vmatprep.subr.mxu0 0.0
    %3738 = vmatpush1.msra.mxu0 %v674
    %3739 = vmatprep.subr.mxu0 0.0
    %3740 = vmatpush1.msra.mxu0 %v675
    %3741 = vmatprep.subr.mxu0 0.0
    %3742 = vmatpush1.msra.mxu0 0.0
    %3743 = vmatprep.subr.mxu0 0.0
    %3744 = vmatpush1.msra.mxu0 0.0
    %3745 = vmatprep.subr.mxu0 0.0
    %3746 = vmatpush1.msra.mxu0 0.0
    %3747 = vmatprep.subr.mxu0 0.0
    %3748 = vmatpush1.msra.mxu0 0.0
    %3749 = vmatprep.subr.mxu0 0.0
    %3750 = vmatpush1.msra.mxu0 0.0
    %3751 = vmatprep.subr.mxu0 0.0
    %3752 = vmatpush1.msra.mxu0 0.0
    %3753 = vmatprep.subr.mxu0 0.0
    %3754 = vmatpush1.msra.mxu0 0.0
    %3755 = vmatprep.subr.mxu0 0.0
    %3756 = vmatpush1.msra.mxu0 0.0
    %3757 = vmatprep.subr.mxu0 0.0
    %3758 = vmatpush1.msra.mxu0 0.0
    %3759 = vmatprep.subr.mxu0 0.0
    %3760 = vmatpush1.msra.mxu0 0.0
    %3761 = vmatprep.subr.mxu0 0.0
    %3762 = vmatpush1.msra.mxu0 0.0
    %3763 = vmatprep.subr.mxu0 0.0
    %3764 = vmatpush1.msra.mxu0 0.0
    %3765 = vmatprep.subr.mxu0 0.0
    %3766 = vmatpush1.msra.mxu0 0.0
    %3767 = vmatprep.subr.mxu0 0.0
    %3768 = vmatpush1.msra.mxu0 0.0
    %3769 = vmatprep.subr.mxu0 0.0
    %3770 = vmatpush1.msra.mxu0 0.0
    %3771 = vmatprep.subr.mxu0 0.0
    %3772 = vmatpush1.msra.mxu0 0.0
    %3773 = vmatprep.subr.mxu0 0.0
    %3774 = vmatpush1.msra.mxu0 0.0
    %3775 = vmatprep.subr.mxu0 0.0
    %3776 = vmatpush1.msra.mxu0 0.0
    %3777 = vmatprep.subr.mxu0 0.0
    %3778 = vmatpush1.msra.mxu0 0.0
    %3779 = vmatprep.subr.mxu0 0.0
    %3780 = vmatpush1.msra.mxu0 0.0
    %3781 = vmatprep.subr.mxu0 0.0
    %3782 = vmatpush1.msra.mxu0 0.0
    %3783 = vmatprep.subr.mxu0 0.0
    %3784 = vmatpush1.msra.mxu0 0.0
    %3785 = vmatprep.subr.mxu0 0.0
    %3786 = vmatpush1.msra.mxu0 0.0
    %3787 = vmatprep.subr.mxu0 0.0
    %3788 = vmatpush1.msra.mxu0 0.0
    %3789 = vmatprep.subr.mxu0 0.0
    %3790 = vmatpush1.msra.mxu0 0.0
    %3791 = vmatprep.subr.mxu0 0.0
    %3792 = vmatpush1.msra.mxu0 0.0
    %3793 = vmatprep.subr.mxu0 0.0
    %3794 = vmatpush1.msra.mxu0 0.0
    %3795 = vmatprep.subr.mxu0 0.0
    %3796 = vmatpush1.msra.mxu0 0.0
    %3797 = vmatprep.mubr.f32.mxu0 0.0
    %3798 = vmatmul.mubr.f32.gmra.mrb[0].mxu0 %v3661
    %v3799 = vpop.f32.mrb[0].mxu0
    %v3800 = vadd.f32 %v709, %v3799
    %v3801 = vpop.f32.mrb[0].mxu0
    %3802 = vdwg.mxu0
    %3803 = vmatprep.subr.mxu0 0.0
    %3804 = vmatpush1.msra.mxu0 %v677
    %3805 = vmatprep.subr.mxu0 0.0
    %3806 = vmatpush1.msra.mxu0 %v678
    %3807 = vmatprep.subr.mxu0 0.0
    %3808 = vmatpush1.msra.mxu0 %v679
    %3809 = vmatprep.subr.mxu0 0.0
    %3810 = vmatpush1.msra.mxu0 %v680
    %3811 = vmatprep.subr.mxu0 0.0
    %3812 = vmatpush1.msra.mxu0 0.0
    %3813 = vmatprep.subr.mxu0 0.0
    %3814 = vmatpush1.msra.mxu0 0.0
    %3815 = vmatprep.subr.mxu0 0.0
    %3816 = vmatpush1.msra.mxu0 0.0
    %3817 = vmatprep.subr.mxu0 0.0
    %3818 = vmatpush1.msra.mxu0 0.0
    %3819 = vmatprep.subr.mxu0 0.0
    %3820 = vmatpush1.msra.mxu0 0.0
    %3821 = vmatprep.subr.mxu0 0.0
    %3822 = vmatpush1.msra.mxu0 0.0
    %3823 = vmatprep.subr.mxu0 0.0
    %3824 = vmatpush1.msra.mxu0 0.0
    %3825 = vmatprep.subr.mxu0 0.0
    %3826 = vmatpush1.msra.mxu0 0.0
    %3827 = vmatprep.subr.mxu0 0.0
    %3828 = vmatpush1.msra.mxu0 0.0
    %3829 = vmatprep.subr.mxu0 0.0
    %3830 = vmatpush1.msra.mxu0 0.0
    %3831 = vmatprep.subr.mxu0 0.0
    %3832 = vmatpush1.msra.mxu0 0.0
    %3833 = vmatprep.subr.mxu0 0.0
    %3834 = vmatpush1.msra.mxu0 0.0
    %3835 = vmatprep.subr.mxu0 0.0
    %3836 = vmatpush1.msra.mxu0 0.0
    %3837 = vmatprep.subr.mxu0 0.0
    %3838 = vmatpush1.msra.mxu0 0.0
    %3839 = vmatprep.subr.mxu0 0.0
    %3840 = vmatpush1.msra.mxu0 0.0
    %3841 = vmatprep.subr.mxu0 0.0
    %3842 = vmatpush1.msra.mxu0 0.0
    %3843 = vmatprep.subr.mxu0 0.0
    %3844 = vmatpush1.msra.mxu0 0.0
    %3845 = vmatprep.subr.mxu0 0.0
    %3846 = vmatpush1.msra.mxu0 0.0
    %3847 = vmatprep.subr.mxu0 0.0
    %3848 = vmatpush1.msra.mxu0 0.0
    %3849 = vmatprep.subr.mxu0 0.0
    %3850 = vmatpush1.msra.mxu0 0.0
    %3851 = vmatprep.subr.mxu0 0.0
    %3852 = vmatpush1.msra.mxu0 0.0
    %3853 = vmatprep.subr.mxu0 0.0
    %3854 = vmatpush1.msra.mxu0 0.0
    %3855 = vmatprep.subr.mxu0 0.0
    %3856 = vmatpush1.msra.mxu0 0.0
    %3857 = vmatprep.subr.mxu0 0.0
    %3858 = vmatpush1.msra.mxu0 0.0
    %3859 = vmatprep.subr.mxu0 0.0
    %3860 = vmatpush1.msra.mxu0 0.0
    %3861 = vmatprep.subr.mxu0 0.0
    %3862 = vmatpush1.msra.mxu0 0.0
    %3863 = vmatprep.subr.mxu0 0.0
    %3864 = vmatpush1.msra.mxu0 0.0
    %3865 = vmatprep.subr.mxu0 0.0
    %3866 = vmatpush1.msra.mxu0 0.0
    %3867 = vmatprep.mubr.f32.mxu0 0.0
    %3868 = vmatmul.mubr.f32.gmra.mrb[0].mxu0 %v3661
    %v3869 = vpop.f32.mrb[0].mxu0
    %v3870 = vadd.f32 %v717, %v3869
    %v3871 = vpop.f32.mrb[0].mxu0
    %3872 = vdwg.mxu0
    %v3873 = vadd.f32 %v3657, %v3730
    %v3874 = vxor.u32 %v3873, 2147483648
    %v3875 = vmul.f32 %v3874, 1.442695
    %v3876 = vpow.pop %v3875
    %v3877 = vadd.f32 %v3876, 1.0
    %v3878 = vrcp.pop %v3877
    %v3879 = vmul.f32 1.0, %v3878
    %v3880 = vadd.f32 %v3658, %v3800
    %v3881 = vxor.u32 %v3880, 2147483648
    %v3882 = vmul.f32 %v3881, 1.442695
    %v3883 = vpow.pop %v3882
    %v3884 = vadd.f32 %v3883, 1.0
    %v3885 = vrcp.pop %v3884
    %v3886 = vmul.f32 1.0, %v3885
    %v3887 = vmul.f32 %v3879, %v3870
    %v3888 = vadd.f32 %v3659, %v3887
    %v3889 = vtanh.pop %v3888
    %v3890 = vsub.f32 1.0, %v3886
    %v3891 = vmul.f32 %v3890, %v3889
    %v3892 = vmul.f32 %v3886, %v3416
    %v3893 = vadd.f32 %v3891, %v3892
    %v3894 = vsel %vm1717, %v3893, %v3416
    %v3895 = vld [vmem:[#allocation5 + $0x4] sm:$0xf]
    %v3896 = vld [vmem:[#allocation6 + $0x4] sm:$0xf]
    %v3897 = vld [vmem:[#allocation7 + $0x4] sm:$0xf]
    %v3899 = vsel %vm55, %v3656, 0
    %3901 = vmatprep.subr.mxu0 0.0
    %3902 = vmatpush1.msra.mxu0 %v682
    %3903 = vmatprep.subr.mxu0 0.0
    %3904 = vmatpush1.msra.mxu0 %v683
    %3905 = vmatprep.subr.mxu0 0.0
    %3906 = vmatpush1.msra.mxu0 %v684
    %3907 = vmatprep.subr.mxu0 0.0
    %3908 = vmatpush1.msra.mxu0 %v685
    %3909 = vmatprep.subr.mxu0 0.0
    %3910 = vmatpush1.msra.mxu0 0.0
    %3911 = vmatprep.subr.mxu0 0.0
    %3912 = vmatpush1.msra.mxu0 0.0
    %3913 = vmatprep.subr.mxu0 0.0
    %3914 = vmatpush1.msra.mxu0 0.0
    %3915 = vmatprep.subr.mxu0 0.0
    %3916 = vmatpush1.msra.mxu0 0.0
    %3917 = vmatprep.subr.mxu0 0.0
    %3918 = vmatpush1.msra.mxu0 0.0
    %3919 = vmatprep.subr.mxu0 0.0
    %3920 = vmatpush1.msra.mxu0 0.0
    %3921 = vmatprep.subr.mxu0 0.0
    %3922 = vmatpush1.msra.mxu0 0.0
    %3923 = vmatprep.subr.mxu0 0.0
    %3924 = vmatpush1.msra.mxu0 0.0
    %3925 = vmatprep.subr.mxu0 0.0
    %3926 = vmatpush1.msra.mxu0 0.0
    %3927 = vmatprep.subr.mxu0 0.0
    %3928 = vmatpush1.msra.mxu0 0.0
    %3929 = vmatprep.subr.mxu0 0.0
    %3930 = vmatpush1.msra.mxu0 0.0
    %3931 = vmatprep.subr.mxu0 0.0
    %3932 = vmatpush1.msra.mxu0 0.0
    %3933 = vmatprep.subr.mxu0 0.0
    %3934 = vmatpush1.msra.mxu0 0.0
    %3935 = vmatprep.subr.mxu0 0.0
    %3936 = vmatpush1.msra.mxu0 0.0
    %3937 = vmatprep.subr.mxu0 0.0
    %3938 = vmatpush1.msra.mxu0 0.0
    %3939 = vmatprep.subr.mxu0 0.0
    %3940 = vmatpush1.msra.mxu0 0.0
    %3941 = vmatprep.subr.mxu0 0.0
    %3942 = vmatpush1.msra.mxu0 0.0
    %3943 = vmatprep.subr.mxu0 0.0
    %3944 = vmatpush1.msra.mxu0 0.0
    %3945 = vmatprep.subr.mxu0 0.0
    %3946 = vmatpush1.msra.mxu0 0.0
    %3947 = vmatprep.subr.mxu0 0.0
    %3948 = vmatpush1.msra.mxu0 0.0
    %3949 = vmatprep.subr.mxu0 0.0
    %3950 = vmatpush1.msra.mxu0 0.0
    %3951 = vmatprep.subr.mxu0 0.0
    %3952 = vmatpush1.msra.mxu0 0.0
    %3953 = vmatprep.subr.mxu0 0.0
    %3954 = vmatpush1.msra.mxu0 0.0
    %3955 = vmatprep.subr.mxu0 0.0
    %3956 = vmatpush1.msra.mxu0 0.0
    %3957 = vmatprep.subr.mxu0 0.0
    %3958 = vmatpush1.msra.mxu0 0.0
    %3959 = vmatprep.subr.mxu0 0.0
    %3960 = vmatpush1.msra.mxu0 0.0
    %3961 = vmatprep.subr.mxu0 0.0
    %3962 = vmatpush1.msra.mxu0 0.0
    %3963 = vmatprep.subr.mxu0 0.0
    %3964 = vmatpush1.msra.mxu0 0.0
    %3965 = vmatprep.mubr.f32.mxu0 0.0
    %3966 = vmatmul.mubr.f32.gmra.mrb[0].mxu0 %v3899
    %v3967 = vpop.f32.mrb[0].mxu0
    %v3968 = vadd.f32 %v725, %v3967
    %v3969 = vpop.f32.mrb[0].mxu0
    %3970 = vdwg.mxu0
    %3971 = vmatprep.subr.mxu0 0.0
    %3972 = vmatpush1.msra.mxu0 %v687
    %3973 = vmatprep.subr.mxu0 0.0
    %3974 = vmatpush1.msra.mxu0 %v688
    %3975 = vmatprep.subr.mxu0 0.0
    %3976 = vmatpush1.msra.mxu0 %v689
    %3977 = vmatprep.subr.mxu0 0.0
    %3978 = vmatpush1.msra.mxu0 %v690
    %3979 = vmatprep.subr.mxu0 0.0
    %3980 = vmatpush1.msra.mxu0 0.0
    %3981 = vmatprep.subr.mxu0 0.0
    %3982 = vmatpush1.msra.mxu0 0.0
    %3983 = vmatprep.subr.mxu0 0.0
    %3984 = vmatpush1.msra.mxu0 0.0
    %3985 = vmatprep.subr.mxu0 0.0
    %3986 = vmatpush1.msra.mxu0 0.0
    %3987 = vmatprep.subr.mxu0 0.0
    %3988 = vmatpush1.msra.mxu0 0.0
    %3989 = vmatprep.subr.mxu0 0.0
    %3990 = vmatpush1.msra.mxu0 0.0
    %3991 = vmatprep.subr.mxu0 0.0
    %3992 = vmatpush1.msra.mxu0 0.0
    %3993 = vmatprep.subr.mxu0 0.0
    %3994 = vmatpush1.msra.mxu0 0.0
    %3995 = vmatprep.subr.mxu0 0.0
    %3996 = vmatpush1.msra.mxu0 0.0
    %3997 = vmatprep.subr.mxu0 0.0
    %3998 = vmatpush1.msra.mxu0 0.0
    %3999 = vmatprep.subr.mxu0 0.0
    %4000 = vmatpush1.msra.mxu0 0.0
    %4001 = vmatprep.subr.mxu0 0.0
    %4002 = vmatpush1.msra.mxu0 0.0
    %4003 = vmatprep.subr.mxu0 0.0
    %4004 = vmatpush1.msra.mxu0 0.0
    %4005 = vmatprep.subr.mxu0 0.0
    %4006 = vmatpush1.msra.mxu0 0.0
    %4007 = vmatprep.subr.mxu0 0.0
    %4008 = vmatpush1.msra.mxu0 0.0
    %4009 = vmatprep.subr.mxu0 0.0
    %4010 = vmatpush1.msra.mxu0 0.0
    %4011 = vmatprep.subr.mxu0 0.0
    %4012 = vmatpush1.msra.mxu0 0.0
    %4013 = vmatprep.subr.mxu0 0.0
    %4014 = vmatpush1.msra.mxu0 0.0
    %4015 = vmatprep.subr.mxu0 0.0
    %4016 = vmatpush1.msra.mxu0 0.0
    %4017 = vmatprep.subr.mxu0 0.0
    %4018 = vmatpush1.msra.mxu0 0.0
    %4019 = vmatprep.subr.mxu0 0.0
    %4020 = vmatpush1.msra.mxu0 0.0
    %4021 = vmatprep.subr.mxu0 0.0
    %4022 = vmatpush1.msra.mxu0 0.0
    %4023 = vmatprep.subr.mxu0 0.0
    %4024 = vmatpush1.msra.mxu0 0.0
    %4025 = vmatprep.subr.mxu0 0.0
    %4026 = vmatpush1.msra.mxu0 0.0
    %4027 = vmatprep.subr.mxu0 0.0
    %4028 = vmatpush1.msra.mxu0 0.0
    %4029 = vmatprep.subr.mxu0 0.0
    %4030 = vmatpush1.msra.mxu0 0.0
    %4031 = vmatprep.subr.mxu0 0.0
    %4032 = vmatpush1.msra.mxu0 0.0
    %4033 = vmatprep.subr.mxu0 0.0
    %4034 = vmatpush1.msra.mxu0 0.0
    %4035 = vmatprep.mubr.f32.mxu0 0.0
    %4036 = vmatmul.mubr.f32.gmra.mrb[0].mxu0 %v3899
    %v4037 = vpop.f32.mrb[0].mxu0
    %v4038 = vadd.f32 %v733, %v4037
    %v4039 = vpop.f32.mrb[0].mxu0
    %4040 = vdwg.mxu0
    %4041 = vmatprep.subr.mxu0 0.0
    %4042 = vmatpush1.msra.mxu0 %v692
    %4043 = vmatprep.subr.mxu0 0.0
    %4044 = vmatpush1.msra.mxu0 %v693
    %4045 = vmatprep.subr.mxu0 0.0
    %4046 = vmatpush1.msra.mxu0 %v694
    %4047 = vmatprep.subr.mxu0 0.0
    %4048 = vmatpush1.msra.mxu0 %v695
    %4049 = vmatprep.subr.mxu0 0.0
    %4050 = vmatpush1.msra.mxu0 0.0
    %4051 = vmatprep.subr.mxu0 0.0
    %4052 = vmatpush1.msra.mxu0 0.0
    %4053 = vmatprep.subr.mxu0 0.0
    %4054 = vmatpush1.msra.mxu0 0.0
    %4055 = vmatprep.subr.mxu0 0.0
    %4056 = vmatpush1.msra.mxu0 0.0
    %4057 = vmatprep.subr.mxu0 0.0
    %4058 = vmatpush1.msra.mxu0 0.0
    %4059 = vmatprep.subr.mxu0 0.0
    %4060 = vmatpush1.msra.mxu0 0.0
    %4061 = vmatprep.subr.mxu0 0.0
    %4062 = vmatpush1.msra.mxu0 0.0
    %4063 = vmatprep.subr.mxu0 0.0
    %4064 = vmatpush1.msra.mxu0 0.0
    %4065 = vmatprep.subr.mxu0 0.0
    %4066 = vmatpush1.msra.mxu0 0.0
    %4067 = vmatprep.subr.mxu0 0.0
    %4068 = vmatpush1.msra.mxu0 0.0
    %4069 = vmatprep.subr.mxu0 0.0
    %4070 = vmatpush1.msra.mxu0 0.0
    %4071 = vmatprep.subr.mxu0 0.0
    %4072 = vmatpush1.msra.mxu0 0.0
    %4073 = vmatprep.subr.mxu0 0.0
    %4074 = vmatpush1.msra.mxu0 0.0
    %4075 = vmatprep.subr.mxu0 0.0
    %4076 = vmatpush1.msra.mxu0 0.0
    %4077 = vmatprep.subr.mxu0 0.0
    %4078 = vmatpush1.msra.mxu0 0.0
    %4079 = vmatprep.subr.mxu0 0.0
    %4080 = vmatpush1.msra.mxu0 0.0
    %4081 = vmatprep.subr.mxu0 0.0
    %4082 = vmatpush1.msra.mxu0 0.0
    %4083 = vmatprep.subr.mxu0 0.0
    %4084 = vmatpush1.msra.mxu0 0.0
    %4085 = vmatprep.subr.mxu0 0.0
    %4086 = vmatpush1.msra.mxu0 0.0
    %4087 = vmatprep.subr.mxu0 0.0
    %4088 = vmatpush1.msra.mxu0 0.0
    %4089 = vmatprep.subr.mxu0 0.0
    %4090 = vmatpush1.msra.mxu0 0.0
    %4091 = vmatprep.subr.mxu0 0.0
    %4092 = vmatpush1.msra.mxu0 0.0
    %4093 = vmatprep.subr.mxu0 0.0
    %4094 = vmatpush1.msra.mxu0 0.0
    %4095 = vmatprep.subr.mxu0 0.0
    %4096 = vmatpush1.msra.mxu0 0.0
    %4097 = vmatprep.subr.mxu0 0.0
    %4098 = vmatpush1.msra.mxu0 0.0
    %4099 = vmatprep.subr.mxu0 0.0
    %4100 = vmatpush1.msra.mxu0 0.0
    %4101 = vmatprep.subr.mxu0 0.0
    %4102 = vmatpush1.msra.mxu0 0.0
    %4103 = vmatprep.subr.mxu0 0.0
    %4104 = vmatpush1.msra.mxu0 0.0
    %4105 = vmatprep.mubr.f32.mxu0 0.0
    %4106 = vmatmul.mubr.f32.gmra.mrb[0].mxu0 %v3899
    %v4107 = vpop.f32.mrb[0].mxu0
    %v4108 = vadd.f32 %v741, %v4107
    %v4109 = vpop.f32.mrb[0].mxu0
    %4110 = vdwg.mxu0
    %v4111 = vadd.f32 %v3895, %v3968
    %v4112 = vxor.u32 %v4111, 2147483648
    %v4113 = vmul.f32 %v4112, 1.442695
    %v4114 = vpow.pop %v4113
    %v4115 = vadd.f32 %v4114, 1.0
    %v4116 = vrcp.pop %v4115
    %v4117 = vmul.f32 1.0, %v4116
    %v4118 = vadd.f32 %v3896, %v4038
    %v4119 = vxor.u32 %v4118, 2147483648
    %v4120 = vmul.f32 %v4119, 1.442695
    %v4121 = vpow.pop %v4120
    %v4122 = vadd.f32 %v4121, 1.0
    %v4123 = vrcp.pop %v4122
    %v4124 = vmul.f32 1.0, %v4123
    %v4125 = vmul.f32 %v4117, %v4108
    %v4126 = vadd.f32 %v3897, %v4125
    %v4127 = vtanh.pop %v4126
    %v4128 = vsub.f32 1.0, %v4124
    %v4129 = vmul.f32 %v4128, %v4127
    %v4130 = vmul.f32 %v4124, %v3656
    %v4131 = vadd.f32 %v4129, %v4130
    %v4132 = vsel %vm1473, %v4131, 0.0
    %4133 = vst.msk [vmem:[%s6 + $0x4] sm:$0xf] %vm1229, %v4132
    %v4134 = vsel %vm1473, %v4131, %v3656
    %v4135 = vld [vmem:[#allocation2 + $0x1c] sm:$0xf]
    %v4136 = vld [vmem:[#allocation3 + $0x1c] sm:$0xf]
    %v4137 = vld [vmem:[#allocation4 + $0x1c] sm:$0xf]
    %v4139 = vsel %vm55, %v3894, 0
    %4141 = vmatprep.subr.mxu0 0.0
    %4142 = vmatpush1.msra.mxu0 %v667
    %4143 = vmatprep.subr.mxu0 0.0
    %4144 = vmatpush1.msra.mxu0 %v668
    %4145 = vmatprep.subr.mxu0 0.0
    %4146 = vmatpush1.msra.mxu0 %v669
    %4147 = vmatprep.subr.mxu0 0.0
    %4148 = vmatpush1.msra.mxu0 %v670
    %4149 = vmatprep.subr.mxu0 0.0
    %4150 = vmatpush1.msra.mxu0 0.0
    %4151 = vmatprep.subr.mxu0 0.0
    %4152 = vmatpush1.msra.mxu0 0.0
    %4153 = vmatprep.subr.mxu0 0.0
    %4154 = vmatpush1.msra.mxu0 0.0
    %4155 = vmatprep.subr.mxu0 0.0
    %4156 = vmatpush1.msra.mxu0 0.0
    %4157 = vmatprep.subr.mxu0 0.0
    %4158 = vmatpush1.msra.mxu0 0.0
    %4159 = vmatprep.subr.mxu0 0.0
    %4160 = vmatpush1.msra.mxu0 0.0
    %4161 = vmatprep.subr.mxu0 0.0
    %4162 = vmatpush1.msra.mxu0 0.0
    %4163 = vmatprep.subr.mxu0 0.0
    %4164 = vmatpush1.msra.mxu0 0.0
    %4165 = vmatprep.subr.mxu0 0.0
    %4166 = vmatpush1.msra.mxu0 0.0
    %4167 = vmatprep.subr.mxu0 0.0
    %4168 = vmatpush1.msra.mxu0 0.0
    %4169 = vmatprep.subr.mxu0 0.0
    %4170 = vmatpush1.msra.mxu0 0.0
    %4171 = vmatprep.subr.mxu0 0.0
    %4172 = vmatpush1.msra.mxu0 0.0
    %4173 = vmatprep.subr.mxu0 0.0
    %4174 = vmatpush1.msra.mxu0 0.0
    %4175 = vmatprep.subr.mxu0 0.0
    %4176 = vmatpush1.msra.mxu0 0.0
    %4177 = vmatprep.subr.mxu0 0.0
    %4178 = vmatpush1.msra.mxu0 0.0
    %4179 = vmatprep.subr.mxu0 0.0
    %4180 = vmatpush1.msra.mxu0 0.0
    %4181 = vmatprep.subr.mxu0 0.0
    %4182 = vmatpush1.msra.mxu0 0.0
    %4183 = vmatprep.subr.mxu0 0.0
    %4184 = vmatpush1.msra.mxu0 0.0
    %4185 = vmatprep.subr.mxu0 0.0
    %4186 = vmatpush1.msra.mxu0 0.0
    %4187 = vmatprep.subr.mxu0 0.0
    %4188 = vmatpush1.msra.mxu0 0.0
    %4189 = vmatprep.subr.mxu0 0.0
    %4190 = vmatpush1.msra.mxu0 0.0
    %4191 = vmatprep.subr.mxu0 0.0
    %4192 = vmatpush1.msra.mxu0 0.0
    %4193 = vmatprep.subr.mxu0 0.0
    %4194 = vmatpush1.msra.mxu0 0.0
    %4195 = vmatprep.subr.mxu0 0.0
    %4196 = vmatpush1.msra.mxu0 0.0
    %4197 = vmatprep.subr.mxu0 0.0
    %4198 = vmatpush1.msra.mxu0 0.0
    %4199 = vmatprep.subr.mxu0 0.0
    %4200 = vmatpush1.msra.mxu0 0.0
    %4201 = vmatprep.subr.mxu0 0.0
    %4202 = vmatpush1.msra.mxu0 0.0
    %4203 = vmatprep.subr.mxu0 0.0
    %4204 = vmatpush1.msra.mxu0 0.0
    %4205 = vmatprep.mubr.f32.mxu0 0.0
    %4206 = vmatmul.mubr.f32.gmra.mrb[0].mxu0 %v4139
    %v4207 = vpop.f32.mrb[0].mxu0
    %v4208 = vadd.f32 %v701, %v4207
    %v4209 = vpop.f32.mrb[0].mxu0
    %4210 = vdwg.mxu0
    %4211 = vmatprep.subr.mxu0 0.0
    %4212 = vmatpush1.msra.mxu0 %v672
    %4213 = vmatprep.subr.mxu0 0.0
    %4214 = vmatpush1.msra.mxu0 %v673
    %4215 = vmatprep.subr.mxu0 0.0
    %4216 = vmatpush1.msra.mxu0 %v674
    %4217 = vmatprep.subr.mxu0 0.0
    %4218 = vmatpush1.msra.mxu0 %v675
    %4219 = vmatprep.subr.mxu0 0.0
    %4220 = vmatpush1.msra.mxu0 0.0
    %4221 = vmatprep.subr.mxu0 0.0
    %4222 = vmatpush1.msra.mxu0 0.0
    %4223 = vmatprep.subr.mxu0 0.0
    %4224 = vmatpush1.msra.mxu0 0.0
    %4225 = vmatprep.subr.mxu0 0.0
    %4226 = vmatpush1.msra.mxu0 0.0
    %4227 = vmatprep.subr.mxu0 0.0
    %4228 = vmatpush1.msra.mxu0 0.0
    %4229 = vmatprep.subr.mxu0 0.0
    %4230 = vmatpush1.msra.mxu0 0.0
    %4231 = vmatprep.subr.mxu0 0.0
    %4232 = vmatpush1.msra.mxu0 0.0
    %4233 = vmatprep.subr.mxu0 0.0
    %4234 = vmatpush1.msra.mxu0 0.0
    %4235 = vmatprep.subr.mxu0 0.0
    %4236 = vmatpush1.msra.mxu0 0.0
    %4237 = vmatprep.subr.mxu0 0.0
    %4238 = vmatpush1.msra.mxu0 0.0
    %4239 = vmatprep.subr.mxu0 0.0
    %4240 = vmatpush1.msra.mxu0 0.0
    %4241 = vmatprep.subr.mxu0 0.0
    %4242 = vmatpush1.msra.mxu0 0.0
    %4243 = vmatprep.subr.mxu0 0.0
    %4244 = vmatpush1.msra.mxu0 0.0
    %4245 = vmatprep.subr.mxu0 0.0
    %4246 = vmatpush1.msra.mxu0 0.0
    %4247 = vmatprep.subr.mxu0 0.0
    %4248 = vmatpush1.msra.mxu0 0.0
    %4249 = vmatprep.subr.mxu0 0.0
    %4250 = vmatpush1.msra.mxu0 0.0
    %4251 = vmatprep.subr.mxu0 0.0
    %4252 = vmatpush1.msra.mxu0 0.0
    %4253 = vmatprep.subr.mxu0 0.0
    %4254 = vmatpush1.msra.mxu0 0.0
    %4255 = vmatprep.subr.mxu0 0.0
    %4256 = vmatpush1.msra.mxu0 0.0
    %4257 = vmatprep.subr.mxu0 0.0
    %4258 = vmatpush1.msra.mxu0 0.0
    %4259 = vmatprep.subr.mxu0 0.0
    %4260 = vmatpush1.msra.mxu0 0.0
    %4261 = vmatprep.subr.mxu0 0.0
    %4262 = vmatpush1.msra.mxu0 0.0
    %4263 = vmatprep.subr.mxu0 0.0
    %4264 = vmatpush1.msra.mxu0 0.0
    %4265 = vmatprep.subr.mxu0 0.0
    %4266 = vmatpush1.msra.mxu0 0.0
    %4267 = vmatprep.subr.mxu0 0.0
    %4268 = vmatpush1.msra.mxu0 0.0
    %4269 = vmatprep.subr.mxu0 0.0
    %4270 = vmatpush1.msra.mxu0 0.0
    %4271 = vmatprep.subr.mxu0 0.0
    %4272 = vmatpush1.msra.mxu0 0.0
    %4273 = vmatprep.subr.mxu0 0.0
    %4274 = vmatpush1.msra.mxu0 0.0
    %4275 = vmatprep.mubr.f32.mxu0 0.0
    %4276 = vmatmul.mubr.f32.gmra.mrb[0].mxu0 %v4139
    %v4277 = vpop.f32.mrb[0].mxu0
    %v4278 = vadd.f32 %v709, %v4277
    %v4279 = vpop.f32.mrb[0].mxu0
    %4280 = vdwg.mxu0
    %4281 = vmatprep.subr.mxu0 0.0
    %4282 = vmatpush1.msra.mxu0 %v677
    %4283 = vmatprep.subr.mxu0 0.0
    %4284 = vmatpush1.msra.mxu0 %v678
    %4285 = vmatprep.subr.mxu0 0.0
    %4286 = vmatpush1.msra.mxu0 %v679
    %4287 = vmatprep.subr.mxu0 0.0
    %4288 = vmatpush1.msra.mxu0 %v680
    %4289 = vmatprep.subr.mxu0 0.0
    %4290 = vmatpush1.msra.mxu0 0.0
    %4291 = vmatprep.subr.mxu0 0.0
    %4292 = vmatpush1.msra.mxu0 0.0
    %4293 = vmatprep.subr.mxu0 0.0
    %4294 = vmatpush1.msra.mxu0 0.0
    %4295 = vmatprep.subr.mxu0 0.0
    %4296 = vmatpush1.msra.mxu0 0.0
    %4297 = vmatprep.subr.mxu0 0.0
    %4298 = vmatpush1.msra.mxu0 0.0
    %4299 = vmatprep.subr.mxu0 0.0
    %4300 = vmatpush1.msra.mxu0 0.0
    %4301 = vmatprep.subr.mxu0 0.0
    %4302 = vmatpush1.msra.mxu0 0.0
    %4303 = vmatprep.subr.mxu0 0.0
    %4304 = vmatpush1.msra.mxu0 0.0
    %4305 = vmatprep.subr.mxu0 0.0
    %4306 = vmatpush1.msra.mxu0 0.0
    %4307 = vmatprep.subr.mxu0 0.0
    %4308 = vmatpush1.msra.mxu0 0.0
    %4309 = vmatprep.subr.mxu0 0.0
    %4310 = vmatpush1.msra.mxu0 0.0
    %4311 = vmatprep.subr.mxu0 0.0
    %4312 = vmatpush1.msra.mxu0 0.0
    %4313 = vmatprep.subr.mxu0 0.0
    %4314 = vmatpush1.msra.mxu0 0.0
    %4315 = vmatprep.subr.mxu0 0.0
    %4316 = vmatpush1.msra.mxu0 0.0
    %4317 = vmatprep.subr.mxu0 0.0
    %4318 = vmatpush1.msra.mxu0 0.0
    %4319 = vmatprep.subr.mxu0 0.0
    %4320 = vmatpush1.msra.mxu0 0.0
    %4321 = vmatprep.subr.mxu0 0.0
    %4322 = vmatpush1.msra.mxu0 0.0
    %4323 = vmatprep.subr.mxu0 0.0
    %4324 = vmatpush1.msra.mxu0 0.0
    %4325 = vmatprep.subr.mxu0 0.0
    %4326 = vmatpush1.msra.mxu0 0.0
    %4327 = vmatprep.subr.mxu0 0.0
    %4328 = vmatpush1.msra.mxu0 0.0
    %4329 = vmatprep.subr.mxu0 0.0
    %4330 = vmatpush1.msra.mxu0 0.0
    %4331 = vmatprep.subr.mxu0 0.0
    %4332 = vmatpush1.msra.mxu0 0.0
    %4333 = vmatprep.subr.mxu0 0.0
    %4334 = vmatpush1.msra.mxu0 0.0
    %4335 = vmatprep.subr.mxu0 0.0
    %4336 = vmatpush1.msra.mxu0 0.0
    %4337 = vmatprep.subr.mxu0 0.0
    %4338 = vmatpush1.msra.mxu0 0.0
    %4339 = vmatprep.subr.mxu0 0.0
    %4340 = vmatpush1.msra.mxu0 0.0
    %4341 = vmatprep.subr.mxu0 0.0
    %4342 = vmatpush1.msra.mxu0 0.0
    %4343 = vmatprep.subr.mxu0 0.0
    %4344 = vmatpush1.msra.mxu0 0.0
    %4345 = vmatprep.mubr.f32.mxu0 0.0
    %4346 = vmatmul.mubr.f32.gmra.mrb[0].mxu0 %v4139
    %v4347 = vpop.f32.mrb[0].mxu0
    %v4348 = vadd.f32 %v717, %v4347
    %v4349 = vpop.f32.mrb[0].mxu0
    %4350 = vdwg.mxu0
    %v4351 = vadd.f32 %v4135, %v4208
    %v4352 = vxor.u32 %v4351, 2147483648
    %v4353 = vmul.f32 %v4352, 1.442695
    %v4354 = vpow.pop %v4353
    %v4355 = vadd.f32 %v4354, 1.0
    %v4356 = vrcp.pop %v4355
    %v4357 = vmul.f32 1.0, %v4356
    %v4358 = vadd.f32 %v4136, %v4278
    %v4359 = vxor.u32 %v4358, 2147483648
    %v4360 = vmul.f32 %v4359, 1.442695
    %v4361 = vpow.pop %v4360
    %v4362 = vadd.f32 %v4361, 1.0
    %v4363 = vrcp.pop %v4362
    %v4364 = vmul.f32 1.0, %v4363
    %v4365 = vmul.f32 %v4357, %v4348
    %v4366 = vadd.f32 %v4137, %v4365
    %v4367 = vtanh.pop %v4366
    %v4368 = vsub.f32 1.0, %v4364
    %v4369 = vmul.f32 %v4368, %v4367
    %v4370 = vmul.f32 %v4364, %v3894
    %v4371 = vadd.f32 %v4369, %v4370
    %v4372 = vsel %vm1227, %v4371, %v3894
    %v4373 = vld [vmem:[#allocation5] sm:$0xf]
    %v4374 = vld [vmem:[#allocation6] sm:$0xf]
    %v4375 = vld [vmem:[#allocation7] sm:$0xf]
    %v4377 = vsel %vm55, %v4134, 0
    %4379 = vmatprep.subr.mxu0 0.0
    %4380 = vmatpush1.msra.mxu0 %v682
    %4381 = vmatprep.subr.mxu0 0.0
    %4382 = vmatpush1.msra.mxu0 %v683
    %4383 = vmatprep.subr.mxu0 0.0
    %4384 = vmatpush1.msra.mxu0 %v684
    %4385 = vmatprep.subr.mxu0 0.0
    %4386 = vmatpush1.msra.mxu0 %v685
    %4387 = vmatprep.subr.mxu0 0.0
    %4388 = vmatpush1.msra.mxu0 0.0
    %4389 = vmatprep.subr.mxu0 0.0
    %4390 = vmatpush1.msra.mxu0 0.0
    %4391 = vmatprep.subr.mxu0 0.0
    %4392 = vmatpush1.msra.mxu0 0.0
    %4393 = vmatprep.subr.mxu0 0.0
    %4394 = vmatpush1.msra.mxu0 0.0
    %4395 = vmatprep.subr.mxu0 0.0
    %4396 = vmatpush1.msra.mxu0 0.0
    %4397 = vmatprep.subr.mxu0 0.0
    %4398 = vmatpush1.msra.mxu0 0.0
    %4399 = vmatprep.subr.mxu0 0.0
    %4400 = vmatpush1.msra.mxu0 0.0
    %4401 = vmatprep.subr.mxu0 0.0
    %4402 = vmatpush1.msra.mxu0 0.0
    %4403 = vmatprep.subr.mxu0 0.0
    %4404 = vmatpush1.msra.mxu0 0.0
    %4405 = vmatprep.subr.mxu0 0.0
    %4406 = vmatpush1.msra.mxu0 0.0
    %4407 = vmatprep.subr.mxu0 0.0
    %4408 = vmatpush1.msra.mxu0 0.0
    %4409 = vmatprep.subr.mxu0 0.0
    %4410 = vmatpush1.msra.mxu0 0.0
    %4411 = vmatprep.subr.mxu0 0.0
    %4412 = vmatpush1.msra.mxu0 0.0
    %4413 = vmatprep.subr.mxu0 0.0
    %4414 = vmatpush1.msra.mxu0 0.0
    %4415 = vmatprep.subr.mxu0 0.0
    %4416 = vmatpush1.msra.mxu0 0.0
    %4417 = vmatprep.subr.mxu0 0.0
    %4418 = vmatpush1.msra.mxu0 0.0
    %4419 = vmatprep.subr.mxu0 0.0
    %4420 = vmatpush1.msra.mxu0 0.0
    %4421 = vmatprep.subr.mxu0 0.0
    %4422 = vmatpush1.msra.mxu0 0.0
    %4423 = vmatprep.subr.mxu0 0.0
    %4424 = vmatpush1.msra.mxu0 0.0
    %4425 = vmatprep.subr.mxu0 0.0
    %4426 = vmatpush1.msra.mxu0 0.0
    %4427 = vmatprep.subr.mxu0 0.0
    %4428 = vmatpush1.msra.mxu0 0.0
    %4429 = vmatprep.subr.mxu0 0.0
    %4430 = vmatpush1.msra.mxu0 0.0
    %4431 = vmatprep.subr.mxu0 0.0
    %4432 = vmatpush1.msra.mxu0 0.0
    %4433 = vmatprep.subr.mxu0 0.0
    %4434 = vmatpush1.msra.mxu0 0.0
    %4435 = vmatprep.subr.mxu0 0.0
    %4436 = vmatpush1.msra.mxu0 0.0
    %4437 = vmatprep.subr.mxu0 0.0
    %4438 = vmatpush1.msra.mxu0 0.0
    %4439 = vmatprep.subr.mxu0 0.0
    %4440 = vmatpush1.msra.mxu0 0.0
    %4441 = vmatprep.subr.mxu0 0.0
    %4442 = vmatpush1.msra.mxu0 0.0
    %4443 = vmatprep.mubr.f32.mxu0 0.0
    %4444 = vmatmul.mubr.f32.gmra.mrb[0].mxu0 %v4377
    %v4445 = vpop.f32.mrb[0].mxu0
    %v4446 = vadd.f32 %v725, %v4445
    %v4447 = vpop.f32.mrb[0].mxu0
    %4448 = vdwg.mxu0
    %4449 = vmatprep.subr.mxu0 0.0
    %4450 = vmatpush1.msra.mxu0 %v687
    %4451 = vmatprep.subr.mxu0 0.0
    %4452 = vmatpush1.msra.mxu0 %v688
    %4453 = vmatprep.subr.mxu0 0.0
    %4454 = vmatpush1.msra.mxu0 %v689
    %4455 = vmatprep.subr.mxu0 0.0
    %4456 = vmatpush1.msra.mxu0 %v690
    %4457 = vmatprep.subr.mxu0 0.0
    %4458 = vmatpush1.msra.mxu0 0.0
    %4459 = vmatprep.subr.mxu0 0.0
    %4460 = vmatpush1.msra.mxu0 0.0
    %4461 = vmatprep.subr.mxu0 0.0
    %4462 = vmatpush1.msra.mxu0 0.0
    %4463 = vmatprep.subr.mxu0 0.0
    %4464 = vmatpush1.msra.mxu0 0.0
    %4465 = vmatprep.subr.mxu0 0.0
    %4466 = vmatpush1.msra.mxu0 0.0
    %4467 = vmatprep.subr.mxu0 0.0
    %4468 = vmatpush1.msra.mxu0 0.0
    %4469 = vmatprep.subr.mxu0 0.0
    %4470 = vmatpush1.msra.mxu0 0.0
    %4471 = vmatprep.subr.mxu0 0.0
    %4472 = vmatpush1.msra.mxu0 0.0
    %4473 = vmatprep.subr.mxu0 0.0
    %4474 = vmatpush1.msra.mxu0 0.0
    %4475 = vmatprep.subr.mxu0 0.0
    %4476 = vmatpush1.msra.mxu0 0.0
    %4477 = vmatprep.subr.mxu0 0.0
    %4478 = vmatpush1.msra.mxu0 0.0
    %4479 = vmatprep.subr.mxu0 0.0
    %4480 = vmatpush1.msra.mxu0 0.0
    %4481 = vmatprep.subr.mxu0 0.0
    %4482 = vmatpush1.msra.mxu0 0.0
    %4483 = vmatprep.subr.mxu0 0.0
    %4484 = vmatpush1.msra.mxu0 0.0
    %4485 = vmatprep.subr.mxu0 0.0
    %4486 = vmatpush1.msra.mxu0 0.0
    %4487 = vmatprep.subr.mxu0 0.0
    %4488 = vmatpush1.msra.mxu0 0.0
    %4489 = vmatprep.subr.mxu0 0.0
    %4490 = vmatpush1.msra.mxu0 0.0
    %4491 = vmatprep.subr.mxu0 0.0
    %4492 = vmatpush1.msra.mxu0 0.0
    %4493 = vmatprep.subr.mxu0 0.0
    %4494 = vmatpush1.msra.mxu0 0.0
    %4495 = vmatprep.subr.mxu0 0.0
    %4496 = vmatpush1.msra.mxu0 0.0
    %4497 = vmatprep.subr.mxu0 0.0
    %4498 = vmatpush1.msra.mxu0 0.0
    %4499 = vmatprep.subr.mxu0 0.0
    %4500 = vmatpush1.msra.mxu0 0.0
    %4501 = vmatprep.subr.mxu0 0.0
    %4502 = vmatpush1.msra.mxu0 0.0
    %4503 = vmatprep.subr.mxu0 0.0
    %4504 = vmatpush1.msra.mxu0 0.0
    %4505 = vmatprep.subr.mxu0 0.0
    %4506 = vmatpush1.msra.mxu0 0.0
    %4507 = vmatprep.subr.mxu0 0.0
    %4508 = vmatpush1.msra.mxu0 0.0
    %4509 = vmatprep.subr.mxu0 0.0
    %4510 = vmatpush1.msra.mxu0 0.0
    %4511 = vmatprep.subr.mxu0 0.0
    %4512 = vmatpush1.msra.mxu0 0.0
    %4513 = vmatprep.mubr.f32.mxu0 0.0
    %4514 = vmatmul.mubr.f32.gmra.mrb[0].mxu0 %v4377
    %v4515 = vpop.f32.mrb[0].mxu0
    %v4516 = vadd.f32 %v733, %v4515
    %v4517 = vpop.f32.mrb[0].mxu0
    %4518 = vdwg.mxu0
    %4519 = vmatprep.subr.mxu0 0.0
    %4520 = vmatpush1.msra.mxu0 %v692
    %4521 = vmatprep.subr.mxu0 0.0
    %4522 = vmatpush1.msra.mxu0 %v693
    %4523 = vmatprep.subr.mxu0 0.0
    %4524 = vmatpush1.msra.mxu0 %v694
    %4525 = vmatprep.subr.mxu0 0.0
    %4526 = vmatpush1.msra.mxu0 %v695
    %4527 = vmatprep.subr.mxu0 0.0
    %4528 = vmatpush1.msra.mxu0 0.0
    %4529 = vmatprep.subr.mxu0 0.0
    %4530 = vmatpush1.msra.mxu0 0.0
    %4531 = vmatprep.subr.mxu0 0.0
    %4532 = vmatpush1.msra.mxu0 0.0
    %4533 = vmatprep.subr.mxu0 0.0
    %4534 = vmatpush1.msra.mxu0 0.0
    %4535 = vmatprep.subr.mxu0 0.0
    %4536 = vmatpush1.msra.mxu0 0.0
    %4537 = vmatprep.subr.mxu0 0.0
    %4538 = vmatpush1.msra.mxu0 0.0
    %4539 = vmatprep.subr.mxu0 0.0
    %4540 = vmatpush1.msra.mxu0 0.0
    %4541 = vmatprep.subr.mxu0 0.0
    %4542 = vmatpush1.msra.mxu0 0.0
    %4543 = vmatprep.subr.mxu0 0.0
    %4544 = vmatpush1.msra.mxu0 0.0
    %4545 = vmatprep.subr.mxu0 0.0
    %4546 = vmatpush1.msra.mxu0 0.0
    %4547 = vmatprep.subr.mxu0 0.0
    %4548 = vmatpush1.msra.mxu0 0.0
    %4549 = vmatprep.subr.mxu0 0.0
    %4550 = vmatpush1.msra.mxu0 0.0
    %4551 = vmatprep.subr.mxu0 0.0
    %4552 = vmatpush1.msra.mxu0 0.0
    %4553 = vmatprep.subr.mxu0 0.0
    %4554 = vmatpush1.msra.mxu0 0.0
    %4555 = vmatprep.subr.mxu0 0.0
    %4556 = vmatpush1.msra.mxu0 0.0
    %4557 = vmatprep.subr.mxu0 0.0
    %4558 = vmatpush1.msra.mxu0 0.0
    %4559 = vmatprep.subr.mxu0 0.0
    %4560 = vmatpush1.msra.mxu0 0.0
    %4561 = vmatprep.subr.mxu0 0.0
    %4562 = vmatpush1.msra.mxu0 0.0
    %4563 = vmatprep.subr.mxu0 0.0
    %4564 = vmatpush1.msra.mxu0 0.0
    %4565 = vmatprep.subr.mxu0 0.0
    %4566 = vmatpush1.msra.mxu0 0.0
    %4567 = vmatprep.subr.mxu0 0.0
    %4568 = vmatpush1.msra.mxu0 0.0
    %4569 = vmatprep.subr.mxu0 0.0
    %4570 = vmatpush1.msra.mxu0 0.0
    %4571 = vmatprep.subr.mxu0 0.0
    %4572 = vmatpush1.msra.mxu0 0.0
    %4573 = vmatprep.subr.mxu0 0.0
    %4574 = vmatpush1.msra.mxu0 0.0
    %4575 = vmatprep.subr.mxu0 0.0
    %4576 = vmatpush1.msra.mxu0 0.0
    %4577 = vmatprep.subr.mxu0 0.0
    %4578 = vmatpush1.msra.mxu0 0.0
    %4579 = vmatprep.subr.mxu0 0.0
    %4580 = vmatpush1.msra.mxu0 0.0
    %4581 = vmatprep.subr.mxu0 0.0
    %4582 = vmatpush1.msra.mxu0 0.0
    %4583 = vmatprep.mubr.f32.mxu0 0.0
    %4584 = vmatmul.mubr.f32.gmra.mrb[0].mxu0 %v4377
    %v4585 = vpop.f32.mrb[0].mxu0
    %v4586 = vadd.f32 %v741, %v4585
    %v4587 = vpop.f32.mrb[0].mxu0
    %4588 = vdwg.mxu0
    %v4589 = vadd.f32 %v4373, %v4446
    %v4590 = vxor.u32 %v4589, 2147483648
    %v4591 = vmul.f32 %v4590, 1.442695
    %v4592 = vpow.pop %v4591
    %v4593 = vadd.f32 %v4592, 1.0
    %v4594 = vrcp.pop %v4593
    %v4595 = vmul.f32 1.0, %v4594
    %v4596 = vadd.f32 %v4374, %v4516
    %v4597 = vxor.u32 %v4596, 2147483648
    %v4598 = vmul.f32 %v4597, 1.442695
    %v4599 = vpow.pop %v4598
    %v4600 = vadd.f32 %v4599, 1.0
    %v4601 = vrcp.pop %v4600
    %v4602 = vmul.f32 1.0, %v4601
    %v4603 = vmul.f32 %v4595, %v4586
    %v4604 = vadd.f32 %v4375, %v4603
    %v4605 = vtanh.pop %v4604
    %v4606 = vsub.f32 1.0, %v4602
    %v4607 = vmul.f32 %v4606, %v4605
    %v4608 = vmul.f32 %v4602, %v4134
    %v4609 = vadd.f32 %v4607, %v4608
    %v4610 = vsel %vm986, %v4609, 0.0
    %4611 = vst.msk [vmem:[%s6] sm:$0xf] %vm1229, %v4610
    %v4612 = vsel %vm986, %v4609, %v4134
    %4613 = vst.msk [vmem:[#allocation11] sm:$0xf] %vm1229, %v4372
    %s4614 = scalar_lea.vmem [#allocation11], 4
    %4615 = vst.msk [vmem:[%s4614] sm:$0xf] %vm1229, %v4612
    // Predicated region
    $region30: #{encoder_rnn_forward.1} parent=1 // pred_check
      _
    $region31: #{encoder_rnn_forward.1} parent=1 // pred_check_branch
      %4617 = sbr.rel (0) target = $region33
    $region32: #{encoder_rnn_forward.1} parent=1 // pred_region
      _
    $region33: #{encoder_rnn_forward.1} parent=1 // pred_fallthru
      _
    // Predicated region
    $region34: #{encoder_rnn_forward.1} parent=1 // pred_check
      _
    $region35: #{encoder_rnn_forward.1} parent=1 // pred_check_branch
      %4619 = sbr.rel (0) target = $region37
    $region36: #{encoder_rnn_forward.1} parent=1 // pred_region
      %s4621 = ssub.s32 128, 128
      %4622 = vsyncadd [#allocation10], %s4621
      %s4623 = sshll.u32 [#allocation11], 4
      %s4624 = int_to_ptr.vmem [resolvable:$true] %s4623
      %4629 = dma.vmem_to_hbm [thread:$0]  %s4624, 128, %s7, [#allocation10], 64, 64, 4
    $region37: #{encoder_rnn_forward.1} parent=1 // pred_fallthru
      _
    // Predicated region
    $region38: #{encoder_rnn_forward.1} parent=1 // pred_check
      _
    $region39: #{encoder_rnn_forward.1} parent=1 // pred_check_branch
      %4631 = sbr.rel (0) target = $region41
    $region40: #{encoder_rnn_forward.1} parent=1 // pred_region
      _
    $region41: #{encoder_rnn_forward.1} parent=1 // pred_fallthru
      _
    // Predicated region
    $region42: #{encoder_rnn_forward.1} parent=1 // pred_check
      _
    $region43: #{encoder_rnn_forward.1} parent=1 // pred_check_branch
      %4633 = sbr.rel (0) target = $region45
    $region44: #{encoder_rnn_forward.1} parent=1 // pred_region
      %4634 = dma.done [#allocation10], 128
    $region45: #{encoder_rnn_forward.1} parent=1 // pred_fallthru
      _
    %4635 = vsyncpa [#allocation9], 1
    %4636 = vsyncpa [#allocation10], 1

</llo_original>
